<compile_context>
chip_gen: v7x
topology: tpu7x:2x2x1
jax: 0.10.0
libtpu: 0.0.40
codegen_flags: <defaults>
</compile_context>

<pallas_src>
import jax
import jax.numpy as jnp
from jax import lax
from jax.experimental import pallas as pl
from jax.experimental.pallas import tpu as pltpu


_FULL_UNROLL_MAX_T = 64  # fully unroll recurrences up to this sequence length


def _gate_math(gates, c, H):
    """PyTorch LSTM gate nonlinearity. Gate order along last axis: i, f, g, o.

    sigmoid/tanh lower to the EUP (separate bundle slot), the mul/adds to the
    VPU, so the gate math largely hides under the recurrent matmul.
    """
    i = jax.nn.sigmoid(gates[:, 0:H])
    f = jax.nn.sigmoid(gates[:, H:2 * H])
    g = jnp.tanh(gates[:, 2 * H:3 * H])
    o = jax.nn.sigmoid(gates[:, 3 * H:4 * H])
    c_new = f * c + i * g
    h_new = o * jnp.tanh(c_new)
    return h_new, c_new


def _run_steps(T, body, carry):
    """Unrolled Python loop for short T (static indices); fori_loop otherwise."""
    if T <= _FULL_UNROLL_MAX_T:
        for t in range(T):
            carry = body(t, carry)
        return carry
    return lax.fori_loop(0, T, body, carry, unroll=8)


def lstm_autoencoder_kernel(x_ref, wih_e_ref, whh_e_ref, b_e_ref,
                            wih_d_ref, whh_d_ref, b_d_ref,
                            wout_ref, bout_ref,
                            y_ref,
                            xproj_ref, hbuf_ref):
    """Encode -> decode -> project for one batch tile.

    x_ref / y_ref: [Bt, T, D_in] (batch-first, same as PyTorch).
    Weights are stored right-multiply (transposed vs PyTorch): W_ih [D,4H],
    W_hh [H,4H], folded bias [1,4H]; output Linear [H,D] + [1,D].
    xproj_ref: VMEM [Bt, T, 4H] scratch; hbuf_ref: VMEM [Bt, T, H] scratch.
    """
    Bt, T, D = x_ref.shape
    H = whh_e_ref.shape[0]
    f32 = jnp.float32

    # Loop-invariant weights: read once, keep live across the recurrence.
    whh_e = whh_e_ref[...]
    whh_d = whh_d_ref[...]

    # ---- encoder input projection: one big MXU matmul, bias folded in ----
    x2d = x_ref[...].reshape(Bt * T, D)
    xp = jnp.dot(x2d, wih_e_ref[...], preferred_element_type=f32) + b_e_ref[...]
    xproj_ref[...] = xp.reshape(Bt, T, 4 * H)

    h0 = jnp.zeros((Bt, H), f32)
    c0 = jnp.zeros((Bt, H), f32)

    # ---- encoder recurrence: only h @ W_hh on the serial path ----
    def enc_step(t, carry):
        h, c = carry
        gates = xproj_ref[:, t, :] + jnp.dot(h, whh_e, preferred_element_type=f32)
        return _gate_math(gates, c, H)

    h_enc, _ = _run_steps(T, enc_step, (h0, c0))

    # ---- decoder: same h_enc fed every step -> input projection hoisted ----
    dec_in = jnp.dot(h_enc, wih_d_ref[...], preferred_element_type=f32) + b_d_ref[...]

    def dec_step(t, carry):
        h, c = carry
        gates = dec_in + jnp.dot(h, whh_d, preferred_element_type=f32)
        h, c = _gate_math(gates, c, H)
        hbuf_ref[:, t, :] = h
        return (h, c)

    _run_steps(T, dec_step, (h0, c0))

    # ---- output Linear: one bulk matmul + one bulk store ----
    hd = hbuf_ref[...].reshape(Bt * T, H)
    y2d = jnp.dot(hd, wout_ref[...], preferred_element_type=f32) + bout_ref[...]
    y_ref[...] = y2d.reshape(Bt, T, D)


def lstm_sequence_autoencoder(x, params, *, batch_tile=None):
    """x: [B, T, D_in] float32 (batch_first, as in the PyTorch module)."""
    B, T, D = x.shape
    H = params["w_hh_enc"].shape[0]

    if batch_tile is None:
        batch_tile = B if B <= 256 else 256
    batch_tile = min(batch_tile, B)
    grid = (pl.cdiv(B, batch_tile),)

    def const_spec(arr):
        ndim = arr.ndim
        # Constant block index -> Pallas fetches the weight once and keeps it
        # resident in VMEM across batch tiles (no per-step re-DMA).
        return pl.BlockSpec(arr.shape, lambda b: (0,) * ndim)

    io_spec = pl.BlockSpec((batch_tile, T, D), lambda b: (b, 0, 0))

    # VMEM budget: double-buffered x/y tiles + weights + scratches + headroom,
    # capped below v7x's 64 MiB physical VMEM.
    itemsize = 4
    tile_bytes = batch_tile * T * D * itemsize
    weight_bytes = sum(int(v.size) * itemsize for v in params.values())
    scratch_bytes = batch_tile * T * (5 * H) * itemsize
    vmem_limit = 2 * 2 * tile_bytes + 2 * weight_bytes + scratch_bytes + (8 << 20)
    vmem_limit = int(min(vmem_limit, 56 << 20))

    return pl.pallas_call(
        lstm_autoencoder_kernel,
        out_shape=jax.ShapeDtypeStruct((B, T, D), jnp.float32),
        grid=grid,
        in_specs=[
            io_spec,
            const_spec(params["w_ih_enc"]),
            const_spec(params["w_hh_enc"]),
            const_spec(params["b_enc"]),
            const_spec(params["w_ih_dec"]),
            const_spec(params["w_hh_dec"]),
            const_spec(params["b_dec"]),
            const_spec(params["w_out"]),
            const_spec(params["b_out"]),
        ],
        out_specs=io_spec,
        scratch_shapes=[
            pltpu.VMEM((batch_tile, T, 4 * H), jnp.float32),  # encoder x-projection
            pltpu.VMEM((batch_tile, T, H), jnp.float32),      # decoder hidden buffer
        ],
        compiler_params=pltpu.CompilerParams(
            dimension_semantics=("parallel",),
            vmem_limit_bytes=vmem_limit,
        ),
    )(x,
      params["w_ih_enc"], params["w_hh_enc"], params["b_enc"],
      params["w_ih_dec"], params["w_hh_dec"], params["b_dec"],
      params["w_out"], params["b_out"])


def init_params(key, input_size, hidden_size):
    """Deterministic init matching PyTorch's LSTM/Linear shapes.

    PyTorch: weight_ih [4H, D], weight_hh [4H, H], bias_ih/bias_hh [4H].
    We store weights transposed (right-multiply layout) and fold the two biases
    together, which is mathematically identical.
    """
    H, D = hidden_size, input_size
    k = 1.0 / jnp.sqrt(jnp.float32(H))
    keys = jax.random.split(key, 8)

    def u(kk, shape):
        return jax.random.uniform(kk, shape, jnp.float32, minval=-k, maxval=k)

    return {
        "w_ih_enc": u(keys[0], (D, 4 * H)),
        "w_hh_enc": u(keys[1], (H, 4 * H)),
        "b_enc":    u(keys[2], (1, 4 * H)),     # b_ih + b_hh folded
        "w_ih_dec": u(keys[3], (H, 4 * H)),
        "w_hh_dec": u(keys[4], (H, 4 * H)),
        "b_dec":    u(keys[5], (1, 4 * H)),
        "w_out":    u(keys[6], (H, D)),
        "b_out":    u(keys[7], (1, D)),
    }


def reference_forward(x, params):
    """Pure-JAX reference of the same LSTM autoencoder (for verification)."""
    B, T, D = x.shape
    H = params["w_hh_enc"].shape[0]

    def cell(h, c, x_t, wih, whh, b):
        gates = x_t @ wih + h @ whh + b
        i = jax.nn.sigmoid(gates[:, 0:H])
        f = jax.nn.sigmoid(gates[:, H:2 * H])
        g = jnp.tanh(gates[:, 2 * H:3 * H])
        o = jax.nn.sigmoid(gates[:, 3 * H:4 * H])
        c = f * c + i * g
        h = o * jnp.tanh(c)
        return h, c

    h = jnp.zeros((B, H), jnp.float32)
    c = jnp.zeros((B, H), jnp.float32)

    def enc_step(carry, x_t):
        h, c = carry
        h, c = cell(h, c, x_t, params["w_ih_enc"], params["w_hh_enc"],
                    params["b_enc"])
        return (h, c), None

    (h_enc, _), _ = lax.scan(enc_step, (h, c), jnp.transpose(x, (1, 0, 2)))

    def dec_step(carry, _):
        h, c = carry
        h, c = cell(h, c, h_enc, params["w_ih_dec"], params["w_hh_dec"],
                    params["b_dec"])
        y_t = h @ params["w_out"] + params["b_out"]
        return (h, c), y_t

    _, y_tm = lax.scan(dec_step, (jnp.zeros((B, H)), jnp.zeros((B, H))),
                       None, length=T)
    return jnp.transpose(y_tm, (1, 0, 2))


if __name__ == "__main__":
    batch, seq_len, input_size, hidden_size = 4, 8, 16, 32

    key = jax.random.PRNGKey(0)
    k_x, k_p = jax.random.split(key)
    x = jax.random.normal(k_x, (batch, seq_len, input_size), jnp.float32)
    params = init_params(k_p, input_size, hidden_size)

    y = jax.block_until_ready(lstm_sequence_autoencoder(x, params))
    y_ref = jax.block_until_ready(reference_forward(x, params))

    assert y.shape == (batch, seq_len, input_size)
    assert jnp.allclose(y, y_ref, rtol=2e-5, atol=2e-5), "mismatch vs reference"

    print("KERNEL_OK")
</pallas_src>

<mosaic_0001>
module attributes {stable_mosaic.version = 11 : i64} {
  func.func @lstm_autoencoder_kernel(%arg0: i32, %arg1: memref<4x8x16xf32, #tpu.memory_space<vmem>>, %arg2: memref<16x128xf32, #tpu.memory_space<vmem>>, %arg3: memref<32x128xf32, #tpu.memory_space<vmem>>, %arg4: memref<1x128xf32, #tpu.memory_space<vmem>>, %arg5: memref<32x128xf32, #tpu.memory_space<vmem>>, %arg6: memref<32x128xf32, #tpu.memory_space<vmem>>, %arg7: memref<1x128xf32, #tpu.memory_space<vmem>>, %arg8: memref<32x16xf32, #tpu.memory_space<vmem>>, %arg9: memref<1x16xf32, #tpu.memory_space<vmem>>, %arg10: memref<4x8x16xf32, #tpu.memory_space<vmem>>, %arg11: memref<4x8x128xf32, #tpu.memory_space<vmem>>, %arg12: memref<4x8x32xf32, #tpu.memory_space<vmem>>) attributes {dimension_semantics = [#tpu.dimension_semantics<parallel>], iteration_bounds = array<i64: 1>, scalar_prefetch = 0 : i64, scratch_operands = 2 : i64, tpu.core_type = #tpu.core_type<tc>, window_params = [{transform_indices = @transform_0, window_bounds = array<i64: 4, 8, 16>}, {pipeline_mode = #tpu.pipeline_mode<synchronous>, transform_indices = @transform_1, window_bounds = array<i64: 16, 128>}, {pipeline_mode = #tpu.pipeline_mode<synchronous>, transform_indices = @transform_2, window_bounds = array<i64: 32, 128>}, {pipeline_mode = #tpu.pipeline_mode<synchronous>, transform_indices = @transform_3, window_bounds = array<i64: 1, 128>}, {pipeline_mode = #tpu.pipeline_mode<synchronous>, transform_indices = @transform_4, window_bounds = array<i64: 32, 128>}, {pipeline_mode = #tpu.pipeline_mode<synchronous>, transform_indices = @transform_5, window_bounds = array<i64: 32, 128>}, {pipeline_mode = #tpu.pipeline_mode<synchronous>, transform_indices = @transform_6, window_bounds = array<i64: 1, 128>}, {pipeline_mode = #tpu.pipeline_mode<synchronous>, transform_indices = @transform_7, window_bounds = array<i64: 32, 16>}, {pipeline_mode = #tpu.pipeline_mode<synchronous>, transform_indices = @transform_8, window_bounds = array<i64: 1, 16>}, {transform_indices = @transform_9, window_bounds = array<i64: 4, 8, 16>}]} {
    %c0 = arith.constant 0 : index
    %c0_0 = arith.constant 0 : index
    %0 = vector.load %arg3[%c0, %c0_0] : memref<32x128xf32, #tpu.memory_space<vmem>>, vector<32x128xf32>
    %c0_1 = arith.constant 0 : index
    %c0_2 = arith.constant 0 : index
    %1 = vector.load %arg6[%c0_1, %c0_2] : memref<32x128xf32, #tpu.memory_space<vmem>>, vector<32x128xf32>
    %c0_3 = arith.constant 0 : index
    %c0_4 = arith.constant 0 : index
    %c0_5 = arith.constant 0 : index
    %2 = vector.load %arg1[%c0_3, %c0_4, %c0_5] : memref<4x8x16xf32, #tpu.memory_space<vmem>>, vector<4x8x16xf32>
    %3 = vector.shape_cast %2 : vector<4x8x16xf32> to vector<32x16xf32>
    %c0_6 = arith.constant 0 : index
    %c0_7 = arith.constant 0 : index
    %4 = vector.load %arg2[%c0_6, %c0_7] : memref<16x128xf32, #tpu.memory_space<vmem>>, vector<16x128xf32>
    %cst = arith.constant dense<0.000000e+00> : vector<32x128xf32>
    %5 = tpu.matmul %3, %4, %cst {dimension_numbers = #tpu.dot_dimension_numbers<[1], [0], [0], [1], [0, 0, 1, 1], [], []>} : vector<32x16xf32>, vector<16x128xf32>, vector<32x128xf32> -> vector<32x128xf32>
    %c0_8 = arith.constant 0 : index
    %c0_9 = arith.constant 0 : index
    %6 = vector.load %arg4[%c0_8, %c0_9] : memref<1x128xf32, #tpu.memory_space<vmem>>, vector<1x128xf32>
    %7 = vector.broadcast %6 : vector<1x128xf32> to vector<32x128xf32>
    %8 = arith.addf %5, %7 : vector<32x128xf32>
    %9 = vector.shape_cast %8 : vector<32x128xf32> to vector<4x8x128xf32>
    %c0_10 = arith.constant 0 : index
    %c0_11 = arith.constant 0 : index
    %c0_12 = arith.constant 0 : index
    %10 = vector.load %arg11[%c0_10, %c0_11, %c0_12] : memref<4x8x128xf32, #tpu.memory_space<vmem>>, vector<4x8x128xf32>
    tpu.vector_store %arg11[%c0_10, %c0_11, %c0_12], %9 {strides = array<i32>} : memref<4x8x128xf32, #tpu.memory_space<vmem>>, vector<4x8x128xf32>,
    %cst_13 = arith.constant 0.000000e+00 : f32
    %11 = vector.broadcast %cst_13 : f32 to vector<4x32xf32>
    %cst_14 = arith.constant 0.000000e+00 : f32
    %12 = vector.broadcast %cst_14 : f32 to vector<4x32xf32>
    %c0_15 = arith.constant 0 : index
    %c0_16 = arith.constant 0 : index
    %c0_17 = arith.constant 0 : index
    %13 = vector.load %arg11[%c0_15, %c0_16, %c0_17] : memref<4x8x128xf32, #tpu.memory_space<vmem>>, vector<4x1x128xf32>
    %14 = vector.shape_cast %13 : vector<4x1x128xf32> to vector<4x128xf32>
    %cst_18 = arith.constant dense<0.000000e+00> : vector<4x128xf32>
    %15 = tpu.matmul %11, %0, %cst_18 {dimension_numbers = #tpu.dot_dimension_numbers<[1], [0], [0], [1], [0, 0, 1, 1], [], []>} : vector<4x32xf32>, vector<32x128xf32>, vector<4x128xf32> -> vector<4x128xf32>
    %16 = arith.addf %14, %15 : vector<4x128xf32>
    %17 = vector.extract_strided_slice %16 {offsets = [0, 0], sizes = [4, 32], strides = [1, 1]} : vector<4x128xf32> to vector<4x32xf32>
    %18 = arith.negf %17 : vector<4x32xf32>
    %19 = math.exp %18 : vector<4x32xf32>
    %cst_19 = arith.constant 1.000000e+00 : f32
    %20 = vector.broadcast %cst_19 : f32 to vector<4x32xf32>
    %21 = arith.addf %20, %19 : vector<4x32xf32>
    %22 = arith.divf %20, %21 : vector<4x32xf32>
    %23 = vector.extract_strided_slice %16 {offsets = [0, 32], sizes = [4, 32], strides = [1, 1]} : vector<4x128xf32> to vector<4x32xf32>
    %24 = arith.negf %23 : vector<4x32xf32>
    %25 = math.exp %24 : vector<4x32xf32>
    %cst_20 = arith.constant 1.000000e+00 : f32
    %26 = vector.broadcast %cst_20 : f32 to vector<4x32xf32>
    %27 = arith.addf %26, %25 : vector<4x32xf32>
    %28 = arith.divf %26, %27 : vector<4x32xf32>
    %29 = vector.extract_strided_slice %16 {offsets = [0, 64], sizes = [4, 32], strides = [1, 1]} : vector<4x128xf32> to vector<4x32xf32>
    %30 = math.tanh %29 : vector<4x32xf32>
    %31 = vector.extract_strided_slice %16 {offsets = [0, 96], sizes = [4, 32], strides = [1, 1]} : vector<4x128xf32> to vector<4x32xf32>
    %32 = arith.negf %31 : vector<4x32xf32>
    %33 = math.exp %32 : vector<4x32xf32>
    %cst_21 = arith.constant 1.000000e+00 : f32
    %34 = vector.broadcast %cst_21 : f32 to vector<4x32xf32>
    %35 = arith.addf %34, %33 : vector<4x32xf32>
    %36 = arith.divf %34, %35 : vector<4x32xf32>
    %37 = arith.mulf %28, %12 : vector<4x32xf32>
    %38 = arith.mulf %22, %30 : vector<4x32xf32>
    %39 = arith.addf %37, %38 : vector<4x32xf32>
    %40 = math.tanh %39 : vector<4x32xf32>
    %41 = arith.mulf %36, %40 : vector<4x32xf32>
    %c0_22 = arith.constant 0 : index
    %c1 = arith.constant 1 : index
    %c0_23 = arith.constant 0 : index
    %42 = vector.load %arg11[%c0_22, %c1, %c0_23] : memref<4x8x128xf32, #tpu.memory_space<vmem>>, vector<4x1x128xf32>
    %43 = vector.shape_cast %42 : vector<4x1x128xf32> to vector<4x128xf32>
    %cst_24 = arith.constant dense<0.000000e+00> : vector<4x128xf32>
    %44 = tpu.matmul %41, %0, %cst_24 {dimension_numbers = #tpu.dot_dimension_numbers<[1], [0], [0], [1], [0, 0, 1, 1], [], []>} : vector<4x32xf32>, vector<32x128xf32>, vector<4x128xf32> -> vector<4x128xf32>
    %45 = arith.addf %43, %44 : vector<4x128xf32>
    %46 = vector.extract_strided_slice %45 {offsets = [0, 0], sizes = [4, 32], strides = [1, 1]} : vector<4x128xf32> to vector<4x32xf32>
    %47 = arith.negf %46 : vector<4x32xf32>
    %48 = math.exp %47 : vector<4x32xf32>
    %cst_25 = arith.constant 1.000000e+00 : f32
    %49 = vector.broadcast %cst_25 : f32 to vector<4x32xf32>
    %50 = arith.addf %49, %48 : vector<4x32xf32>
    %51 = arith.divf %49, %50 : vector<4x32xf32>
    %52 = vector.extract_strided_slice %45 {offsets = [0, 32], sizes = [4, 32], strides = [1, 1]} : vector<4x128xf32> to vector<4x32xf32>
    %53 = arith.negf %52 : vector<4x32xf32>
    %54 = math.exp %53 : vector<4x32xf32>
    %cst_26 = arith.constant 1.000000e+00 : f32
    %55 = vector.broadcast %cst_26 : f32 to vector<4x32xf32>
    %56 = arith.addf %55, %54 : vector<4x32xf32>
    %57 = arith.divf %55, %56 : vector<4x32xf32>
    %58 = vector.extract_strided_slice %45 {offsets = [0, 64], sizes = [4, 32], strides = [1, 1]} : vector<4x128xf32> to vector<4x32xf32>
    %59 = math.tanh %58 : vector<4x32xf32>
    %60 = vector.extract_strided_slice %45 {offsets = [0, 96], sizes = [4, 32], strides = [1, 1]} : vector<4x128xf32> to vector<4x32xf32>
    %61 = arith.negf %60 : vector<4x32xf32>
    %62 = math.exp %61 : vector<4x32xf32>
    %cst_27 = arith.constant 1.000000e+00 : f32
    %63 = vector.broadcast %cst_27 : f32 to vector<4x32xf32>
    %64 = arith.addf %63, %62 : vector<4x32xf32>
    %65 = arith.divf %63, %64 : vector<4x32xf32>
    %66 = arith.mulf %57, %39 : vector<4x32xf32>
    %67 = arith.mulf %51, %59 : vector<4x32xf32>
    %68 = arith.addf %66, %67 : vector<4x32xf32>
    %69 = math.tanh %68 : vector<4x32xf32>
    %70 = arith.mulf %65, %69 : vector<4x32xf32>
    %c0_28 = arith.constant 0 : index
    %c2 = arith.constant 2 : index
    %c0_29 = arith.constant 0 : index
    %71 = vector.load %arg11[%c0_28, %c2, %c0_29] : memref<4x8x128xf32, #tpu.memory_space<vmem>>, vector<4x1x128xf32>
    %72 = vector.shape_cast %71 : vector<4x1x128xf32> to vector<4x128xf32>
    %cst_30 = arith.constant dense<0.000000e+00> : vector<4x128xf32>
    %73 = tpu.matmul %70, %0, %cst_30 {dimension_numbers = #tpu.dot_dimension_numbers<[1], [0], [0], [1], [0, 0, 1, 1], [], []>} : vector<4x32xf32>, vector<32x128xf32>, vector<4x128xf32> -> vector<4x128xf32>
    %74 = arith.addf %72, %73 : vector<4x128xf32>
    %75 = vector.extract_strided_slice %74 {offsets = [0, 0], sizes = [4, 32], strides = [1, 1]} : vector<4x128xf32> to vector<4x32xf32>
    %76 = arith.negf %75 : vector<4x32xf32>
    %77 = math.exp %76 : vector<4x32xf32>
    %cst_31 = arith.constant 1.000000e+00 : f32
    %78 = vector.broadcast %cst_31 : f32 to vector<4x32xf32>
    %79 = arith.addf %78, %77 : vector<4x32xf32>
    %80 = arith.divf %78, %79 : vector<4x32xf32>
    %81 = vector.extract_strided_slice %74 {offsets = [0, 32], sizes = [4, 32], strides = [1, 1]} : vector<4x128xf32> to vector<4x32xf32>
    %82 = arith.negf %81 : vector<4x32xf32>
    %83 = math.exp %82 : vector<4x32xf32>
    %cst_32 = arith.constant 1.000000e+00 : f32
    %84 = vector.broadcast %cst_32 : f32 to vector<4x32xf32>
    %85 = arith.addf %84, %83 : vector<4x32xf32>
    %86 = arith.divf %84, %85 : vector<4x32xf32>
    %87 = vector.extract_strided_slice %74 {offsets = [0, 64], sizes = [4, 32], strides = [1, 1]} : vector<4x128xf32> to vector<4x32xf32>
    %88 = math.tanh %87 : vector<4x32xf32>
    %89 = vector.extract_strided_slice %74 {offsets = [0, 96], sizes = [4, 32], strides = [1, 1]} : vector<4x128xf32> to vector<4x32xf32>
    %90 = arith.negf %89 : vector<4x32xf32>
    %91 = math.exp %90 : vector<4x32xf32>
    %cst_33 = arith.constant 1.000000e+00 : f32
    %92 = vector.broadcast %cst_33 : f32 to vector<4x32xf32>
    %93 = arith.addf %92, %91 : vector<4x32xf32>
    %94 = arith.divf %92, %93 : vector<4x32xf32>
    %95 = arith.mulf %86, %68 : vector<4x32xf32>
    %96 = arith.mulf %80, %88 : vector<4x32xf32>
    %97 = arith.addf %95, %96 : vector<4x32xf32>
    %98 = math.tanh %97 : vector<4x32xf32>
    %99 = arith.mulf %94, %98 : vector<4x32xf32>
    %c0_34 = arith.constant 0 : index
    %c3 = arith.constant 3 : index
    %c0_35 = arith.constant 0 : index
    %100 = vector.load %arg11[%c0_34, %c3, %c0_35] : memref<4x8x128xf32, #tpu.memory_space<vmem>>, vector<4x1x128xf32>
    %101 = vector.shape_cast %100 : vector<4x1x128xf32> to vector<4x128xf32>
    %cst_36 = arith.constant dense<0.000000e+00> : vector<4x128xf32>
    %102 = tpu.matmul %99, %0, %cst_36 {dimension_numbers = #tpu.dot_dimension_numbers<[1], [0], [0], [1], [0, 0, 1, 1], [], []>} : vector<4x32xf32>, vector<32x128xf32>, vector<4x128xf32> -> vector<4x128xf32>
    %103 = arith.addf %101, %102 : vector<4x128xf32>
    %104 = vector.extract_strided_slice %103 {offsets = [0, 0], sizes = [4, 32], strides = [1, 1]} : vector<4x128xf32> to vector<4x32xf32>
    %105 = arith.negf %104 : vector<4x32xf32>
    %106 = math.exp %105 : vector<4x32xf32>
    %cst_37 = arith.constant 1.000000e+00 : f32
    %107 = vector.broadcast %cst_37 : f32 to vector<4x32xf32>
    %108 = arith.addf %107, %106 : vector<4x32xf32>
    %109 = arith.divf %107, %108 : vector<4x32xf32>
    %110 = vector.extract_strided_slice %103 {offsets = [0, 32], sizes = [4, 32], strides = [1, 1]} : vector<4x128xf32> to vector<4x32xf32>
    %111 = arith.negf %110 : vector<4x32xf32>
    %112 = math.exp %111 : vector<4x32xf32>
    %cst_38 = arith.constant 1.000000e+00 : f32
    %113 = vector.broadcast %cst_38 : f32 to vector<4x32xf32>
    %114 = arith.addf %113, %112 : vector<4x32xf32>
    %115 = arith.divf %113, %114 : vector<4x32xf32>
    %116 = vector.extract_strided_slice %103 {offsets = [0, 64], sizes = [4, 32], strides = [1, 1]} : vector<4x128xf32> to vector<4x32xf32>
    %117 = math.tanh %116 : vector<4x32xf32>
    %118 = vector.extract_strided_slice %103 {offsets = [0, 96], sizes = [4, 32], strides = [1, 1]} : vector<4x128xf32> to vector<4x32xf32>
    %119 = arith.negf %118 : vector<4x32xf32>
    %120 = math.exp %119 : vector<4x32xf32>
    %cst_39 = arith.constant 1.000000e+00 : f32
    %121 = vector.broadcast %cst_39 : f32 to vector<4x32xf32>
    %122 = arith.addf %121, %120 : vector<4x32xf32>
    %123 = arith.divf %121, %122 : vector<4x32xf32>
    %124 = arith.mulf %115, %97 : vector<4x32xf32>
    %125 = arith.mulf %109, %117 : vector<4x32xf32>
    %126 = arith.addf %124, %125 : vector<4x32xf32>
    %127 = math.tanh %126 : vector<4x32xf32>
    %128 = arith.mulf %123, %127 : vector<4x32xf32>
    %c0_40 = arith.constant 0 : index
    %c4 = arith.constant 4 : index
    %c0_41 = arith.constant 0 : index
    %129 = vector.load %arg11[%c0_40, %c4, %c0_41] : memref<4x8x128xf32, #tpu.memory_space<vmem>>, vector<4x1x128xf32>
    %130 = vector.shape_cast %129 : vector<4x1x128xf32> to vector<4x128xf32>
    %cst_42 = arith.constant dense<0.000000e+00> : vector<4x128xf32>
    %131 = tpu.matmul %128, %0, %cst_42 {dimension_numbers = #tpu.dot_dimension_numbers<[1], [0], [0], [1], [0, 0, 1, 1], [], []>} : vector<4x32xf32>, vector<32x128xf32>, vector<4x128xf32> -> vector<4x128xf32>
    %132 = arith.addf %130, %131 : vector<4x128xf32>
    %133 = vector.extract_strided_slice %132 {offsets = [0, 0], sizes = [4, 32], strides = [1, 1]} : vector<4x128xf32> to vector<4x32xf32>
    %134 = arith.negf %133 : vector<4x32xf32>
    %135 = math.exp %134 : vector<4x32xf32>
    %cst_43 = arith.constant 1.000000e+00 : f32
    %136 = vector.broadcast %cst_43 : f32 to vector<4x32xf32>
    %137 = arith.addf %136, %135 : vector<4x32xf32>
    %138 = arith.divf %136, %137 : vector<4x32xf32>
    %139 = vector.extract_strided_slice %132 {offsets = [0, 32], sizes = [4, 32], strides = [1, 1]} : vector<4x128xf32> to vector<4x32xf32>
    %140 = arith.negf %139 : vector<4x32xf32>
    %141 = math.exp %140 : vector<4x32xf32>
    %cst_44 = arith.constant 1.000000e+00 : f32
    %142 = vector.broadcast %cst_44 : f32 to vector<4x32xf32>
    %143 = arith.addf %142, %141 : vector<4x32xf32>
    %144 = arith.divf %142, %143 : vector<4x32xf32>
    %145 = vector.extract_strided_slice %132 {offsets = [0, 64], sizes = [4, 32], strides = [1, 1]} : vector<4x128xf32> to vector<4x32xf32>
    %146 = math.tanh %145 : vector<4x32xf32>
    %147 = vector.extract_strided_slice %132 {offsets = [0, 96], sizes = [4, 32], strides = [1, 1]} : vector<4x128xf32> to vector<4x32xf32>
    %148 = arith.negf %147 : vector<4x32xf32>
    %149 = math.exp %148 : vector<4x32xf32>
    %cst_45 = arith.constant 1.000000e+00 : f32
    %150 = vector.broadcast %cst_45 : f32 to vector<4x32xf32>
    %151 = arith.addf %150, %149 : vector<4x32xf32>
    %152 = arith.divf %150, %151 : vector<4x32xf32>
    %153 = arith.mulf %144, %126 : vector<4x32xf32>
    %154 = arith.mulf %138, %146 : vector<4x32xf32>
    %155 = arith.addf %153, %154 : vector<4x32xf32>
    %156 = math.tanh %155 : vector<4x32xf32>
    %157 = arith.mulf %152, %156 : vector<4x32xf32>
    %c0_46 = arith.constant 0 : index
    %c5 = arith.constant 5 : index
    %c0_47 = arith.constant 0 : index
    %158 = vector.load %arg11[%c0_46, %c5, %c0_47] : memref<4x8x128xf32, #tpu.memory_space<vmem>>, vector<4x1x128xf32>
    %159 = vector.shape_cast %158 : vector<4x1x128xf32> to vector<4x128xf32>
    %cst_48 = arith.constant dense<0.000000e+00> : vector<4x128xf32>
    %160 = tpu.matmul %157, %0, %cst_48 {dimension_numbers = #tpu.dot_dimension_numbers<[1], [0], [0], [1], [0, 0, 1, 1], [], []>} : vector<4x32xf32>, vector<32x128xf32>, vector<4x128xf32> -> vector<4x128xf32>
    %161 = arith.addf %159, %160 : vector<4x128xf32>
    %162 = vector.extract_strided_slice %161 {offsets = [0, 0], sizes = [4, 32], strides = [1, 1]} : vector<4x128xf32> to vector<4x32xf32>
    %163 = arith.negf %162 : vector<4x32xf32>
    %164 = math.exp %163 : vector<4x32xf32>
    %cst_49 = arith.constant 1.000000e+00 : f32
    %165 = vector.broadcast %cst_49 : f32 to vector<4x32xf32>
    %166 = arith.addf %165, %164 : vector<4x32xf32>
    %167 = arith.divf %165, %166 : vector<4x32xf32>
    %168 = vector.extract_strided_slice %161 {offsets = [0, 32], sizes = [4, 32], strides = [1, 1]} : vector<4x128xf32> to vector<4x32xf32>
    %169 = arith.negf %168 : vector<4x32xf32>
    %170 = math.exp %169 : vector<4x32xf32>
    %cst_50 = arith.constant 1.000000e+00 : f32
    %171 = vector.broadcast %cst_50 : f32 to vector<4x32xf32>
    %172 = arith.addf %171, %170 : vector<4x32xf32>
    %173 = arith.divf %171, %172 : vector<4x32xf32>
    %174 = vector.extract_strided_slice %161 {offsets = [0, 64], sizes = [4, 32], strides = [1, 1]} : vector<4x128xf32> to vector<4x32xf32>
    %175 = math.tanh %174 : vector<4x32xf32>
    %176 = vector.extract_strided_slice %161 {offsets = [0, 96], sizes = [4, 32], strides = [1, 1]} : vector<4x128xf32> to vector<4x32xf32>
    %177 = arith.negf %176 : vector<4x32xf32>
    %178 = math.exp %177 : vector<4x32xf32>
    %cst_51 = arith.constant 1.000000e+00 : f32
    %179 = vector.broadcast %cst_51 : f32 to vector<4x32xf32>
    %180 = arith.addf %179, %178 : vector<4x32xf32>
    %181 = arith.divf %179, %180 : vector<4x32xf32>
    %182 = arith.mulf %173, %155 : vector<4x32xf32>
    %183 = arith.mulf %167, %175 : vector<4x32xf32>
    %184 = arith.addf %182, %183 : vector<4x32xf32>
    %185 = math.tanh %184 : vector<4x32xf32>
    %186 = arith.mulf %181, %185 : vector<4x32xf32>
    %c0_52 = arith.constant 0 : index
    %c6 = arith.constant 6 : index
    %c0_53 = arith.constant 0 : index
    %187 = vector.load %arg11[%c0_52, %c6, %c0_53] : memref<4x8x128xf32, #tpu.memory_space<vmem>>, vector<4x1x128xf32>
    %188 = vector.shape_cast %187 : vector<4x1x128xf32> to vector<4x128xf32>
    %cst_54 = arith.constant dense<0.000000e+00> : vector<4x128xf32>
    %189 = tpu.matmul %186, %0, %cst_54 {dimension_numbers = #tpu.dot_dimension_numbers<[1], [0], [0], [1], [0, 0, 1, 1], [], []>} : vector<4x32xf32>, vector<32x128xf32>, vector<4x128xf32> -> vector<4x128xf32>
    %190 = arith.addf %188, %189 : vector<4x128xf32>
    %191 = vector.extract_strided_slice %190 {offsets = [0, 0], sizes = [4, 32], strides = [1, 1]} : vector<4x128xf32> to vector<4x32xf32>
    %192 = arith.negf %191 : vector<4x32xf32>
    %193 = math.exp %192 : vector<4x32xf32>
    %cst_55 = arith.constant 1.000000e+00 : f32
    %194 = vector.broadcast %cst_55 : f32 to vector<4x32xf32>
    %195 = arith.addf %194, %193 : vector<4x32xf32>
    %196 = arith.divf %194, %195 : vector<4x32xf32>
    %197 = vector.extract_strided_slice %190 {offsets = [0, 32], sizes = [4, 32], strides = [1, 1]} : vector<4x128xf32> to vector<4x32xf32>
    %198 = arith.negf %197 : vector<4x32xf32>
    %199 = math.exp %198 : vector<4x32xf32>
    %cst_56 = arith.constant 1.000000e+00 : f32
    %200 = vector.broadcast %cst_56 : f32 to vector<4x32xf32>
    %201 = arith.addf %200, %199 : vector<4x32xf32>
    %202 = arith.divf %200, %201 : vector<4x32xf32>
    %203 = vector.extract_strided_slice %190 {offsets = [0, 64], sizes = [4, 32], strides = [1, 1]} : vector<4x128xf32> to vector<4x32xf32>
    %204 = math.tanh %203 : vector<4x32xf32>
    %205 = vector.extract_strided_slice %190 {offsets = [0, 96], sizes = [4, 32], strides = [1, 1]} : vector<4x128xf32> to vector<4x32xf32>
    %206 = arith.negf %205 : vector<4x32xf32>
    %207 = math.exp %206 : vector<4x32xf32>
    %cst_57 = arith.constant 1.000000e+00 : f32
    %208 = vector.broadcast %cst_57 : f32 to vector<4x32xf32>
    %209 = arith.addf %208, %207 : vector<4x32xf32>
    %210 = arith.divf %208, %209 : vector<4x32xf32>
    %211 = arith.mulf %202, %184 : vector<4x32xf32>
    %212 = arith.mulf %196, %204 : vector<4x32xf32>
    %213 = arith.addf %211, %212 : vector<4x32xf32>
    %214 = math.tanh %213 : vector<4x32xf32>
    %215 = arith.mulf %210, %214 : vector<4x32xf32>
    %c0_58 = arith.constant 0 : index
    %c7 = arith.constant 7 : index
    %c0_59 = arith.constant 0 : index
    %216 = vector.load %arg11[%c0_58, %c7, %c0_59] : memref<4x8x128xf32, #tpu.memory_space<vmem>>, vector<4x1x128xf32>
    %217 = vector.shape_cast %216 : vector<4x1x128xf32> to vector<4x128xf32>
    %cst_60 = arith.constant dense<0.000000e+00> : vector<4x128xf32>
    %218 = tpu.matmul %215, %0, %cst_60 {dimension_numbers = #tpu.dot_dimension_numbers<[1], [0], [0], [1], [0, 0, 1, 1], [], []>} : vector<4x32xf32>, vector<32x128xf32>, vector<4x128xf32> -> vector<4x128xf32>
    %219 = arith.addf %217, %218 : vector<4x128xf32>
    %220 = vector.extract_strided_slice %219 {offsets = [0, 0], sizes = [4, 32], strides = [1, 1]} : vector<4x128xf32> to vector<4x32xf32>
    %221 = arith.negf %220 : vector<4x32xf32>
    %222 = math.exp %221 : vector<4x32xf32>
    %cst_61 = arith.constant 1.000000e+00 : f32
    %223 = vector.broadcast %cst_61 : f32 to vector<4x32xf32>
    %224 = arith.addf %223, %222 : vector<4x32xf32>
    %225 = arith.divf %223, %224 : vector<4x32xf32>
    %226 = vector.extract_strided_slice %219 {offsets = [0, 32], sizes = [4, 32], strides = [1, 1]} : vector<4x128xf32> to vector<4x32xf32>
    %227 = arith.negf %226 : vector<4x32xf32>
    %228 = math.exp %227 : vector<4x32xf32>
    %cst_62 = arith.constant 1.000000e+00 : f32
    %229 = vector.broadcast %cst_62 : f32 to vector<4x32xf32>
    %230 = arith.addf %229, %228 : vector<4x32xf32>
    %231 = arith.divf %229, %230 : vector<4x32xf32>
    %232 = vector.extract_strided_slice %219 {offsets = [0, 64], sizes = [4, 32], strides = [1, 1]} : vector<4x128xf32> to vector<4x32xf32>
    %233 = math.tanh %232 : vector<4x32xf32>
    %234 = vector.extract_strided_slice %219 {offsets = [0, 96], sizes = [4, 32], strides = [1, 1]} : vector<4x128xf32> to vector<4x32xf32>
    %235 = arith.negf %234 : vector<4x32xf32>
    %236 = math.exp %235 : vector<4x32xf32>
    %cst_63 = arith.constant 1.000000e+00 : f32
    %237 = vector.broadcast %cst_63 : f32 to vector<4x32xf32>
    %238 = arith.addf %237, %236 : vector<4x32xf32>
    %239 = arith.divf %237, %238 : vector<4x32xf32>
    %240 = arith.mulf %231, %213 : vector<4x32xf32>
    %241 = arith.mulf %225, %233 : vector<4x32xf32>
    %242 = arith.addf %240, %241 : vector<4x32xf32>
    %243 = math.tanh %242 : vector<4x32xf32>
    %244 = arith.mulf %239, %243 : vector<4x32xf32>
    %c0_64 = arith.constant 0 : index
    %c0_65 = arith.constant 0 : index
    %245 = vector.load %arg5[%c0_64, %c0_65] : memref<32x128xf32, #tpu.memory_space<vmem>>, vector<32x128xf32>
    %cst_66 = arith.constant dense<0.000000e+00> : vector<4x128xf32>
    %246 = tpu.matmul %244, %245, %cst_66 {dimension_numbers = #tpu.dot_dimension_numbers<[1], [0], [0], [1], [0, 0, 1, 1], [], []>} : vector<4x32xf32>, vector<32x128xf32>, vector<4x128xf32> -> vector<4x128xf32>
    %c0_67 = arith.constant 0 : index
    %c0_68 = arith.constant 0 : index
    %247 = vector.load %arg7[%c0_67, %c0_68] : memref<1x128xf32, #tpu.memory_space<vmem>>, vector<1x128xf32>
    %248 = vector.broadcast %247 : vector<1x128xf32> to vector<4x128xf32>
    %249 = arith.addf %246, %248 : vector<4x128xf32>
    %cst_69 = arith.constant dense<0.000000e+00> : vector<4x128xf32>
    %250 = tpu.matmul %11, %1, %cst_69 {dimension_numbers = #tpu.dot_dimension_numbers<[1], [0], [0], [1], [0, 0, 1, 1], [], []>} : vector<4x32xf32>, vector<32x128xf32>, vector<4x128xf32> -> vector<4x128xf32>
    %251 = arith.addf %249, %250 : vector<4x128xf32>
    %252 = vector.extract_strided_slice %251 {offsets = [0, 0], sizes = [4, 32], strides = [1, 1]} : vector<4x128xf32> to vector<4x32xf32>
    %253 = arith.negf %252 : vector<4x32xf32>
    %254 = math.exp %253 : vector<4x32xf32>
    %cst_70 = arith.constant 1.000000e+00 : f32
    %255 = vector.broadcast %cst_70 : f32 to vector<4x32xf32>
    %256 = arith.addf %255, %254 : vector<4x32xf32>
    %257 = arith.divf %255, %256 : vector<4x32xf32>
    %258 = vector.extract_strided_slice %251 {offsets = [0, 32], sizes = [4, 32], strides = [1, 1]} : vector<4x128xf32> to vector<4x32xf32>
    %259 = arith.negf %258 : vector<4x32xf32>
    %260 = math.exp %259 : vector<4x32xf32>
    %cst_71 = arith.constant 1.000000e+00 : f32
    %261 = vector.broadcast %cst_71 : f32 to vector<4x32xf32>
    %262 = arith.addf %261, %260 : vector<4x32xf32>
    %263 = arith.divf %261, %262 : vector<4x32xf32>
    %264 = vector.extract_strided_slice %251 {offsets = [0, 64], sizes = [4, 32], strides = [1, 1]} : vector<4x128xf32> to vector<4x32xf32>
    %265 = math.tanh %264 : vector<4x32xf32>
    %266 = vector.extract_strided_slice %251 {offsets = [0, 96], sizes = [4, 32], strides = [1, 1]} : vector<4x128xf32> to vector<4x32xf32>
    %267 = arith.negf %266 : vector<4x32xf32>
    %268 = math.exp %267 : vector<4x32xf32>
    %cst_72 = arith.constant 1.000000e+00 : f32
    %269 = vector.broadcast %cst_72 : f32 to vector<4x32xf32>
    %270 = arith.addf %269, %268 : vector<4x32xf32>
    %271 = arith.divf %269, %270 : vector<4x32xf32>
    %272 = arith.mulf %263, %12 : vector<4x32xf32>
    %273 = arith.mulf %257, %265 : vector<4x32xf32>
    %274 = arith.addf %272, %273 : vector<4x32xf32>
    %275 = math.tanh %274 : vector<4x32xf32>
    %276 = arith.mulf %271, %275 : vector<4x32xf32>
    %c0_73 = arith.constant 0 : index
    %c0_74 = arith.constant 0 : index
    %c0_75 = arith.constant 0 : index
    %277 = vector.load %arg12[%c0_73, %c0_74, %c0_75] : memref<4x8x32xf32, #tpu.memory_space<vmem>>, vector<4x1x32xf32>
    %278 = vector.shape_cast %277 : vector<4x1x32xf32> to vector<4x32xf32>
    %279 = vector.shape_cast %276 : vector<4x32xf32> to vector<4x1x32xf32>
    tpu.vector_store %arg12[%c0_73, %c0_74, %c0_75], %279 {strides = array<i32>} : memref<4x8x32xf32, #tpu.memory_space<vmem>>, vector<4x1x32xf32>,
    %cst_76 = arith.constant dense<0.000000e+00> : vector<4x128xf32>
    %280 = tpu.matmul %276, %1, %cst_76 {dimension_numbers = #tpu.dot_dimension_numbers<[1], [0], [0], [1], [0, 0, 1, 1], [], []>} : vector<4x32xf32>, vector<32x128xf32>, vector<4x128xf32> -> vector<4x128xf32>
    %281 = arith.addf %249, %280 : vector<4x128xf32>
    %282 = vector.extract_strided_slice %281 {offsets = [0, 0], sizes = [4, 32], strides = [1, 1]} : vector<4x128xf32> to vector<4x32xf32>
    %283 = arith.negf %282 : vector<4x32xf32>
    %284 = math.exp %283 : vector<4x32xf32>
    %cst_77 = arith.constant 1.000000e+00 : f32
    %285 = vector.broadcast %cst_77 : f32 to vector<4x32xf32>
    %286 = arith.addf %285, %284 : vector<4x32xf32>
    %287 = arith.divf %285, %286 : vector<4x32xf32>
    %288 = vector.extract_strided_slice %281 {offsets = [0, 32], sizes = [4, 32], strides = [1, 1]} : vector<4x128xf32> to vector<4x32xf32>
    %289 = arith.negf %288 : vector<4x32xf32>
    %290 = math.exp %289 : vector<4x32xf32>
    %cst_78 = arith.constant 1.000000e+00 : f32
    %291 = vector.broadcast %cst_78 : f32 to vector<4x32xf32>
    %292 = arith.addf %291, %290 : vector<4x32xf32>
    %293 = arith.divf %291, %292 : vector<4x32xf32>
    %294 = vector.extract_strided_slice %281 {offsets = [0, 64], sizes = [4, 32], strides = [1, 1]} : vector<4x128xf32> to vector<4x32xf32>
    %295 = math.tanh %294 : vector<4x32xf32>
    %296 = vector.extract_strided_slice %281 {offsets = [0, 96], sizes = [4, 32], strides = [1, 1]} : vector<4x128xf32> to vector<4x32xf32>
    %297 = arith.negf %296 : vector<4x32xf32>
    %298 = math.exp %297 : vector<4x32xf32>
    %cst_79 = arith.constant 1.000000e+00 : f32
    %299 = vector.broadcast %cst_79 : f32 to vector<4x32xf32>
    %300 = arith.addf %299, %298 : vector<4x32xf32>
    %301 = arith.divf %299, %300 : vector<4x32xf32>
    %302 = arith.mulf %293, %274 : vector<4x32xf32>
    %303 = arith.mulf %287, %295 : vector<4x32xf32>
    %304 = arith.addf %302, %303 : vector<4x32xf32>
    %305 = math.tanh %304 : vector<4x32xf32>
    %306 = arith.mulf %301, %305 : vector<4x32xf32>
    %c0_80 = arith.constant 0 : index
    %c1_81 = arith.constant 1 : index
    %c0_82 = arith.constant 0 : index
    %307 = vector.load %arg12[%c0_80, %c1_81, %c0_82] : memref<4x8x32xf32, #tpu.memory_space<vmem>>, vector<4x1x32xf32>
    %308 = vector.shape_cast %307 : vector<4x1x32xf32> to vector<4x32xf32>
    %309 = vector.shape_cast %306 : vector<4x32xf32> to vector<4x1x32xf32>
    tpu.vector_store %arg12[%c0_80, %c1_81, %c0_82], %309 {strides = array<i32>} : memref<4x8x32xf32, #tpu.memory_space<vmem>>, vector<4x1x32xf32>,
    %cst_83 = arith.constant dense<0.000000e+00> : vector<4x128xf32>
    %310 = tpu.matmul %306, %1, %cst_83 {dimension_numbers = #tpu.dot_dimension_numbers<[1], [0], [0], [1], [0, 0, 1, 1], [], []>} : vector<4x32xf32>, vector<32x128xf32>, vector<4x128xf32> -> vector<4x128xf32>
    %311 = arith.addf %249, %310 : vector<4x128xf32>
    %312 = vector.extract_strided_slice %311 {offsets = [0, 0], sizes = [4, 32], strides = [1, 1]} : vector<4x128xf32> to vector<4x32xf32>
    %313 = arith.negf %312 : vector<4x32xf32>
    %314 = math.exp %313 : vector<4x32xf32>
    %cst_84 = arith.constant 1.000000e+00 : f32
    %315 = vector.broadcast %cst_84 : f32 to vector<4x32xf32>
    %316 = arith.addf %315, %314 : vector<4x32xf32>
    %317 = arith.divf %315, %316 : vector<4x32xf32>
    %318 = vector.extract_strided_slice %311 {offsets = [0, 32], sizes = [4, 32], strides = [1, 1]} : vector<4x128xf32> to vector<4x32xf32>
    %319 = arith.negf %318 : vector<4x32xf32>
    %320 = math.exp %319 : vector<4x32xf32>
    %cst_85 = arith.constant 1.000000e+00 : f32
    %321 = vector.broadcast %cst_85 : f32 to vector<4x32xf32>
    %322 = arith.addf %321, %320 : vector<4x32xf32>
    %323 = arith.divf %321, %322 : vector<4x32xf32>
    %324 = vector.extract_strided_slice %311 {offsets = [0, 64], sizes = [4, 32], strides = [1, 1]} : vector<4x128xf32> to vector<4x32xf32>
    %325 = math.tanh %324 : vector<4x32xf32>
    %326 = vector.extract_strided_slice %311 {offsets = [0, 96], sizes = [4, 32], strides = [1, 1]} : vector<4x128xf32> to vector<4x32xf32>
    %327 = arith.negf %326 : vector<4x32xf32>
    %328 = math.exp %327 : vector<4x32xf32>
    %cst_86 = arith.constant 1.000000e+00 : f32
    %329 = vector.broadcast %cst_86 : f32 to vector<4x32xf32>
    %330 = arith.addf %329, %328 : vector<4x32xf32>
    %331 = arith.divf %329, %330 : vector<4x32xf32>
    %332 = arith.mulf %323, %304 : vector<4x32xf32>
    %333 = arith.mulf %317, %325 : vector<4x32xf32>
    %334 = arith.addf %332, %333 : vector<4x32xf32>
    %335 = math.tanh %334 : vector<4x32xf32>
    %336 = arith.mulf %331, %335 : vector<4x32xf32>
    %c0_87 = arith.constant 0 : index
    %c2_88 = arith.constant 2 : index
    %c0_89 = arith.constant 0 : index
    %337 = vector.load %arg12[%c0_87, %c2_88, %c0_89] : memref<4x8x32xf32, #tpu.memory_space<vmem>>, vector<4x1x32xf32>
    %338 = vector.shape_cast %337 : vector<4x1x32xf32> to vector<4x32xf32>
    %339 = vector.shape_cast %336 : vector<4x32xf32> to vector<4x1x32xf32>
    tpu.vector_store %arg12[%c0_87, %c2_88, %c0_89], %339 {strides = array<i32>} : memref<4x8x32xf32, #tpu.memory_space<vmem>>, vector<4x1x32xf32>,
    %cst_90 = arith.constant dense<0.000000e+00> : vector<4x128xf32>
    %340 = tpu.matmul %336, %1, %cst_90 {dimension_numbers = #tpu.dot_dimension_numbers<[1], [0], [0], [1], [0, 0, 1, 1], [], []>} : vector<4x32xf32>, vector<32x128xf32>, vector<4x128xf32> -> vector<4x128xf32>
    %341 = arith.addf %249, %340 : vector<4x128xf32>
    %342 = vector.extract_strided_slice %341 {offsets = [0, 0], sizes = [4, 32], strides = [1, 1]} : vector<4x128xf32> to vector<4x32xf32>
    %343 = arith.negf %342 : vector<4x32xf32>
    %344 = math.exp %343 : vector<4x32xf32>
    %cst_91 = arith.constant 1.000000e+00 : f32
    %345 = vector.broadcast %cst_91 : f32 to vector<4x32xf32>
    %346 = arith.addf %345, %344 : vector<4x32xf32>
    %347 = arith.divf %345, %346 : vector<4x32xf32>
    %348 = vector.extract_strided_slice %341 {offsets = [0, 32], sizes = [4, 32], strides = [1, 1]} : vector<4x128xf32> to vector<4x32xf32>
    %349 = arith.negf %348 : vector<4x32xf32>
    %350 = math.exp %349 : vector<4x32xf32>
    %cst_92 = arith.constant 1.000000e+00 : f32
    %351 = vector.broadcast %cst_92 : f32 to vector<4x32xf32>
    %352 = arith.addf %351, %350 : vector<4x32xf32>
    %353 = arith.divf %351, %352 : vector<4x32xf32>
    %354 = vector.extract_strided_slice %341 {offsets = [0, 64], sizes = [4, 32], strides = [1, 1]} : vector<4x128xf32> to vector<4x32xf32>
    %355 = math.tanh %354 : vector<4x32xf32>
    %356 = vector.extract_strided_slice %341 {offsets = [0, 96], sizes = [4, 32], strides = [1, 1]} : vector<4x128xf32> to vector<4x32xf32>
    %357 = arith.negf %356 : vector<4x32xf32>
    %358 = math.exp %357 : vector<4x32xf32>
    %cst_93 = arith.constant 1.000000e+00 : f32
    %359 = vector.broadcast %cst_93 : f32 to vector<4x32xf32>
    %360 = arith.addf %359, %358 : vector<4x32xf32>
    %361 = arith.divf %359, %360 : vector<4x32xf32>
    %362 = arith.mulf %353, %334 : vector<4x32xf32>
    %363 = arith.mulf %347, %355 : vector<4x32xf32>
    %364 = arith.addf %362, %363 : vector<4x32xf32>
    %365 = math.tanh %364 : vector<4x32xf32>
    %366 = arith.mulf %361, %365 : vector<4x32xf32>
    %c0_94 = arith.constant 0 : index
    %c3_95 = arith.constant 3 : index
    %c0_96 = arith.constant 0 : index
    %367 = vector.load %arg12[%c0_94, %c3_95, %c0_96] : memref<4x8x32xf32, #tpu.memory_space<vmem>>, vector<4x1x32xf32>
    %368 = vector.shape_cast %367 : vector<4x1x32xf32> to vector<4x32xf32>
    %369 = vector.shape_cast %366 : vector<4x32xf32> to vector<4x1x32xf32>
    tpu.vector_store %arg12[%c0_94, %c3_95, %c0_96], %369 {strides = array<i32>} : memref<4x8x32xf32, #tpu.memory_space<vmem>>, vector<4x1x32xf32>,
    %cst_97 = arith.constant dense<0.000000e+00> : vector<4x128xf32>
    %370 = tpu.matmul %366, %1, %cst_97 {dimension_numbers = #tpu.dot_dimension_numbers<[1], [0], [0], [1], [0, 0, 1, 1], [], []>} : vector<4x32xf32>, vector<32x128xf32>, vector<4x128xf32> -> vector<4x128xf32>
    %371 = arith.addf %249, %370 : vector<4x128xf32>
    %372 = vector.extract_strided_slice %371 {offsets = [0, 0], sizes = [4, 32], strides = [1, 1]} : vector<4x128xf32> to vector<4x32xf32>
    %373 = arith.negf %372 : vector<4x32xf32>
    %374 = math.exp %373 : vector<4x32xf32>
    %cst_98 = arith.constant 1.000000e+00 : f32
    %375 = vector.broadcast %cst_98 : f32 to vector<4x32xf32>
    %376 = arith.addf %375, %374 : vector<4x32xf32>
    %377 = arith.divf %375, %376 : vector<4x32xf32>
    %378 = vector.extract_strided_slice %371 {offsets = [0, 32], sizes = [4, 32], strides = [1, 1]} : vector<4x128xf32> to vector<4x32xf32>
    %379 = arith.negf %378 : vector<4x32xf32>
    %380 = math.exp %379 : vector<4x32xf32>
    %cst_99 = arith.constant 1.000000e+00 : f32
    %381 = vector.broadcast %cst_99 : f32 to vector<4x32xf32>
    %382 = arith.addf %381, %380 : vector<4x32xf32>
    %383 = arith.divf %381, %382 : vector<4x32xf32>
    %384 = vector.extract_strided_slice %371 {offsets = [0, 64], sizes = [4, 32], strides = [1, 1]} : vector<4x128xf32> to vector<4x32xf32>
    %385 = math.tanh %384 : vector<4x32xf32>
    %386 = vector.extract_strided_slice %371 {offsets = [0, 96], sizes = [4, 32], strides = [1, 1]} : vector<4x128xf32> to vector<4x32xf32>
    %387 = arith.negf %386 : vector<4x32xf32>
    %388 = math.exp %387 : vector<4x32xf32>
    %cst_100 = arith.constant 1.000000e+00 : f32
    %389 = vector.broadcast %cst_100 : f32 to vector<4x32xf32>
    %390 = arith.addf %389, %388 : vector<4x32xf32>
    %391 = arith.divf %389, %390 : vector<4x32xf32>
    %392 = arith.mulf %383, %364 : vector<4x32xf32>
    %393 = arith.mulf %377, %385 : vector<4x32xf32>
    %394 = arith.addf %392, %393 : vector<4x32xf32>
    %395 = math.tanh %394 : vector<4x32xf32>
    %396 = arith.mulf %391, %395 : vector<4x32xf32>
    %c0_101 = arith.constant 0 : index
    %c4_102 = arith.constant 4 : index
    %c0_103 = arith.constant 0 : index
    %397 = vector.load %arg12[%c0_101, %c4_102, %c0_103] : memref<4x8x32xf32, #tpu.memory_space<vmem>>, vector<4x1x32xf32>
    %398 = vector.shape_cast %397 : vector<4x1x32xf32> to vector<4x32xf32>
    %399 = vector.shape_cast %396 : vector<4x32xf32> to vector<4x1x32xf32>
    tpu.vector_store %arg12[%c0_101, %c4_102, %c0_103], %399 {strides = array<i32>} : memref<4x8x32xf32, #tpu.memory_space<vmem>>, vector<4x1x32xf32>,
    %cst_104 = arith.constant dense<0.000000e+00> : vector<4x128xf32>
    %400 = tpu.matmul %396, %1, %cst_104 {dimension_numbers = #tpu.dot_dimension_numbers<[1], [0], [0], [1], [0, 0, 1, 1], [], []>} : vector<4x32xf32>, vector<32x128xf32>, vector<4x128xf32> -> vector<4x128xf32>
    %401 = arith.addf %249, %400 : vector<4x128xf32>
    %402 = vector.extract_strided_slice %401 {offsets = [0, 0], sizes = [4, 32], strides = [1, 1]} : vector<4x128xf32> to vector<4x32xf32>
    %403 = arith.negf %402 : vector<4x32xf32>
    %404 = math.exp %403 : vector<4x32xf32>
    %cst_105 = arith.constant 1.000000e+00 : f32
    %405 = vector.broadcast %cst_105 : f32 to vector<4x32xf32>
    %406 = arith.addf %405, %404 : vector<4x32xf32>
    %407 = arith.divf %405, %406 : vector<4x32xf32>
    %408 = vector.extract_strided_slice %401 {offsets = [0, 32], sizes = [4, 32], strides = [1, 1]} : vector<4x128xf32> to vector<4x32xf32>
    %409 = arith.negf %408 : vector<4x32xf32>
    %410 = math.exp %409 : vector<4x32xf32>
    %cst_106 = arith.constant 1.000000e+00 : f32
    %411 = vector.broadcast %cst_106 : f32 to vector<4x32xf32>
    %412 = arith.addf %411, %410 : vector<4x32xf32>
    %413 = arith.divf %411, %412 : vector<4x32xf32>
    %414 = vector.extract_strided_slice %401 {offsets = [0, 64], sizes = [4, 32], strides = [1, 1]} : vector<4x128xf32> to vector<4x32xf32>
    %415 = math.tanh %414 : vector<4x32xf32>
    %416 = vector.extract_strided_slice %401 {offsets = [0, 96], sizes = [4, 32], strides = [1, 1]} : vector<4x128xf32> to vector<4x32xf32>
    %417 = arith.negf %416 : vector<4x32xf32>
    %418 = math.exp %417 : vector<4x32xf32>
    %cst_107 = arith.constant 1.000000e+00 : f32
    %419 = vector.broadcast %cst_107 : f32 to vector<4x32xf32>
    %420 = arith.addf %419, %418 : vector<4x32xf32>
    %421 = arith.divf %419, %420 : vector<4x32xf32>
    %422 = arith.mulf %413, %394 : vector<4x32xf32>
    %423 = arith.mulf %407, %415 : vector<4x32xf32>
    %424 = arith.addf %422, %423 : vector<4x32xf32>
    %425 = math.tanh %424 : vector<4x32xf32>
    %426 = arith.mulf %421, %425 : vector<4x32xf32>
    %c0_108 = arith.constant 0 : index
    %c5_109 = arith.constant 5 : index
    %c0_110 = arith.constant 0 : index
    %427 = vector.load %arg12[%c0_108, %c5_109, %c0_110] : memref<4x8x32xf32, #tpu.memory_space<vmem>>, vector<4x1x32xf32>
    %428 = vector.shape_cast %427 : vector<4x1x32xf32> to vector<4x32xf32>
    %429 = vector.shape_cast %426 : vector<4x32xf32> to vector<4x1x32xf32>
    tpu.vector_store %arg12[%c0_108, %c5_109, %c0_110], %429 {strides = array<i32>} : memref<4x8x32xf32, #tpu.memory_space<vmem>>, vector<4x1x32xf32>,
    %cst_111 = arith.constant dense<0.000000e+00> : vector<4x128xf32>
    %430 = tpu.matmul %426, %1, %cst_111 {dimension_numbers = #tpu.dot_dimension_numbers<[1], [0], [0], [1], [0, 0, 1, 1], [], []>} : vector<4x32xf32>, vector<32x128xf32>, vector<4x128xf32> -> vector<4x128xf32>
    %431 = arith.addf %249, %430 : vector<4x128xf32>
    %432 = vector.extract_strided_slice %431 {offsets = [0, 0], sizes = [4, 32], strides = [1, 1]} : vector<4x128xf32> to vector<4x32xf32>
    %433 = arith.negf %432 : vector<4x32xf32>
    %434 = math.exp %433 : vector<4x32xf32>
    %cst_112 = arith.constant 1.000000e+00 : f32
    %435 = vector.broadcast %cst_112 : f32 to vector<4x32xf32>
    %436 = arith.addf %435, %434 : vector<4x32xf32>
    %437 = arith.divf %435, %436 : vector<4x32xf32>
    %438 = vector.extract_strided_slice %431 {offsets = [0, 32], sizes = [4, 32], strides = [1, 1]} : vector<4x128xf32> to vector<4x32xf32>
    %439 = arith.negf %438 : vector<4x32xf32>
    %440 = math.exp %439 : vector<4x32xf32>
    %cst_113 = arith.constant 1.000000e+00 : f32
    %441 = vector.broadcast %cst_113 : f32 to vector<4x32xf32>
    %442 = arith.addf %441, %440 : vector<4x32xf32>
    %443 = arith.divf %441, %442 : vector<4x32xf32>
    %444 = vector.extract_strided_slice %431 {offsets = [0, 64], sizes = [4, 32], strides = [1, 1]} : vector<4x128xf32> to vector<4x32xf32>
    %445 = math.tanh %444 : vector<4x32xf32>
    %446 = vector.extract_strided_slice %431 {offsets = [0, 96], sizes = [4, 32], strides = [1, 1]} : vector<4x128xf32> to vector<4x32xf32>
    %447 = arith.negf %446 : vector<4x32xf32>
    %448 = math.exp %447 : vector<4x32xf32>
    %cst_114 = arith.constant 1.000000e+00 : f32
    %449 = vector.broadcast %cst_114 : f32 to vector<4x32xf32>
    %450 = arith.addf %449, %448 : vector<4x32xf32>
    %451 = arith.divf %449, %450 : vector<4x32xf32>
    %452 = arith.mulf %443, %424 : vector<4x32xf32>
    %453 = arith.mulf %437, %445 : vector<4x32xf32>
    %454 = arith.addf %452, %453 : vector<4x32xf32>
    %455 = math.tanh %454 : vector<4x32xf32>
    %456 = arith.mulf %451, %455 : vector<4x32xf32>
    %c0_115 = arith.constant 0 : index
    %c6_116 = arith.constant 6 : index
    %c0_117 = arith.constant 0 : index
    %457 = vector.load %arg12[%c0_115, %c6_116, %c0_117] : memref<4x8x32xf32, #tpu.memory_space<vmem>>, vector<4x1x32xf32>
    %458 = vector.shape_cast %457 : vector<4x1x32xf32> to vector<4x32xf32>
    %459 = vector.shape_cast %456 : vector<4x32xf32> to vector<4x1x32xf32>
    tpu.vector_store %arg12[%c0_115, %c6_116, %c0_117], %459 {strides = array<i32>} : memref<4x8x32xf32, #tpu.memory_space<vmem>>, vector<4x1x32xf32>,
    %cst_118 = arith.constant dense<0.000000e+00> : vector<4x128xf32>
    %460 = tpu.matmul %456, %1, %cst_118 {dimension_numbers = #tpu.dot_dimension_numbers<[1], [0], [0], [1], [0, 0, 1, 1], [], []>} : vector<4x32xf32>, vector<32x128xf32>, vector<4x128xf32> -> vector<4x128xf32>
    %461 = arith.addf %249, %460 : vector<4x128xf32>
    %462 = vector.extract_strided_slice %461 {offsets = [0, 0], sizes = [4, 32], strides = [1, 1]} : vector<4x128xf32> to vector<4x32xf32>
    %463 = arith.negf %462 : vector<4x32xf32>
    %464 = math.exp %463 : vector<4x32xf32>
    %cst_119 = arith.constant 1.000000e+00 : f32
    %465 = vector.broadcast %cst_119 : f32 to vector<4x32xf32>
    %466 = arith.addf %465, %464 : vector<4x32xf32>
    %467 = arith.divf %465, %466 : vector<4x32xf32>
    %468 = vector.extract_strided_slice %461 {offsets = [0, 32], sizes = [4, 32], strides = [1, 1]} : vector<4x128xf32> to vector<4x32xf32>
    %469 = arith.negf %468 : vector<4x32xf32>
    %470 = math.exp %469 : vector<4x32xf32>
    %cst_120 = arith.constant 1.000000e+00 : f32
    %471 = vector.broadcast %cst_120 : f32 to vector<4x32xf32>
    %472 = arith.addf %471, %470 : vector<4x32xf32>
    %473 = arith.divf %471, %472 : vector<4x32xf32>
    %474 = vector.extract_strided_slice %461 {offsets = [0, 64], sizes = [4, 32], strides = [1, 1]} : vector<4x128xf32> to vector<4x32xf32>
    %475 = math.tanh %474 : vector<4x32xf32>
    %476 = vector.extract_strided_slice %461 {offsets = [0, 96], sizes = [4, 32], strides = [1, 1]} : vector<4x128xf32> to vector<4x32xf32>
    %477 = arith.negf %476 : vector<4x32xf32>
    %478 = math.exp %477 : vector<4x32xf32>
    %cst_121 = arith.constant 1.000000e+00 : f32
    %479 = vector.broadcast %cst_121 : f32 to vector<4x32xf32>
    %480 = arith.addf %479, %478 : vector<4x32xf32>
    %481 = arith.divf %479, %480 : vector<4x32xf32>
    %482 = arith.mulf %473, %454 : vector<4x32xf32>
    %483 = arith.mulf %467, %475 : vector<4x32xf32>
    %484 = arith.addf %482, %483 : vector<4x32xf32>
    %485 = math.tanh %484 : vector<4x32xf32>
    %486 = arith.mulf %481, %485 : vector<4x32xf32>
    %c0_122 = arith.constant 0 : index
    %c7_123 = arith.constant 7 : index
    %c0_124 = arith.constant 0 : index
    %487 = vector.load %arg12[%c0_122, %c7_123, %c0_124] : memref<4x8x32xf32, #tpu.memory_space<vmem>>, vector<4x1x32xf32>
    %488 = vector.shape_cast %487 : vector<4x1x32xf32> to vector<4x32xf32>
    %489 = vector.shape_cast %486 : vector<4x32xf32> to vector<4x1x32xf32>
    tpu.vector_store %arg12[%c0_122, %c7_123, %c0_124], %489 {strides = array<i32>} : memref<4x8x32xf32, #tpu.memory_space<vmem>>, vector<4x1x32xf32>,
    %c0_125 = arith.constant 0 : index
    %c0_126 = arith.constant 0 : index
    %c0_127 = arith.constant 0 : index
    %490 = vector.load %arg12[%c0_125, %c0_126, %c0_127] : memref<4x8x32xf32, #tpu.memory_space<vmem>>, vector<4x8x32xf32>
    %491 = vector.shape_cast %490 : vector<4x8x32xf32> to vector<32x32xf32>
    %c0_128 = arith.constant 0 : index
    %c0_129 = arith.constant 0 : index
    %492 = vector.load %arg8[%c0_128, %c0_129] : memref<32x16xf32, #tpu.memory_space<vmem>>, vector<32x16xf32>
    %cst_130 = arith.constant dense<0.000000e+00> : vector<32x16xf32>
    %493 = tpu.matmul %491, %492, %cst_130 {dimension_numbers = #tpu.dot_dimension_numbers<[1], [0], [0], [1], [0, 0, 1, 1], [], []>} : vector<32x32xf32>, vector<32x16xf32>, vector<32x16xf32> -> vector<32x16xf32>
    %c0_131 = arith.constant 0 : index
    %c0_132 = arith.constant 0 : index
    %494 = vector.load %arg9[%c0_131, %c0_132] : memref<1x16xf32, #tpu.memory_space<vmem>>, vector<1x16xf32>
    %495 = vector.broadcast %494 : vector<1x16xf32> to vector<32x16xf32>
    %496 = arith.addf %493, %495 : vector<32x16xf32>
    %497 = vector.shape_cast %496 : vector<32x16xf32> to vector<4x8x16xf32>
    %c0_133 = arith.constant 0 : index
    %c0_134 = arith.constant 0 : index
    %c0_135 = arith.constant 0 : index
    %498 = vector.load %arg10[%c0_133, %c0_134, %c0_135] : memref<4x8x16xf32, #tpu.memory_space<vmem>>, vector<4x8x16xf32>
    tpu.vector_store %arg10[%c0_133, %c0_134, %c0_135], %497 {strides = array<i32>} : memref<4x8x16xf32, #tpu.memory_space<vmem>>, vector<4x8x16xf32>,
    return
  }
  func.func @transform_0(%arg0: i32) -> (i32, i32, i32) {
    %c0_i32 = arith.constant 0 : i32
    %c0_i32_0 = arith.constant 0 : i32
    %c0_i32_1 = arith.constant 0 : i32
    return %arg0, %c0_i32, %c0_i32_0 : i32, i32, i32
  }
  func.func @transform_1(%arg0: i32) -> (i32, i32) {
    %c0_i32 = arith.constant 0 : i32
    %c0_i32_0 = arith.constant 0 : i32
    %c0_i32_1 = arith.constant 0 : i32
    return %c0_i32, %c0_i32_0 : i32, i32
  }
  func.func @transform_2(%arg0: i32) -> (i32, i32) {
    %c0_i32 = arith.constant 0 : i32
    %c0_i32_0 = arith.constant 0 : i32
    %c0_i32_1 = arith.constant 0 : i32
    return %c0_i32, %c0_i32_0 : i32, i32
  }
  func.func @transform_3(%arg0: i32) -> (i32, i32) {
    %c0_i32 = arith.constant 0 : i32
    %c0_i32_0 = arith.constant 0 : i32
    %c0_i32_1 = arith.constant 0 : i32
    return %c0_i32, %c0_i32_0 : i32, i32
  }
  func.func @transform_4(%arg0: i32) -> (i32, i32) {
    %c0_i32 = arith.constant 0 : i32
    %c0_i32_0 = arith.constant 0 : i32
    %c0_i32_1 = arith.constant 0 : i32
    return %c0_i32, %c0_i32_0 : i32, i32
  }
  func.func @transform_5(%arg0: i32) -> (i32, i32) {
    %c0_i32 = arith.constant 0 : i32
    %c0_i32_0 = arith.constant 0 : i32
    %c0_i32_1 = arith.constant 0 : i32
    return %c0_i32, %c0_i32_0 : i32, i32
  }
  func.func @transform_6(%arg0: i32) -> (i32, i32) {
    %c0_i32 = arith.constant 0 : i32
    %c0_i32_0 = arith.constant 0 : i32
    %c0_i32_1 = arith.constant 0 : i32
    return %c0_i32, %c0_i32_0 : i32, i32
  }
  func.func @transform_7(%arg0: i32) -> (i32, i32) {
    %c0_i32 = arith.constant 0 : i32
    %c0_i32_0 = arith.constant 0 : i32
    %c0_i32_1 = arith.constant 0 : i32
    return %c0_i32, %c0_i32_0 : i32, i32
  }
  func.func @transform_8(%arg0: i32) -> (i32, i32) {
    %c0_i32 = arith.constant 0 : i32
    %c0_i32_0 = arith.constant 0 : i32
    %c0_i32_1 = arith.constant 0 : i32
    return %c0_i32, %c0_i32_0 : i32, i32
  }
  func.func @transform_9(%arg0: i32) -> (i32, i32, i32) {
    %c0_i32 = arith.constant 0 : i32
    %c0_i32_0 = arith.constant 0 : i32
    %c0_i32_1 = arith.constant 0 : i32
    return %arg0, %c0_i32, %c0_i32_0 : i32, i32, i32
  }
}

</mosaic_0001>

<llo_original>
// kernel: tpu_custom_call.1
$region0: #{tpu_custom_call.1}
  #allocation0 [shape = 'u32[]', space=smem, size = 0x4, offset = 0x4, fixed_abs, tag = 'smem constant byte address 0x4 - core index']
  #allocation1 [shape = 'u32[144,128]{1,0:T(1,128)}', space=vmem, size = 0x12000, scoped, tag = 'internal scratch']
  #allocation2 [shape = 'f32[4,8,128]{2,1,0:T(8,128)}', space=vmem, size = 0x4000, scoped, tag = 'scratch operand']
  #allocation3 [shape = 'f32[4,8,32]{2,1,0:T(8,128)}', space=vmem, size = 0x4000, scoped, tag = 'scratch operand']
  %s0 = inlined_call_operand.vmem [shape: f32[4,8,16], index: 0, kind: input, shape index: {}]
  %s1 = inlined_call_operand.hbm [shape: f32[16,128], index: 1, kind: input, shape index: {}]
  %s2 = inlined_call_operand.hbm [shape: f32[32,128], index: 2, kind: input, shape index: {}]
  %s3 = inlined_call_operand.vmem [shape: f32[1,128], index: 3, kind: input, shape index: {}]
  %s4 = inlined_call_operand.hbm [shape: f32[32,128], index: 4, kind: input, shape index: {}]
  %s5 = inlined_call_operand.vmem [shape: f32[32,128], index: 5, kind: input, shape index: {}]
  %s6 = inlined_call_operand.vmem [shape: f32[1,128], index: 6, kind: input, shape index: {}]
  %s7 = inlined_call_operand.vmem [shape: f32[32,16], index: 7, kind: input, shape index: {}]
  %s8 = inlined_call_operand.vmem [shape: f32[1,16], index: 8, kind: input, shape index: {}]
  %s9 = inlined_call_operand.hbm [shape: f32[4,8,16], index: 9, kind: output, shape index: {}]
  %s10 = sld [smem:[#allocation0]]
  $region58: #{tpu_custom_call.1} parent=0
    _
  %s12 = ssub.s32 1, %s10
  %s13 = scalar_select 0, %s12, %s10
  $region1: #{tpu_custom_call.1} parent=0
    #allocation4 [shape = 'u8[8192]{0}', space=vmem, size = 0x2000, scoped, tag = 'input window, operand 1, single buffered']
    #allocation5 [shape = 's32[1]{0}', space=sflag, size = 0x4, scoped, tag = 'scoped memory for tpu_custom_call.1']
    #allocation6 [shape = 's32[1]{0}', space=sflag, size = 0x4, scoped, tag = 'scoped memory for tpu_custom_call.1']
    #allocation7 [shape = 'u8[16384]{0}', space=vmem, size = 0x4000, scoped, tag = 'input window, operand 2, single buffered']
    #allocation8 [shape = 's32[1]{0}', space=sflag, size = 0x4, scoped, tag = 'scoped memory for tpu_custom_call.1']
    #allocation9 [shape = 'u8[16384]{0}', space=vmem, size = 0x4000, scoped, tag = 'input window, operand 4, single buffered']
    #allocation10 [shape = 'u8[16384]{0}', space=vmem, size = 0x4000, scoped, tag = 'output window, operand 0, single buffered']
    %14 = vsyncpa [#allocation5], 0
    %15 = vsyncpa [#allocation8], 0
    %16 = vsyncpa [#allocation6], 0
    // Predicated region
    $region2: #{tpu_custom_call.1} parent=1 // pred_check
      _
    $region3: #{tpu_custom_call.1} parent=1 // pred_check_branch
      %18 = sbr.rel (0) target = $region5
    $region4: #{tpu_custom_call.1} parent=1 // pred_region
      _
    $region5: #{tpu_custom_call.1} parent=1 // pred_fallthru
      _
    // Predicated region
    $region6: #{tpu_custom_call.1} parent=1 // pred_check
      _
    $region7: #{tpu_custom_call.1} parent=1 // pred_check_branch
      %20 = sbr.rel (0) target = $region9
    $region8: #{tpu_custom_call.1} parent=1 // pred_region
      %s22 = ssub.s32 256, 256
      %23 = vsyncadd [#allocation5], %s22
      %s24 = sshll.u32 [#allocation4], 4
      %s25 = int_to_ptr.vmem [resolvable:$true] %s24
      %30 = dma.hbm_to_vmem [thread:$0]  %s1, 256, %s25, [#allocation5], 128, 128, 8
    $region9: #{tpu_custom_call.1} parent=1 // pred_fallthru
      _
    // Predicated region
    $region10: #{tpu_custom_call.1} parent=1 // pred_check
      _
    $region11: #{tpu_custom_call.1} parent=1 // pred_check_branch
      %32 = sbr.rel (0) target = $region13
    $region12: #{tpu_custom_call.1} parent=1 // pred_region
      %s34 = ssub.s32 512, 512
      %35 = vsyncadd [#allocation8], %s34
      %s36 = sshll.u32 [#allocation7], 4
      %s37 = int_to_ptr.vmem [resolvable:$true] %s36
      %42 = dma.hbm_to_vmem [thread:$0]  %s2, 512, %s37, [#allocation8], 128, 128, 8
    $region13: #{tpu_custom_call.1} parent=1 // pred_fallthru
      _
    // Predicated region
    $region14: #{tpu_custom_call.1} parent=1 // pred_check
      _
    $region15: #{tpu_custom_call.1} parent=1 // pred_check_branch
      %44 = sbr.rel (0) target = $region17
    $region16: #{tpu_custom_call.1} parent=1 // pred_region
      _
    $region17: #{tpu_custom_call.1} parent=1 // pred_fallthru
      _
    // Predicated region
    $region18: #{tpu_custom_call.1} parent=1 // pred_check
      _
    $region19: #{tpu_custom_call.1} parent=1 // pred_check_branch
      %46 = sbr.rel (0) target = $region21
    $region20: #{tpu_custom_call.1} parent=1 // pred_region
      %s48 = ssub.s32 512, 512
      %49 = vsyncadd [#allocation8], %s48
      %s50 = sshll.u32 [#allocation9], 4
      %s51 = int_to_ptr.vmem [resolvable:$true] %s50
      %56 = dma.hbm_to_vmem [thread:$0]  %s4, 512, %s51, [#allocation8], 128, 128, 8
    $region21: #{tpu_custom_call.1} parent=1 // pred_fallthru
      _
    // Predicated region
    $region22: #{tpu_custom_call.1} parent=1 // pred_check
      _
    $region23: #{tpu_custom_call.1} parent=1 // pred_check_branch
      %58 = sbr.rel (0) target = $region25
    $region24: #{tpu_custom_call.1} parent=1 // pred_region
      _
    $region25: #{tpu_custom_call.1} parent=1 // pred_fallthru
      _
    // Predicated region
    $region26: #{tpu_custom_call.1} parent=1 // pred_check
      _
    $region27: #{tpu_custom_call.1} parent=1 // pred_check_branch
      %60 = sbr.rel (0) target = $region29
    $region28: #{tpu_custom_call.1} parent=1 // pred_region
      _
    $region29: #{tpu_custom_call.1} parent=1 // pred_fallthru
      _
    // Predicated region
    $region30: #{tpu_custom_call.1} parent=1 // pred_check
      _
    $region31: #{tpu_custom_call.1} parent=1 // pred_check_branch
      %62 = sbr.rel (0) target = $region33
    $region32: #{tpu_custom_call.1} parent=1 // pred_region
      _
    $region33: #{tpu_custom_call.1} parent=1 // pred_fallthru
      _
    // Predicated region
    $region34: #{tpu_custom_call.1} parent=1 // pred_check
      _
    $region35: #{tpu_custom_call.1} parent=1 // pred_check_branch
      %64 = sbr.rel (0) target = $region37
    $region36: #{tpu_custom_call.1} parent=1 // pred_region
      _
    $region37: #{tpu_custom_call.1} parent=1 // pred_fallthru
      _
    // Predicated region
    $region38: #{tpu_custom_call.1} parent=1 // pred_check
      _
    $region39: #{tpu_custom_call.1} parent=1 // pred_check_branch
      %66 = sbr.rel (0) target = $region41
    $region40: #{tpu_custom_call.1} parent=1 // pred_region
      %67 = dma.done [#allocation5], 256
    $region41: #{tpu_custom_call.1} parent=1 // pred_fallthru
      _
    // Predicated region
    $region42: #{tpu_custom_call.1} parent=1 // pred_check
      _
    $region43: #{tpu_custom_call.1} parent=1 // pred_check_branch
      %69 = sbr.rel (0) target = $region45
    $region44: #{tpu_custom_call.1} parent=1 // pred_region
      %70 = dma.done [#allocation8], 512
    $region45: #{tpu_custom_call.1} parent=1 // pred_fallthru
      _
    // Predicated region
    $region46: #{tpu_custom_call.1} parent=1 // pred_check
      _
    $region47: #{tpu_custom_call.1} parent=1 // pred_check_branch
      %72 = sbr.rel (0) target = $region49
    $region48: #{tpu_custom_call.1} parent=1 // pred_region
      %73 = dma.done [#allocation8], 512
    $region49: #{tpu_custom_call.1} parent=1 // pred_fallthru
      _
    %v74 = vld [vmem:[#allocation7] sm:$0xff]
    %v75 = vld [vmem:[#allocation7 + $0x8] sm:$0xff]
    %v76 = vld [vmem:[#allocation7 + $0x10] sm:$0xff]
    %v77 = vld [vmem:[#allocation7 + $0x18] sm:$0xff]
    %v78 = vld [vmem:[%s5] sm:$0xff]
    %v79 = vld [vmem:[%s5 + $0x8] sm:$0xff]
    %v80 = vld [vmem:[%s5 + $0x10] sm:$0xff]
    %v81 = vld [vmem:[%s5 + $0x18] sm:$0xff]
    %v82 = vld [vmem:[%s0] sm:$0xff]
    %v83 = vld [vmem:[%s0 + $0x8] sm:$0xff]
    %v84 = vld [vmem:[%s0 + $0x10] sm:$0xff]
    %v85 = vld [vmem:[%s0 + $0x18] sm:$0xff]
    %v86 = vld [vmem:[#allocation4] sm:$0xff]
    %v87 = vld [vmem:[#allocation4 + $0x8] sm:$0xff]
    %v88 = vld [vmem:[%s3] sm:$0x1]
    %v90 = vlaneseq
    %v91 = vshrl.u32 %v90, 7
    %v92 = vsub.s32 0, %v91
    %v93 = vrot.slane %v88, %v92
    %vm95 = vcmask 130048
    %v97 = vsel %vm95, %v82, 0
    %v100 = vsel %vm95, %v83, 0
    %v103 = vsel %vm95, %v84, 0
    %v106 = vsel %vm95, %v85, 0
    %108 = vmatprep.subr.mxu0 0.0
    %109 = vmatpush1.msra.mxu0 %v86
    %110 = vmatprep.subr.mxu0 0.0
    %111 = vmatpush1.msra.mxu0 %v87
    %112 = vmatprep.subr.mxu0 0.0
    %113 = vmatpush1.msra.mxu0 0.0
    %114 = vmatprep.subr.mxu0 0.0
    %115 = vmatpush1.msra.mxu0 0.0
    %116 = vmatprep.subr.mxu0 0.0
    %117 = vmatpush1.msra.mxu0 0.0
    %118 = vmatprep.subr.mxu0 0.0
    %119 = vmatpush1.msra.mxu0 0.0
    %120 = vmatprep.subr.mxu0 0.0
    %121 = vmatpush1.msra.mxu0 0.0
    %122 = vmatprep.subr.mxu0 0.0
    %123 = vmatpush1.msra.mxu0 0.0
    %124 = vmatprep.subr.mxu0 0.0
    %125 = vmatpush1.msra.mxu0 0.0
    %126 = vmatprep.subr.mxu0 0.0
    %127 = vmatpush1.msra.mxu0 0.0
    %128 = vmatprep.subr.mxu0 0.0
    %129 = vmatpush1.msra.mxu0 0.0
    %130 = vmatprep.subr.mxu0 0.0
    %131 = vmatpush1.msra.mxu0 0.0
    %132 = vmatprep.subr.mxu0 0.0
    %133 = vmatpush1.msra.mxu0 0.0
    %134 = vmatprep.subr.mxu0 0.0
    %135 = vmatpush1.msra.mxu0 0.0
    %136 = vmatprep.subr.mxu0 0.0
    %137 = vmatpush1.msra.mxu0 0.0
    %138 = vmatprep.subr.mxu0 0.0
    %139 = vmatpush1.msra.mxu0 0.0
    %140 = vmatprep.subr.mxu0 0.0
    %141 = vmatpush1.msra.mxu0 0.0
    %142 = vmatprep.subr.mxu0 0.0
    %143 = vmatpush1.msra.mxu0 0.0
    %144 = vmatprep.subr.mxu0 0.0
    %145 = vmatpush1.msra.mxu0 0.0
    %146 = vmatprep.subr.mxu0 0.0
    %147 = vmatpush1.msra.mxu0 0.0
    %148 = vmatprep.subr.mxu0 0.0
    %149 = vmatpush1.msra.mxu0 0.0
    %150 = vmatprep.subr.mxu0 0.0
    %151 = vmatpush1.msra.mxu0 0.0
    %152 = vmatprep.subr.mxu0 0.0
    %153 = vmatpush1.msra.mxu0 0.0
    %154 = vmatprep.subr.mxu0 0.0
    %155 = vmatpush1.msra.mxu0 0.0
    %156 = vmatprep.subr.mxu0 0.0
    %157 = vmatpush1.msra.mxu0 0.0
    %158 = vmatprep.subr.mxu0 0.0
    %159 = vmatpush1.msra.mxu0 0.0
    %160 = vmatprep.subr.mxu0 0.0
    %161 = vmatpush1.msra.mxu0 0.0
    %162 = vmatprep.subr.mxu0 0.0
    %163 = vmatpush1.msra.mxu0 0.0
    %164 = vmatprep.subr.mxu0 0.0
    %165 = vmatpush1.msra.mxu0 0.0
    %166 = vmatprep.subr.mxu0 0.0
    %167 = vmatpush1.msra.mxu0 0.0
    %168 = vmatprep.subr.mxu0 0.0
    %169 = vmatpush1.msra.mxu0 0.0
    %170 = vmatprep.subr.mxu0 0.0
    %171 = vmatpush1.msra.mxu0 0.0
    %172 = vmatprep.mubr.f32.mxu0 0.0
    %173 = vmatmul.mubr.f32.gmra.mrb[0].mxu0 %v97
    %v174 = vpop.f32.mrb[0].mxu0
    %v175 = vadd.f32 %v93, %v174
    %v176 = vpop.f32.mrb[0].mxu0
    %177 = vmatprep.mubr.f32.mxu0 0.0
    %178 = vmatmul.mubr.f32.gmra.mrb[0].mxu0 %v100
    %v179 = vpop.f32.mrb[0].mxu0
    %v180 = vadd.f32 %v93, %v179
    %v181 = vpop.f32.mrb[0].mxu0
    %182 = vmatprep.mubr.f32.mxu0 0.0
    %183 = vmatmul.mubr.f32.gmra.mrb[0].mxu0 %v103
    %v184 = vpop.f32.mrb[0].mxu0
    %v185 = vadd.f32 %v93, %v184
    %v186 = vpop.f32.mrb[0].mxu0
    %187 = vmatprep.mubr.f32.mxu0 0.0
    %188 = vmatmul.mubr.f32.gmra.mrb[0].mxu0 %v106
    %v189 = vpop.f32.mrb[0].mxu0
    %v190 = vadd.f32 %v93, %v189
    %v191 = vpop.f32.mrb[0].mxu0
    %192 = vdwg.mxu0
    %193 = vst [vmem:[#allocation2] sm:$0xff] %v175
    %194 = vst [vmem:[#allocation2 + $0x8] sm:$0xff] %v180
    %195 = vst [vmem:[#allocation2 + $0x10] sm:$0xff] %v185
    %196 = vst [vmem:[#allocation2 + $0x18] sm:$0xff] %v190
    %v197 = vld [vmem:[#allocation2] sm:$0x1]
    %v198 = vld [vmem:[#allocation2 + $0x8] sm:$0x1]
    %v199 = vld [vmem:[#allocation2 + $0x10] sm:$0x1]
    %v200 = vld [vmem:[#allocation2 + $0x18] sm:$0x1]
    %vm201 = vcmask 261120
    %v203 = vsel %vm201, 0.0, 0
    %205 = vmatprep.subr.mxu0 0.0
    %206 = vmatpush1.msra.mxu0 %v74
    %207 = vmatprep.subr.mxu0 0.0
    %208 = vmatpush1.msra.mxu0 %v75
    %209 = vmatprep.subr.mxu0 0.0
    %210 = vmatpush1.msra.mxu0 %v76
    %211 = vmatprep.subr.mxu0 0.0
    %212 = vmatpush1.msra.mxu0 %v77
    %213 = vmatprep.subr.mxu0 0.0
    %214 = vmatpush1.msra.mxu0 0.0
    %215 = vmatprep.subr.mxu0 0.0
    %216 = vmatpush1.msra.mxu0 0.0
    %217 = vmatprep.subr.mxu0 0.0
    %218 = vmatpush1.msra.mxu0 0.0
    %219 = vmatprep.subr.mxu0 0.0
    %220 = vmatpush1.msra.mxu0 0.0
    %221 = vmatprep.subr.mxu0 0.0
    %222 = vmatpush1.msra.mxu0 0.0
    %223 = vmatprep.subr.mxu0 0.0
    %224 = vmatpush1.msra.mxu0 0.0
    %225 = vmatprep.subr.mxu0 0.0
    %226 = vmatpush1.msra.mxu0 0.0
    %227 = vmatprep.subr.mxu0 0.0
    %228 = vmatpush1.msra.mxu0 0.0
    %229 = vmatprep.subr.mxu0 0.0
    %230 = vmatpush1.msra.mxu0 0.0
    %231 = vmatprep.subr.mxu0 0.0
    %232 = vmatpush1.msra.mxu0 0.0
    %233 = vmatprep.subr.mxu0 0.0
    %234 = vmatpush1.msra.mxu0 0.0
    %235 = vmatprep.subr.mxu0 0.0
    %236 = vmatpush1.msra.mxu0 0.0
    %237 = vmatprep.subr.mxu0 0.0
    %238 = vmatpush1.msra.mxu0 0.0
    %239 = vmatprep.subr.mxu0 0.0
    %240 = vmatpush1.msra.mxu0 0.0
    %241 = vmatprep.subr.mxu0 0.0
    %242 = vmatpush1.msra.mxu0 0.0
    %243 = vmatprep.subr.mxu0 0.0
    %244 = vmatpush1.msra.mxu0 0.0
    %245 = vmatprep.subr.mxu0 0.0
    %246 = vmatpush1.msra.mxu0 0.0
    %247 = vmatprep.subr.mxu0 0.0
    %248 = vmatpush1.msra.mxu0 0.0
    %249 = vmatprep.subr.mxu0 0.0
    %250 = vmatpush1.msra.mxu0 0.0
    %251 = vmatprep.subr.mxu0 0.0
    %252 = vmatpush1.msra.mxu0 0.0
    %253 = vmatprep.subr.mxu0 0.0
    %254 = vmatpush1.msra.mxu0 0.0
    %255 = vmatprep.subr.mxu0 0.0
    %256 = vmatpush1.msra.mxu0 0.0
    %257 = vmatprep.subr.mxu0 0.0
    %258 = vmatpush1.msra.mxu0 0.0
    %259 = vmatprep.subr.mxu0 0.0
    %260 = vmatpush1.msra.mxu0 0.0
    %261 = vmatprep.subr.mxu0 0.0
    %262 = vmatpush1.msra.mxu0 0.0
    %263 = vmatprep.subr.mxu0 0.0
    %264 = vmatpush1.msra.mxu0 0.0
    %265 = vmatprep.subr.mxu0 0.0
    %266 = vmatpush1.msra.mxu0 0.0
    %267 = vmatprep.subr.mxu0 0.0
    %268 = vmatpush1.msra.mxu0 0.0
    %269 = vmatprep.mubr.f32.mxu0 0.0
    %270 = vmatmul.mubr.f32.gmra.mrb[0].mxu0 %v203
    %v271 = vpop.f32.mrb[0].mxu0
    %v272 = vadd.f32 0.0, %v271
    %v273 = vpop.f32.mrb[0].mxu0
    %274 = vdwg.mxu0
    %v276 = vrot.slane %v272, 1
    %v277 = vrot.slane %v272, 2
    %v278 = vrot.slane %v272, 3
    %v283 = vadd.f32 %v197, %v272
    %v284 = vadd.f32 %v198, %v276
    %v285 = vadd.f32 %v199, %v277
    %v286 = vadd.f32 %v200, %v278
    %v287 = vxor.u32 %v283, 2147483648
    %v288 = vxor.u32 %v284, 2147483648
    %v289 = vxor.u32 %v285, 2147483648
    %v290 = vxor.u32 %v286, 2147483648
    %v291 = vmul.f32 %v287, 1.442695
    %v292 = vpow.pop %v291
    %v293 = vmul.f32 %v288, 1.442695
    %v294 = vpow.pop %v293
    %v295 = vmul.f32 %v289, 1.442695
    %v296 = vpow.pop %v295
    %v297 = vmul.f32 %v290, 1.442695
    %v298 = vpow.pop %v297
    %v299 = vadd.f32 %v292, 1.0
    %v300 = vadd.f32 %v294, 1.0
    %v301 = vadd.f32 %v296, 1.0
    %v302 = vadd.f32 %v298, 1.0
    %v303 = vrcp.pop %v299
    %v304 = vmul.f32 1.0, %v303
    %v305 = vrcp.pop %v300
    %v306 = vmul.f32 1.0, %v305
    %v307 = vrcp.pop %v301
    %v308 = vmul.f32 1.0, %v307
    %v309 = vrcp.pop %v302
    %v310 = vmul.f32 1.0, %v309
    %v311 = vtanh.pop %v283
    %v312 = vtanh.pop %v284
    %v313 = vtanh.pop %v285
    %v314 = vtanh.pop %v286
    %v315 = vmul.f32 %v304, 0.0
    %v316 = vmul.f32 %v306, 0.0
    %v317 = vmul.f32 %v308, 0.0
    %v318 = vmul.f32 %v310, 0.0
    %323 = vrot.lane.b32.xlu0 %v311, 64
    %v324 = vpop.permute.xlu0 %323
    %325 = vrot.lane.b32.xlu0 %v312, 64
    %v326 = vpop.permute.xlu0 %325
    %327 = vrot.lane.b32.xlu0 %v313, 64
    %v328 = vpop.permute.xlu0 %327
    %329 = vrot.lane.b32.xlu0 %v314, 64
    %v330 = vpop.permute.xlu0 %329
    %v335 = vmul.f32 %v304, %v324
    %v336 = vmul.f32 %v306, %v326
    %v337 = vmul.f32 %v308, %v328
    %v338 = vmul.f32 %v310, %v330
    %343 = vrot.lane.b32.xlu0 %v335, 32
    %v344 = vpop.permute.xlu0 %343
    %345 = vrot.lane.b32.xlu0 %v336, 32
    %v346 = vpop.permute.xlu0 %345
    %347 = vrot.lane.b32.xlu0 %v337, 32
    %v348 = vpop.permute.xlu0 %347
    %349 = vrot.lane.b32.xlu0 %v338, 32
    %v350 = vpop.permute.xlu0 %349
    %v355 = vadd.f32 %v315, %v344
    %v356 = vadd.f32 %v316, %v346
    %v357 = vadd.f32 %v317, %v348
    %v358 = vadd.f32 %v318, %v350
    %v359 = vtanh.pop %v355
    %v360 = vtanh.pop %v356
    %v361 = vtanh.pop %v357
    %v362 = vtanh.pop %v358
    %367 = vrot.lane.b32.xlu0 %v359, 64
    %v368 = vpop.permute.xlu0 %367
    %369 = vrot.lane.b32.xlu0 %v360, 64
    %v370 = vpop.permute.xlu0 %369
    %371 = vrot.lane.b32.xlu0 %v361, 64
    %v372 = vpop.permute.xlu0 %371
    %373 = vrot.lane.b32.xlu0 %v362, 64
    %v374 = vpop.permute.xlu0 %373
    %v379 = vmul.f32 %v304, %v368
    %v380 = vmul.f32 %v306, %v370
    %v381 = vmul.f32 %v308, %v372
    %v382 = vmul.f32 %v310, %v374
    %v383 = vld [vmem:[#allocation2 + $0x1] sm:$0x1]
    %v384 = vld [vmem:[#allocation2 + $0x9] sm:$0x1]
    %v385 = vld [vmem:[#allocation2 + $0x11] sm:$0x1]
    %v386 = vld [vmem:[#allocation2 + $0x19] sm:$0x1]
    %v391 = vrot.slane %v380, 7
    %vm392 = vcmask 1041409
    %v393 = vsel %vm392, %v391, %v379
    %v394 = vrot.slane %v381, 6
    %vm395 = vcmask 1042434
    %v396 = vsel %vm395, %v394, %v393
    %v397 = vrot.slane %v382, 5
    %vm398 = vcmask 1043459
    %v399 = vsel %vm398, %v397, %v396
    %400 = vrot.lane.b32.xlu0 %v399, 32
    %v401 = vpop.permute.xlu0 %400
    %v402 = vsel %vm201, %v401, 0
    %404 = vmatprep.subr.mxu0 0.0
    %405 = vmatpush1.msra.mxu0 %v74
    %406 = vmatprep.subr.mxu0 0.0
    %407 = vmatpush1.msra.mxu0 %v75
    %408 = vmatprep.subr.mxu0 0.0
    %409 = vmatpush1.msra.mxu0 %v76
    %410 = vmatprep.subr.mxu0 0.0
    %411 = vmatpush1.msra.mxu0 %v77
    %412 = vmatprep.subr.mxu0 0.0
    %413 = vmatpush1.msra.mxu0 0.0
    %414 = vmatprep.subr.mxu0 0.0
    %415 = vmatpush1.msra.mxu0 0.0
    %416 = vmatprep.subr.mxu0 0.0
    %417 = vmatpush1.msra.mxu0 0.0
    %418 = vmatprep.subr.mxu0 0.0
    %419 = vmatpush1.msra.mxu0 0.0
    %420 = vmatprep.subr.mxu0 0.0
    %421 = vmatpush1.msra.mxu0 0.0
    %422 = vmatprep.subr.mxu0 0.0
    %423 = vmatpush1.msra.mxu0 0.0
    %424 = vmatprep.subr.mxu0 0.0
    %425 = vmatpush1.msra.mxu0 0.0
    %426 = vmatprep.subr.mxu0 0.0
    %427 = vmatpush1.msra.mxu0 0.0
    %428 = vmatprep.subr.mxu0 0.0
    %429 = vmatpush1.msra.mxu0 0.0
    %430 = vmatprep.subr.mxu0 0.0
    %431 = vmatpush1.msra.mxu0 0.0
    %432 = vmatprep.subr.mxu0 0.0
    %433 = vmatpush1.msra.mxu0 0.0
    %434 = vmatprep.subr.mxu0 0.0
    %435 = vmatpush1.msra.mxu0 0.0
    %436 = vmatprep.subr.mxu0 0.0
    %437 = vmatpush1.msra.mxu0 0.0
    %438 = vmatprep.subr.mxu0 0.0
    %439 = vmatpush1.msra.mxu0 0.0
    %440 = vmatprep.subr.mxu0 0.0
    %441 = vmatpush1.msra.mxu0 0.0
    %442 = vmatprep.subr.mxu0 0.0
    %443 = vmatpush1.msra.mxu0 0.0
    %444 = vmatprep.subr.mxu0 0.0
    %445 = vmatpush1.msra.mxu0 0.0
    %446 = vmatprep.subr.mxu0 0.0
    %447 = vmatpush1.msra.mxu0 0.0
    %448 = vmatprep.subr.mxu0 0.0
    %449 = vmatpush1.msra.mxu0 0.0
    %450 = vmatprep.subr.mxu0 0.0
    %451 = vmatpush1.msra.mxu0 0.0
    %452 = vmatprep.subr.mxu0 0.0
    %453 = vmatpush1.msra.mxu0 0.0
    %454 = vmatprep.subr.mxu0 0.0
    %455 = vmatpush1.msra.mxu0 0.0
    %456 = vmatprep.subr.mxu0 0.0
    %457 = vmatpush1.msra.mxu0 0.0
    %458 = vmatprep.subr.mxu0 0.0
    %459 = vmatpush1.msra.mxu0 0.0
    %460 = vmatprep.subr.mxu0 0.0
    %461 = vmatpush1.msra.mxu0 0.0
    %462 = vmatprep.subr.mxu0 0.0
    %463 = vmatpush1.msra.mxu0 0.0
    %464 = vmatprep.subr.mxu0 0.0
    %465 = vmatpush1.msra.mxu0 0.0
    %466 = vmatprep.subr.mxu0 0.0
    %467 = vmatpush1.msra.mxu0 0.0
    %468 = vmatprep.mubr.f32.mxu0 0.0
    %469 = vmatmul.mubr.f32.gmra.mrb[0].mxu0 %v402
    %v470 = vpop.f32.mrb[0].mxu0
    %v471 = vadd.f32 0.0, %v470
    %v472 = vpop.f32.mrb[0].mxu0
    %473 = vdwg.mxu0
    %v475 = vrot.slane %v471, 1
    %v476 = vrot.slane %v471, 2
    %v477 = vrot.slane %v471, 3
    %v482 = vadd.f32 %v383, %v471
    %v483 = vadd.f32 %v384, %v475
    %v484 = vadd.f32 %v385, %v476
    %v485 = vadd.f32 %v386, %v477
    %v486 = vxor.u32 %v482, 2147483648
    %v487 = vxor.u32 %v483, 2147483648
    %v488 = vxor.u32 %v484, 2147483648
    %v489 = vxor.u32 %v485, 2147483648
    %v490 = vmul.f32 %v486, 1.442695
    %v491 = vpow.pop %v490
    %v492 = vmul.f32 %v487, 1.442695
    %v493 = vpow.pop %v492
    %v494 = vmul.f32 %v488, 1.442695
    %v495 = vpow.pop %v494
    %v496 = vmul.f32 %v489, 1.442695
    %v497 = vpow.pop %v496
    %v498 = vadd.f32 %v491, 1.0
    %v499 = vadd.f32 %v493, 1.0
    %v500 = vadd.f32 %v495, 1.0
    %v501 = vadd.f32 %v497, 1.0
    %v502 = vrcp.pop %v498
    %v503 = vmul.f32 1.0, %v502
    %v504 = vrcp.pop %v499
    %v505 = vmul.f32 1.0, %v504
    %v506 = vrcp.pop %v500
    %v507 = vmul.f32 1.0, %v506
    %v508 = vrcp.pop %v501
    %v509 = vmul.f32 1.0, %v508
    %v510 = vtanh.pop %v482
    %v511 = vtanh.pop %v483
    %v512 = vtanh.pop %v484
    %v513 = vtanh.pop %v485
    %v514 = vmul.f32 %v503, %v355
    %v515 = vmul.f32 %v505, %v356
    %v516 = vmul.f32 %v507, %v357
    %v517 = vmul.f32 %v509, %v358
    %522 = vrot.lane.b32.xlu0 %v510, 64
    %v523 = vpop.permute.xlu0 %522
    %524 = vrot.lane.b32.xlu0 %v511, 64
    %v525 = vpop.permute.xlu0 %524
    %526 = vrot.lane.b32.xlu0 %v512, 64
    %v527 = vpop.permute.xlu0 %526
    %528 = vrot.lane.b32.xlu0 %v513, 64
    %v529 = vpop.permute.xlu0 %528
    %v534 = vmul.f32 %v503, %v523
    %v535 = vmul.f32 %v505, %v525
    %v536 = vmul.f32 %v507, %v527
    %v537 = vmul.f32 %v509, %v529
    %542 = vrot.lane.b32.xlu0 %v534, 32
    %v543 = vpop.permute.xlu0 %542
    %544 = vrot.lane.b32.xlu0 %v535, 32
    %v545 = vpop.permute.xlu0 %544
    %546 = vrot.lane.b32.xlu0 %v536, 32
    %v547 = vpop.permute.xlu0 %546
    %548 = vrot.lane.b32.xlu0 %v537, 32
    %v549 = vpop.permute.xlu0 %548
    %v554 = vadd.f32 %v514, %v543
    %v555 = vadd.f32 %v515, %v545
    %v556 = vadd.f32 %v516, %v547
    %v557 = vadd.f32 %v517, %v549
    %v558 = vtanh.pop %v554
    %v559 = vtanh.pop %v555
    %v560 = vtanh.pop %v556
    %v561 = vtanh.pop %v557
    %566 = vrot.lane.b32.xlu0 %v558, 64
    %v567 = vpop.permute.xlu0 %566
    %568 = vrot.lane.b32.xlu0 %v559, 64
    %v569 = vpop.permute.xlu0 %568
    %570 = vrot.lane.b32.xlu0 %v560, 64
    %v571 = vpop.permute.xlu0 %570
    %572 = vrot.lane.b32.xlu0 %v561, 64
    %v573 = vpop.permute.xlu0 %572
    %v578 = vmul.f32 %v503, %v567
    %v579 = vmul.f32 %v505, %v569
    %v580 = vmul.f32 %v507, %v571
    %v581 = vmul.f32 %v509, %v573
    %v582 = vld [vmem:[#allocation2 + $0x2] sm:$0x1]
    %v583 = vld [vmem:[#allocation2 + $0xa] sm:$0x1]
    %v584 = vld [vmem:[#allocation2 + $0x12] sm:$0x1]
    %v585 = vld [vmem:[#allocation2 + $0x1a] sm:$0x1]
    %v590 = vrot.slane %v579, 7
    %v591 = vsel %vm392, %v590, %v578
    %v592 = vrot.slane %v580, 6
    %v593 = vsel %vm395, %v592, %v591
    %v594 = vrot.slane %v581, 5
    %v595 = vsel %vm398, %v594, %v593
    %596 = vrot.lane.b32.xlu0 %v595, 32
    %v597 = vpop.permute.xlu0 %596
    %v598 = vsel %vm201, %v597, 0
    %600 = vmatprep.subr.mxu0 0.0
    %601 = vmatpush1.msra.mxu0 %v74
    %602 = vmatprep.subr.mxu0 0.0
    %603 = vmatpush1.msra.mxu0 %v75
    %604 = vmatprep.subr.mxu0 0.0
    %605 = vmatpush1.msra.mxu0 %v76
    %606 = vmatprep.subr.mxu0 0.0
    %607 = vmatpush1.msra.mxu0 %v77
    %608 = vmatprep.subr.mxu0 0.0
    %609 = vmatpush1.msra.mxu0 0.0
    %610 = vmatprep.subr.mxu0 0.0
    %611 = vmatpush1.msra.mxu0 0.0
    %612 = vmatprep.subr.mxu0 0.0
    %613 = vmatpush1.msra.mxu0 0.0
    %614 = vmatprep.subr.mxu0 0.0
    %615 = vmatpush1.msra.mxu0 0.0
    %616 = vmatprep.subr.mxu0 0.0
    %617 = vmatpush1.msra.mxu0 0.0
    %618 = vmatprep.subr.mxu0 0.0
    %619 = vmatpush1.msra.mxu0 0.0
    %620 = vmatprep.subr.mxu0 0.0
    %621 = vmatpush1.msra.mxu0 0.0
    %622 = vmatprep.subr.mxu0 0.0
    %623 = vmatpush1.msra.mxu0 0.0
    %624 = vmatprep.subr.mxu0 0.0
    %625 = vmatpush1.msra.mxu0 0.0
    %626 = vmatprep.subr.mxu0 0.0
    %627 = vmatpush1.msra.mxu0 0.0
    %628 = vmatprep.subr.mxu0 0.0
    %629 = vmatpush1.msra.mxu0 0.0
    %630 = vmatprep.subr.mxu0 0.0
    %631 = vmatpush1.msra.mxu0 0.0
    %632 = vmatprep.subr.mxu0 0.0
    %633 = vmatpush1.msra.mxu0 0.0
    %634 = vmatprep.subr.mxu0 0.0
    %635 = vmatpush1.msra.mxu0 0.0
    %636 = vmatprep.subr.mxu0 0.0
    %637 = vmatpush1.msra.mxu0 0.0
    %638 = vmatprep.subr.mxu0 0.0
    %639 = vmatpush1.msra.mxu0 0.0
    %640 = vmatprep.subr.mxu0 0.0
    %641 = vmatpush1.msra.mxu0 0.0
    %642 = vmatprep.subr.mxu0 0.0
    %643 = vmatpush1.msra.mxu0 0.0
    %644 = vmatprep.subr.mxu0 0.0
    %645 = vmatpush1.msra.mxu0 0.0
    %646 = vmatprep.subr.mxu0 0.0
    %647 = vmatpush1.msra.mxu0 0.0
    %648 = vmatprep.subr.mxu0 0.0
    %649 = vmatpush1.msra.mxu0 0.0
    %650 = vmatprep.subr.mxu0 0.0
    %651 = vmatpush1.msra.mxu0 0.0
    %652 = vmatprep.subr.mxu0 0.0
    %653 = vmatpush1.msra.mxu0 0.0
    %654 = vmatprep.subr.mxu0 0.0
    %655 = vmatpush1.msra.mxu0 0.0
    %656 = vmatprep.subr.mxu0 0.0
    %657 = vmatpush1.msra.mxu0 0.0
    %658 = vmatprep.subr.mxu0 0.0
    %659 = vmatpush1.msra.mxu0 0.0
    %660 = vmatprep.subr.mxu0 0.0
    %661 = vmatpush1.msra.mxu0 0.0
    %662 = vmatprep.subr.mxu0 0.0
    %663 = vmatpush1.msra.mxu0 0.0
    %664 = vmatprep.mubr.f32.mxu0 0.0
    %665 = vmatmul.mubr.f32.gmra.mrb[0].mxu0 %v598
    %v666 = vpop.f32.mrb[0].mxu0
    %v667 = vadd.f32 0.0, %v666
    %v668 = vpop.f32.mrb[0].mxu0
    %669 = vdwg.mxu0
    %v671 = vrot.slane %v667, 1
    %v672 = vrot.slane %v667, 2
    %v673 = vrot.slane %v667, 3
    %v678 = vadd.f32 %v582, %v667
    %v679 = vadd.f32 %v583, %v671
    %v680 = vadd.f32 %v584, %v672
    %v681 = vadd.f32 %v585, %v673
    %v682 = vxor.u32 %v678, 2147483648
    %v683 = vxor.u32 %v679, 2147483648
    %v684 = vxor.u32 %v680, 2147483648
    %v685 = vxor.u32 %v681, 2147483648
    %v686 = vmul.f32 %v682, 1.442695
    %v687 = vpow.pop %v686
    %v688 = vmul.f32 %v683, 1.442695
    %v689 = vpow.pop %v688
    %v690 = vmul.f32 %v684, 1.442695
    %v691 = vpow.pop %v690
    %v692 = vmul.f32 %v685, 1.442695
    %v693 = vpow.pop %v692
    %v694 = vadd.f32 %v687, 1.0
    %v695 = vadd.f32 %v689, 1.0
    %v696 = vadd.f32 %v691, 1.0
    %v697 = vadd.f32 %v693, 1.0
    %v698 = vrcp.pop %v694
    %v699 = vmul.f32 1.0, %v698
    %v700 = vrcp.pop %v695
    %v701 = vmul.f32 1.0, %v700
    %v702 = vrcp.pop %v696
    %v703 = vmul.f32 1.0, %v702
    %v704 = vrcp.pop %v697
    %v705 = vmul.f32 1.0, %v704
    %v706 = vtanh.pop %v678
    %v707 = vtanh.pop %v679
    %v708 = vtanh.pop %v680
    %v709 = vtanh.pop %v681
    %v710 = vmul.f32 %v699, %v554
    %v711 = vmul.f32 %v701, %v555
    %v712 = vmul.f32 %v703, %v556
    %v713 = vmul.f32 %v705, %v557
    %718 = vrot.lane.b32.xlu0 %v706, 64
    %v719 = vpop.permute.xlu0 %718
    %720 = vrot.lane.b32.xlu0 %v707, 64
    %v721 = vpop.permute.xlu0 %720
    %722 = vrot.lane.b32.xlu0 %v708, 64
    %v723 = vpop.permute.xlu0 %722
    %724 = vrot.lane.b32.xlu0 %v709, 64
    %v725 = vpop.permute.xlu0 %724
    %v730 = vmul.f32 %v699, %v719
    %v731 = vmul.f32 %v701, %v721
    %v732 = vmul.f32 %v703, %v723
    %v733 = vmul.f32 %v705, %v725
    %738 = vrot.lane.b32.xlu0 %v730, 32
    %v739 = vpop.permute.xlu0 %738
    %740 = vrot.lane.b32.xlu0 %v731, 32
    %v741 = vpop.permute.xlu0 %740
    %742 = vrot.lane.b32.xlu0 %v732, 32
    %v743 = vpop.permute.xlu0 %742
    %744 = vrot.lane.b32.xlu0 %v733, 32
    %v745 = vpop.permute.xlu0 %744
    %v750 = vadd.f32 %v710, %v739
    %v751 = vadd.f32 %v711, %v741
    %v752 = vadd.f32 %v712, %v743
    %v753 = vadd.f32 %v713, %v745
    %v754 = vtanh.pop %v750
    %v755 = vtanh.pop %v751
    %v756 = vtanh.pop %v752
    %v757 = vtanh.pop %v753
    %762 = vrot.lane.b32.xlu0 %v754, 64
    %v763 = vpop.permute.xlu0 %762
    %764 = vrot.lane.b32.xlu0 %v755, 64
    %v765 = vpop.permute.xlu0 %764
    %766 = vrot.lane.b32.xlu0 %v756, 64
    %v767 = vpop.permute.xlu0 %766
    %768 = vrot.lane.b32.xlu0 %v757, 64
    %v769 = vpop.permute.xlu0 %768
    %v774 = vmul.f32 %v699, %v763
    %v775 = vmul.f32 %v701, %v765
    %v776 = vmul.f32 %v703, %v767
    %v777 = vmul.f32 %v705, %v769
    %v778 = vld [vmem:[#allocation2 + $0x3] sm:$0x1]
    %v779 = vld [vmem:[#allocation2 + $0xb] sm:$0x1]
    %v780 = vld [vmem:[#allocation2 + $0x13] sm:$0x1]
    %v781 = vld [vmem:[#allocation2 + $0x1b] sm:$0x1]
    %v786 = vrot.slane %v775, 7
    %v787 = vsel %vm392, %v786, %v774
    %v788 = vrot.slane %v776, 6
    %v789 = vsel %vm395, %v788, %v787
    %v790 = vrot.slane %v777, 5
    %v791 = vsel %vm398, %v790, %v789
    %792 = vrot.lane.b32.xlu0 %v791, 32
    %v793 = vpop.permute.xlu0 %792
    %v794 = vsel %vm201, %v793, 0
    %796 = vmatprep.subr.mxu0 0.0
    %797 = vmatpush1.msra.mxu0 %v74
    %798 = vmatprep.subr.mxu0 0.0
    %799 = vmatpush1.msra.mxu0 %v75
    %800 = vmatprep.subr.mxu0 0.0
    %801 = vmatpush1.msra.mxu0 %v76
    %802 = vmatprep.subr.mxu0 0.0
    %803 = vmatpush1.msra.mxu0 %v77
    %804 = vmatprep.subr.mxu0 0.0
    %805 = vmatpush1.msra.mxu0 0.0
    %806 = vmatprep.subr.mxu0 0.0
    %807 = vmatpush1.msra.mxu0 0.0
    %808 = vmatprep.subr.mxu0 0.0
    %809 = vmatpush1.msra.mxu0 0.0
    %810 = vmatprep.subr.mxu0 0.0
    %811 = vmatpush1.msra.mxu0 0.0
    %812 = vmatprep.subr.mxu0 0.0
    %813 = vmatpush1.msra.mxu0 0.0
    %814 = vmatprep.subr.mxu0 0.0
    %815 = vmatpush1.msra.mxu0 0.0
    %816 = vmatprep.subr.mxu0 0.0
    %817 = vmatpush1.msra.mxu0 0.0
    %818 = vmatprep.subr.mxu0 0.0
    %819 = vmatpush1.msra.mxu0 0.0
    %820 = vmatprep.subr.mxu0 0.0
    %821 = vmatpush1.msra.mxu0 0.0
    %822 = vmatprep.subr.mxu0 0.0
    %823 = vmatpush1.msra.mxu0 0.0
    %824 = vmatprep.subr.mxu0 0.0
    %825 = vmatpush1.msra.mxu0 0.0
    %826 = vmatprep.subr.mxu0 0.0
    %827 = vmatpush1.msra.mxu0 0.0
    %828 = vmatprep.subr.mxu0 0.0
    %829 = vmatpush1.msra.mxu0 0.0
    %830 = vmatprep.subr.mxu0 0.0
    %831 = vmatpush1.msra.mxu0 0.0
    %832 = vmatprep.subr.mxu0 0.0
    %833 = vmatpush1.msra.mxu0 0.0
    %834 = vmatprep.subr.mxu0 0.0
    %835 = vmatpush1.msra.mxu0 0.0
    %836 = vmatprep.subr.mxu0 0.0
    %837 = vmatpush1.msra.mxu0 0.0
    %838 = vmatprep.subr.mxu0 0.0
    %839 = vmatpush1.msra.mxu0 0.0
    %840 = vmatprep.subr.mxu0 0.0
    %841 = vmatpush1.msra.mxu0 0.0
    %842 = vmatprep.subr.mxu0 0.0
    %843 = vmatpush1.msra.mxu0 0.0
    %844 = vmatprep.subr.mxu0 0.0
    %845 = vmatpush1.msra.mxu0 0.0
    %846 = vmatprep.subr.mxu0 0.0
    %847 = vmatpush1.msra.mxu0 0.0
    %848 = vmatprep.subr.mxu0 0.0
    %849 = vmatpush1.msra.mxu0 0.0
    %850 = vmatprep.subr.mxu0 0.0
    %851 = vmatpush1.msra.mxu0 0.0
    %852 = vmatprep.subr.mxu0 0.0
    %853 = vmatpush1.msra.mxu0 0.0
    %854 = vmatprep.subr.mxu0 0.0
    %855 = vmatpush1.msra.mxu0 0.0
    %856 = vmatprep.subr.mxu0 0.0
    %857 = vmatpush1.msra.mxu0 0.0
    %858 = vmatprep.subr.mxu0 0.0
    %859 = vmatpush1.msra.mxu0 0.0
    %860 = vmatprep.mubr.f32.mxu0 0.0
    %861 = vmatmul.mubr.f32.gmra.mrb[0].mxu0 %v794
    %v862 = vpop.f32.mrb[0].mxu0
    %v863 = vadd.f32 0.0, %v862
    %v864 = vpop.f32.mrb[0].mxu0
    %865 = vdwg.mxu0
    %v867 = vrot.slane %v863, 1
    %v868 = vrot.slane %v863, 2
    %v869 = vrot.slane %v863, 3
    %v874 = vadd.f32 %v778, %v863
    %v875 = vadd.f32 %v779, %v867
    %v876 = vadd.f32 %v780, %v868
    %v877 = vadd.f32 %v781, %v869
    %v878 = vxor.u32 %v874, 2147483648
    %v879 = vxor.u32 %v875, 2147483648
    %v880 = vxor.u32 %v876, 2147483648
    %v881 = vxor.u32 %v877, 2147483648
    %v882 = vmul.f32 %v878, 1.442695
    %v883 = vpow.pop %v882
    %v884 = vmul.f32 %v879, 1.442695
    %v885 = vpow.pop %v884
    %v886 = vmul.f32 %v880, 1.442695
    %v887 = vpow.pop %v886
    %v888 = vmul.f32 %v881, 1.442695
    %v889 = vpow.pop %v888
    %v890 = vadd.f32 %v883, 1.0
    %v891 = vadd.f32 %v885, 1.0
    %v892 = vadd.f32 %v887, 1.0
    %v893 = vadd.f32 %v889, 1.0
    %v894 = vrcp.pop %v890
    %v895 = vmul.f32 1.0, %v894
    %v896 = vrcp.pop %v891
    %v897 = vmul.f32 1.0, %v896
    %v898 = vrcp.pop %v892
    %v899 = vmul.f32 1.0, %v898
    %v900 = vrcp.pop %v893
    %v901 = vmul.f32 1.0, %v900
    %v902 = vtanh.pop %v874
    %v903 = vtanh.pop %v875
    %v904 = vtanh.pop %v876
    %v905 = vtanh.pop %v877
    %v906 = vmul.f32 %v895, %v750
    %v907 = vmul.f32 %v897, %v751
    %v908 = vmul.f32 %v899, %v752
    %v909 = vmul.f32 %v901, %v753
    %914 = vrot.lane.b32.xlu0 %v902, 64
    %v915 = vpop.permute.xlu0 %914
    %916 = vrot.lane.b32.xlu0 %v903, 64
    %v917 = vpop.permute.xlu0 %916
    %918 = vrot.lane.b32.xlu0 %v904, 64
    %v919 = vpop.permute.xlu0 %918
    %920 = vrot.lane.b32.xlu0 %v905, 64
    %v921 = vpop.permute.xlu0 %920
    %v926 = vmul.f32 %v895, %v915
    %v927 = vmul.f32 %v897, %v917
    %v928 = vmul.f32 %v899, %v919
    %v929 = vmul.f32 %v901, %v921
    %934 = vrot.lane.b32.xlu0 %v926, 32
    %v935 = vpop.permute.xlu0 %934
    %936 = vrot.lane.b32.xlu0 %v927, 32
    %v937 = vpop.permute.xlu0 %936
    %938 = vrot.lane.b32.xlu0 %v928, 32
    %v939 = vpop.permute.xlu0 %938
    %940 = vrot.lane.b32.xlu0 %v929, 32
    %v941 = vpop.permute.xlu0 %940
    %v946 = vadd.f32 %v906, %v935
    %v947 = vadd.f32 %v907, %v937
    %v948 = vadd.f32 %v908, %v939
    %v949 = vadd.f32 %v909, %v941
    %v950 = vtanh.pop %v946
    %v951 = vtanh.pop %v947
    %v952 = vtanh.pop %v948
    %v953 = vtanh.pop %v949
    %958 = vrot.lane.b32.xlu0 %v950, 64
    %v959 = vpop.permute.xlu0 %958
    %960 = vrot.lane.b32.xlu0 %v951, 64
    %v961 = vpop.permute.xlu0 %960
    %962 = vrot.lane.b32.xlu0 %v952, 64
    %v963 = vpop.permute.xlu0 %962
    %964 = vrot.lane.b32.xlu0 %v953, 64
    %v965 = vpop.permute.xlu0 %964
    %v970 = vmul.f32 %v895, %v959
    %v971 = vmul.f32 %v897, %v961
    %v972 = vmul.f32 %v899, %v963
    %v973 = vmul.f32 %v901, %v965
    %v974 = vld [vmem:[#allocation2 + $0x4] sm:$0x1]
    %v975 = vld [vmem:[#allocation2 + $0xc] sm:$0x1]
    %v976 = vld [vmem:[#allocation2 + $0x14] sm:$0x1]
    %v977 = vld [vmem:[#allocation2 + $0x1c] sm:$0x1]
    %v982 = vrot.slane %v971, 7
    %v983 = vsel %vm392, %v982, %v970
    %v984 = vrot.slane %v972, 6
    %v985 = vsel %vm395, %v984, %v983
    %v986 = vrot.slane %v973, 5
    %v987 = vsel %vm398, %v986, %v985
    %988 = vrot.lane.b32.xlu0 %v987, 32
    %v989 = vpop.permute.xlu0 %988
    %v990 = vsel %vm201, %v989, 0
    %992 = vmatprep.subr.mxu0 0.0
    %993 = vmatpush1.msra.mxu0 %v74
    %994 = vmatprep.subr.mxu0 0.0
    %995 = vmatpush1.msra.mxu0 %v75
    %996 = vmatprep.subr.mxu0 0.0
    %997 = vmatpush1.msra.mxu0 %v76
    %998 = vmatprep.subr.mxu0 0.0
    %999 = vmatpush1.msra.mxu0 %v77
    %1000 = vmatprep.subr.mxu0 0.0
    %1001 = vmatpush1.msra.mxu0 0.0
    %1002 = vmatprep.subr.mxu0 0.0
    %1003 = vmatpush1.msra.mxu0 0.0
    %1004 = vmatprep.subr.mxu0 0.0
    %1005 = vmatpush1.msra.mxu0 0.0
    %1006 = vmatprep.subr.mxu0 0.0
    %1007 = vmatpush1.msra.mxu0 0.0
    %1008 = vmatprep.subr.mxu0 0.0
    %1009 = vmatpush1.msra.mxu0 0.0
    %1010 = vmatprep.subr.mxu0 0.0
    %1011 = vmatpush1.msra.mxu0 0.0
    %1012 = vmatprep.subr.mxu0 0.0
    %1013 = vmatpush1.msra.mxu0 0.0
    %1014 = vmatprep.subr.mxu0 0.0
    %1015 = vmatpush1.msra.mxu0 0.0
    %1016 = vmatprep.subr.mxu0 0.0
    %1017 = vmatpush1.msra.mxu0 0.0
    %1018 = vmatprep.subr.mxu0 0.0
    %1019 = vmatpush1.msra.mxu0 0.0
    %1020 = vmatprep.subr.mxu0 0.0
    %1021 = vmatpush1.msra.mxu0 0.0
    %1022 = vmatprep.subr.mxu0 0.0
    %1023 = vmatpush1.msra.mxu0 0.0
    %1024 = vmatprep.subr.mxu0 0.0
    %1025 = vmatpush1.msra.mxu0 0.0
    %1026 = vmatprep.subr.mxu0 0.0
    %1027 = vmatpush1.msra.mxu0 0.0
    %1028 = vmatprep.subr.mxu0 0.0
    %1029 = vmatpush1.msra.mxu0 0.0
    %1030 = vmatprep.subr.mxu0 0.0
    %1031 = vmatpush1.msra.mxu0 0.0
    %1032 = vmatprep.subr.mxu0 0.0
    %1033 = vmatpush1.msra.mxu0 0.0
    %1034 = vmatprep.subr.mxu0 0.0
    %1035 = vmatpush1.msra.mxu0 0.0
    %1036 = vmatprep.subr.mxu0 0.0
    %1037 = vmatpush1.msra.mxu0 0.0
    %1038 = vmatprep.subr.mxu0 0.0
    %1039 = vmatpush1.msra.mxu0 0.0
    %1040 = vmatprep.subr.mxu0 0.0
    %1041 = vmatpush1.msra.mxu0 0.0
    %1042 = vmatprep.subr.mxu0 0.0
    %1043 = vmatpush1.msra.mxu0 0.0
    %1044 = vmatprep.subr.mxu0 0.0
    %1045 = vmatpush1.msra.mxu0 0.0
    %1046 = vmatprep.subr.mxu0 0.0
    %1047 = vmatpush1.msra.mxu0 0.0
    %1048 = vmatprep.subr.mxu0 0.0
    %1049 = vmatpush1.msra.mxu0 0.0
    %1050 = vmatprep.subr.mxu0 0.0
    %1051 = vmatpush1.msra.mxu0 0.0
    %1052 = vmatprep.subr.mxu0 0.0
    %1053 = vmatpush1.msra.mxu0 0.0
    %1054 = vmatprep.subr.mxu0 0.0
    %1055 = vmatpush1.msra.mxu0 0.0
    %1056 = vmatprep.mubr.f32.mxu0 0.0
    %1057 = vmatmul.mubr.f32.gmra.mrb[0].mxu0 %v990
    %v1058 = vpop.f32.mrb[0].mxu0
    %v1059 = vadd.f32 0.0, %v1058
    %v1060 = vpop.f32.mrb[0].mxu0
    %1061 = vdwg.mxu0
    %v1063 = vrot.slane %v1059, 1
    %v1064 = vrot.slane %v1059, 2
    %v1065 = vrot.slane %v1059, 3
    %v1070 = vadd.f32 %v974, %v1059
    %v1071 = vadd.f32 %v975, %v1063
    %v1072 = vadd.f32 %v976, %v1064
    %v1073 = vadd.f32 %v977, %v1065
    %v1074 = vxor.u32 %v1070, 2147483648
    %v1075 = vxor.u32 %v1071, 2147483648
    %v1076 = vxor.u32 %v1072, 2147483648
    %v1077 = vxor.u32 %v1073, 2147483648
    %v1078 = vmul.f32 %v1074, 1.442695
    %v1079 = vpow.pop %v1078
    %v1080 = vmul.f32 %v1075, 1.442695
    %v1081 = vpow.pop %v1080
    %v1082 = vmul.f32 %v1076, 1.442695
    %v1083 = vpow.pop %v1082
    %v1084 = vmul.f32 %v1077, 1.442695
    %v1085 = vpow.pop %v1084
    %v1086 = vadd.f32 %v1079, 1.0
    %v1087 = vadd.f32 %v1081, 1.0
    %v1088 = vadd.f32 %v1083, 1.0
    %v1089 = vadd.f32 %v1085, 1.0
    %v1090 = vrcp.pop %v1086
    %v1091 = vmul.f32 1.0, %v1090
    %v1092 = vrcp.pop %v1087
    %v1093 = vmul.f32 1.0, %v1092
    %v1094 = vrcp.pop %v1088
    %v1095 = vmul.f32 1.0, %v1094
    %v1096 = vrcp.pop %v1089
    %v1097 = vmul.f32 1.0, %v1096
    %v1098 = vtanh.pop %v1070
    %v1099 = vtanh.pop %v1071
    %v1100 = vtanh.pop %v1072
    %v1101 = vtanh.pop %v1073
    %v1102 = vmul.f32 %v1091, %v946
    %v1103 = vmul.f32 %v1093, %v947
    %v1104 = vmul.f32 %v1095, %v948
    %v1105 = vmul.f32 %v1097, %v949
    %1110 = vrot.lane.b32.xlu0 %v1098, 64
    %v1111 = vpop.permute.xlu0 %1110
    %1112 = vrot.lane.b32.xlu0 %v1099, 64
    %v1113 = vpop.permute.xlu0 %1112
    %1114 = vrot.lane.b32.xlu0 %v1100, 64
    %v1115 = vpop.permute.xlu0 %1114
    %1116 = vrot.lane.b32.xlu0 %v1101, 64
    %v1117 = vpop.permute.xlu0 %1116
    %v1122 = vmul.f32 %v1091, %v1111
    %v1123 = vmul.f32 %v1093, %v1113
    %v1124 = vmul.f32 %v1095, %v1115
    %v1125 = vmul.f32 %v1097, %v1117
    %1130 = vrot.lane.b32.xlu0 %v1122, 32
    %v1131 = vpop.permute.xlu0 %1130
    %1132 = vrot.lane.b32.xlu0 %v1123, 32
    %v1133 = vpop.permute.xlu0 %1132
    %1134 = vrot.lane.b32.xlu0 %v1124, 32
    %v1135 = vpop.permute.xlu0 %1134
    %1136 = vrot.lane.b32.xlu0 %v1125, 32
    %v1137 = vpop.permute.xlu0 %1136
    %v1142 = vadd.f32 %v1102, %v1131
    %v1143 = vadd.f32 %v1103, %v1133
    %v1144 = vadd.f32 %v1104, %v1135
    %v1145 = vadd.f32 %v1105, %v1137
    %v1146 = vtanh.pop %v1142
    %v1147 = vtanh.pop %v1143
    %v1148 = vtanh.pop %v1144
    %v1149 = vtanh.pop %v1145
    %1154 = vrot.lane.b32.xlu0 %v1146, 64
    %v1155 = vpop.permute.xlu0 %1154
    %1156 = vrot.lane.b32.xlu0 %v1147, 64
    %v1157 = vpop.permute.xlu0 %1156
    %1158 = vrot.lane.b32.xlu0 %v1148, 64
    %v1159 = vpop.permute.xlu0 %1158
    %1160 = vrot.lane.b32.xlu0 %v1149, 64
    %v1161 = vpop.permute.xlu0 %1160
    %v1166 = vmul.f32 %v1091, %v1155
    %v1167 = vmul.f32 %v1093, %v1157
    %v1168 = vmul.f32 %v1095, %v1159
    %v1169 = vmul.f32 %v1097, %v1161
    %v1170 = vld [vmem:[#allocation2 + $0x5] sm:$0x1]
    %v1171 = vld [vmem:[#allocation2 + $0xd] sm:$0x1]
    %v1172 = vld [vmem:[#allocation2 + $0x15] sm:$0x1]
    %v1173 = vld [vmem:[#allocation2 + $0x1d] sm:$0x1]
    %v1178 = vrot.slane %v1167, 7
    %v1179 = vsel %vm392, %v1178, %v1166
    %v1180 = vrot.slane %v1168, 6
    %v1181 = vsel %vm395, %v1180, %v1179
    %v1182 = vrot.slane %v1169, 5
    %v1183 = vsel %vm398, %v1182, %v1181
    %1184 = vrot.lane.b32.xlu0 %v1183, 32
    %v1185 = vpop.permute.xlu0 %1184
    %v1186 = vsel %vm201, %v1185, 0
    %1188 = vmatprep.subr.mxu0 0.0
    %1189 = vmatpush1.msra.mxu0 %v74
    %1190 = vmatprep.subr.mxu0 0.0
    %1191 = vmatpush1.msra.mxu0 %v75
    %1192 = vmatprep.subr.mxu0 0.0
    %1193 = vmatpush1.msra.mxu0 %v76
    %1194 = vmatprep.subr.mxu0 0.0
    %1195 = vmatpush1.msra.mxu0 %v77
    %1196 = vmatprep.subr.mxu0 0.0
    %1197 = vmatpush1.msra.mxu0 0.0
    %1198 = vmatprep.subr.mxu0 0.0
    %1199 = vmatpush1.msra.mxu0 0.0
    %1200 = vmatprep.subr.mxu0 0.0
    %1201 = vmatpush1.msra.mxu0 0.0
    %1202 = vmatprep.subr.mxu0 0.0
    %1203 = vmatpush1.msra.mxu0 0.0
    %1204 = vmatprep.subr.mxu0 0.0
    %1205 = vmatpush1.msra.mxu0 0.0
    %1206 = vmatprep.subr.mxu0 0.0
    %1207 = vmatpush1.msra.mxu0 0.0
    %1208 = vmatprep.subr.mxu0 0.0
    %1209 = vmatpush1.msra.mxu0 0.0
    %1210 = vmatprep.subr.mxu0 0.0
    %1211 = vmatpush1.msra.mxu0 0.0
    %1212 = vmatprep.subr.mxu0 0.0
    %1213 = vmatpush1.msra.mxu0 0.0
    %1214 = vmatprep.subr.mxu0 0.0
    %1215 = vmatpush1.msra.mxu0 0.0
    %1216 = vmatprep.subr.mxu0 0.0
    %1217 = vmatpush1.msra.mxu0 0.0
    %1218 = vmatprep.subr.mxu0 0.0
    %1219 = vmatpush1.msra.mxu0 0.0
    %1220 = vmatprep.subr.mxu0 0.0
    %1221 = vmatpush1.msra.mxu0 0.0
    %1222 = vmatprep.subr.mxu0 0.0
    %1223 = vmatpush1.msra.mxu0 0.0
    %1224 = vmatprep.subr.mxu0 0.0
    %1225 = vmatpush1.msra.mxu0 0.0
    %1226 = vmatprep.subr.mxu0 0.0
    %1227 = vmatpush1.msra.mxu0 0.0
    %1228 = vmatprep.subr.mxu0 0.0
    %1229 = vmatpush1.msra.mxu0 0.0
    %1230 = vmatprep.subr.mxu0 0.0
    %1231 = vmatpush1.msra.mxu0 0.0
    %1232 = vmatprep.subr.mxu0 0.0
    %1233 = vmatpush1.msra.mxu0 0.0
    %1234 = vmatprep.subr.mxu0 0.0
    %1235 = vmatpush1.msra.mxu0 0.0
    %1236 = vmatprep.subr.mxu0 0.0
    %1237 = vmatpush1.msra.mxu0 0.0
    %1238 = vmatprep.subr.mxu0 0.0
    %1239 = vmatpush1.msra.mxu0 0.0
    %1240 = vmatprep.subr.mxu0 0.0
    %1241 = vmatpush1.msra.mxu0 0.0
    %1242 = vmatprep.subr.mxu0 0.0
    %1243 = vmatpush1.msra.mxu0 0.0
    %1244 = vmatprep.subr.mxu0 0.0
    %1245 = vmatpush1.msra.mxu0 0.0
    %1246 = vmatprep.subr.mxu0 0.0
    %1247 = vmatpush1.msra.mxu0 0.0
    %1248 = vmatprep.subr.mxu0 0.0
    %1249 = vmatpush1.msra.mxu0 0.0
    %1250 = vmatprep.subr.mxu0 0.0
    %1251 = vmatpush1.msra.mxu0 0.0
    %1252 = vmatprep.mubr.f32.mxu0 0.0
    %1253 = vmatmul.mubr.f32.gmra.mrb[0].mxu0 %v1186
    %v1254 = vpop.f32.mrb[0].mxu0
    %v1255 = vadd.f32 0.0, %v1254
    %v1256 = vpop.f32.mrb[0].mxu0
    %1257 = vdwg.mxu0
    %v1259 = vrot.slane %v1255, 1
    %v1260 = vrot.slane %v1255, 2
    %v1261 = vrot.slane %v1255, 3
    %v1266 = vadd.f32 %v1170, %v1255
    %v1267 = vadd.f32 %v1171, %v1259
    %v1268 = vadd.f32 %v1172, %v1260
    %v1269 = vadd.f32 %v1173, %v1261
    %v1270 = vxor.u32 %v1266, 2147483648
    %v1271 = vxor.u32 %v1267, 2147483648
    %v1272 = vxor.u32 %v1268, 2147483648
    %v1273 = vxor.u32 %v1269, 2147483648
    %v1274 = vmul.f32 %v1270, 1.442695
    %v1275 = vpow.pop %v1274
    %v1276 = vmul.f32 %v1271, 1.442695
    %v1277 = vpow.pop %v1276
    %v1278 = vmul.f32 %v1272, 1.442695
    %v1279 = vpow.pop %v1278
    %v1280 = vmul.f32 %v1273, 1.442695
    %v1281 = vpow.pop %v1280
    %v1282 = vadd.f32 %v1275, 1.0
    %v1283 = vadd.f32 %v1277, 1.0
    %v1284 = vadd.f32 %v1279, 1.0
    %v1285 = vadd.f32 %v1281, 1.0
    %v1286 = vrcp.pop %v1282
    %v1287 = vmul.f32 1.0, %v1286
    %v1288 = vrcp.pop %v1283
    %v1289 = vmul.f32 1.0, %v1288
    %v1290 = vrcp.pop %v1284
    %v1291 = vmul.f32 1.0, %v1290
    %v1292 = vrcp.pop %v1285
    %v1293 = vmul.f32 1.0, %v1292
    %v1294 = vtanh.pop %v1266
    %v1295 = vtanh.pop %v1267
    %v1296 = vtanh.pop %v1268
    %v1297 = vtanh.pop %v1269
    %v1298 = vmul.f32 %v1287, %v1142
    %v1299 = vmul.f32 %v1289, %v1143
    %v1300 = vmul.f32 %v1291, %v1144
    %v1301 = vmul.f32 %v1293, %v1145
    %1306 = vrot.lane.b32.xlu0 %v1294, 64
    %v1307 = vpop.permute.xlu0 %1306
    %1308 = vrot.lane.b32.xlu0 %v1295, 64
    %v1309 = vpop.permute.xlu0 %1308
    %1310 = vrot.lane.b32.xlu0 %v1296, 64
    %v1311 = vpop.permute.xlu0 %1310
    %1312 = vrot.lane.b32.xlu0 %v1297, 64
    %v1313 = vpop.permute.xlu0 %1312
    %v1318 = vmul.f32 %v1287, %v1307
    %v1319 = vmul.f32 %v1289, %v1309
    %v1320 = vmul.f32 %v1291, %v1311
    %v1321 = vmul.f32 %v1293, %v1313
    %1326 = vrot.lane.b32.xlu0 %v1318, 32
    %v1327 = vpop.permute.xlu0 %1326
    %1328 = vrot.lane.b32.xlu0 %v1319, 32
    %v1329 = vpop.permute.xlu0 %1328
    %1330 = vrot.lane.b32.xlu0 %v1320, 32
    %v1331 = vpop.permute.xlu0 %1330
    %1332 = vrot.lane.b32.xlu0 %v1321, 32
    %v1333 = vpop.permute.xlu0 %1332
    %v1338 = vadd.f32 %v1298, %v1327
    %v1339 = vadd.f32 %v1299, %v1329
    %v1340 = vadd.f32 %v1300, %v1331
    %v1341 = vadd.f32 %v1301, %v1333
    %v1342 = vtanh.pop %v1338
    %v1343 = vtanh.pop %v1339
    %v1344 = vtanh.pop %v1340
    %v1345 = vtanh.pop %v1341
    %1350 = vrot.lane.b32.xlu0 %v1342, 64
    %v1351 = vpop.permute.xlu0 %1350
    %1352 = vrot.lane.b32.xlu0 %v1343, 64
    %v1353 = vpop.permute.xlu0 %1352
    %1354 = vrot.lane.b32.xlu0 %v1344, 64
    %v1355 = vpop.permute.xlu0 %1354
    %1356 = vrot.lane.b32.xlu0 %v1345, 64
    %v1357 = vpop.permute.xlu0 %1356
    %v1362 = vmul.f32 %v1287, %v1351
    %v1363 = vmul.f32 %v1289, %v1353
    %v1364 = vmul.f32 %v1291, %v1355
    %v1365 = vmul.f32 %v1293, %v1357
    %v1366 = vld [vmem:[#allocation2 + $0x6] sm:$0x1]
    %v1367 = vld [vmem:[#allocation2 + $0xe] sm:$0x1]
    %v1368 = vld [vmem:[#allocation2 + $0x16] sm:$0x1]
    %v1369 = vld [vmem:[#allocation2 + $0x1e] sm:$0x1]
    %v1374 = vrot.slane %v1363, 7
    %v1375 = vsel %vm392, %v1374, %v1362
    %v1376 = vrot.slane %v1364, 6
    %v1377 = vsel %vm395, %v1376, %v1375
    %v1378 = vrot.slane %v1365, 5
    %v1379 = vsel %vm398, %v1378, %v1377
    %1380 = vrot.lane.b32.xlu0 %v1379, 32
    %v1381 = vpop.permute.xlu0 %1380
    %v1382 = vsel %vm201, %v1381, 0
    %1384 = vmatprep.subr.mxu0 0.0
    %1385 = vmatpush1.msra.mxu0 %v74
    %1386 = vmatprep.subr.mxu0 0.0
    %1387 = vmatpush1.msra.mxu0 %v75
    %1388 = vmatprep.subr.mxu0 0.0
    %1389 = vmatpush1.msra.mxu0 %v76
    %1390 = vmatprep.subr.mxu0 0.0
    %1391 = vmatpush1.msra.mxu0 %v77
    %1392 = vmatprep.subr.mxu0 0.0
    %1393 = vmatpush1.msra.mxu0 0.0
    %1394 = vmatprep.subr.mxu0 0.0
    %1395 = vmatpush1.msra.mxu0 0.0
    %1396 = vmatprep.subr.mxu0 0.0
    %1397 = vmatpush1.msra.mxu0 0.0
    %1398 = vmatprep.subr.mxu0 0.0
    %1399 = vmatpush1.msra.mxu0 0.0
    %1400 = vmatprep.subr.mxu0 0.0
    %1401 = vmatpush1.msra.mxu0 0.0
    %1402 = vmatprep.subr.mxu0 0.0
    %1403 = vmatpush1.msra.mxu0 0.0
    %1404 = vmatprep.subr.mxu0 0.0
    %1405 = vmatpush1.msra.mxu0 0.0
    %1406 = vmatprep.subr.mxu0 0.0
    %1407 = vmatpush1.msra.mxu0 0.0
    %1408 = vmatprep.subr.mxu0 0.0
    %1409 = vmatpush1.msra.mxu0 0.0
    %1410 = vmatprep.subr.mxu0 0.0
    %1411 = vmatpush1.msra.mxu0 0.0
    %1412 = vmatprep.subr.mxu0 0.0
    %1413 = vmatpush1.msra.mxu0 0.0
    %1414 = vmatprep.subr.mxu0 0.0
    %1415 = vmatpush1.msra.mxu0 0.0
    %1416 = vmatprep.subr.mxu0 0.0
    %1417 = vmatpush1.msra.mxu0 0.0
    %1418 = vmatprep.subr.mxu0 0.0
    %1419 = vmatpush1.msra.mxu0 0.0
    %1420 = vmatprep.subr.mxu0 0.0
    %1421 = vmatpush1.msra.mxu0 0.0
    %1422 = vmatprep.subr.mxu0 0.0
    %1423 = vmatpush1.msra.mxu0 0.0
    %1424 = vmatprep.subr.mxu0 0.0
    %1425 = vmatpush1.msra.mxu0 0.0
    %1426 = vmatprep.subr.mxu0 0.0
    %1427 = vmatpush1.msra.mxu0 0.0
    %1428 = vmatprep.subr.mxu0 0.0
    %1429 = vmatpush1.msra.mxu0 0.0
    %1430 = vmatprep.subr.mxu0 0.0
    %1431 = vmatpush1.msra.mxu0 0.0
    %1432 = vmatprep.subr.mxu0 0.0
    %1433 = vmatpush1.msra.mxu0 0.0
    %1434 = vmatprep.subr.mxu0 0.0
    %1435 = vmatpush1.msra.mxu0 0.0
    %1436 = vmatprep.subr.mxu0 0.0
    %1437 = vmatpush1.msra.mxu0 0.0
    %1438 = vmatprep.subr.mxu0 0.0
    %1439 = vmatpush1.msra.mxu0 0.0
    %1440 = vmatprep.subr.mxu0 0.0
    %1441 = vmatpush1.msra.mxu0 0.0
    %1442 = vmatprep.subr.mxu0 0.0
    %1443 = vmatpush1.msra.mxu0 0.0
    %1444 = vmatprep.subr.mxu0 0.0
    %1445 = vmatpush1.msra.mxu0 0.0
    %1446 = vmatprep.subr.mxu0 0.0
    %1447 = vmatpush1.msra.mxu0 0.0
    %1448 = vmatprep.mubr.f32.mxu0 0.0
    %1449 = vmatmul.mubr.f32.gmra.mrb[0].mxu0 %v1382
    %v1450 = vpop.f32.mrb[0].mxu0
    %v1451 = vadd.f32 0.0, %v1450
    %v1452 = vpop.f32.mrb[0].mxu0
    %1453 = vdwg.mxu0
    %v1455 = vrot.slane %v1451, 1
    %v1456 = vrot.slane %v1451, 2
    %v1457 = vrot.slane %v1451, 3
    %v1462 = vadd.f32 %v1366, %v1451
    %v1463 = vadd.f32 %v1367, %v1455
    %v1464 = vadd.f32 %v1368, %v1456
    %v1465 = vadd.f32 %v1369, %v1457
    %v1466 = vxor.u32 %v1462, 2147483648
    %v1467 = vxor.u32 %v1463, 2147483648
    %v1468 = vxor.u32 %v1464, 2147483648
    %v1469 = vxor.u32 %v1465, 2147483648
    %v1470 = vmul.f32 %v1466, 1.442695
    %v1471 = vpow.pop %v1470
    %v1472 = vmul.f32 %v1467, 1.442695
    %v1473 = vpow.pop %v1472
    %v1474 = vmul.f32 %v1468, 1.442695
    %v1475 = vpow.pop %v1474
    %v1476 = vmul.f32 %v1469, 1.442695
    %v1477 = vpow.pop %v1476
    %v1478 = vadd.f32 %v1471, 1.0
    %v1479 = vadd.f32 %v1473, 1.0
    %v1480 = vadd.f32 %v1475, 1.0
    %v1481 = vadd.f32 %v1477, 1.0
    %v1482 = vrcp.pop %v1478
    %v1483 = vmul.f32 1.0, %v1482
    %v1484 = vrcp.pop %v1479
    %v1485 = vmul.f32 1.0, %v1484
    %v1486 = vrcp.pop %v1480
    %v1487 = vmul.f32 1.0, %v1486
    %v1488 = vrcp.pop %v1481
    %v1489 = vmul.f32 1.0, %v1488
    %v1490 = vtanh.pop %v1462
    %v1491 = vtanh.pop %v1463
    %v1492 = vtanh.pop %v1464
    %v1493 = vtanh.pop %v1465
    %v1494 = vmul.f32 %v1483, %v1338
    %v1495 = vmul.f32 %v1485, %v1339
    %v1496 = vmul.f32 %v1487, %v1340
    %v1497 = vmul.f32 %v1489, %v1341
    %1502 = vrot.lane.b32.xlu0 %v1490, 64
    %v1503 = vpop.permute.xlu0 %1502
    %1504 = vrot.lane.b32.xlu0 %v1491, 64
    %v1505 = vpop.permute.xlu0 %1504
    %1506 = vrot.lane.b32.xlu0 %v1492, 64
    %v1507 = vpop.permute.xlu0 %1506
    %1508 = vrot.lane.b32.xlu0 %v1493, 64
    %v1509 = vpop.permute.xlu0 %1508
    %v1514 = vmul.f32 %v1483, %v1503
    %v1515 = vmul.f32 %v1485, %v1505
    %v1516 = vmul.f32 %v1487, %v1507
    %v1517 = vmul.f32 %v1489, %v1509
    %1522 = vrot.lane.b32.xlu0 %v1514, 32
    %v1523 = vpop.permute.xlu0 %1522
    %1524 = vrot.lane.b32.xlu0 %v1515, 32
    %v1525 = vpop.permute.xlu0 %1524
    %1526 = vrot.lane.b32.xlu0 %v1516, 32
    %v1527 = vpop.permute.xlu0 %1526
    %1528 = vrot.lane.b32.xlu0 %v1517, 32
    %v1529 = vpop.permute.xlu0 %1528
    %v1534 = vadd.f32 %v1494, %v1523
    %v1535 = vadd.f32 %v1495, %v1525
    %v1536 = vadd.f32 %v1496, %v1527
    %v1537 = vadd.f32 %v1497, %v1529
    %v1538 = vtanh.pop %v1534
    %v1539 = vtanh.pop %v1535
    %v1540 = vtanh.pop %v1536
    %v1541 = vtanh.pop %v1537
    %1546 = vrot.lane.b32.xlu0 %v1538, 64
    %v1547 = vpop.permute.xlu0 %1546
    %1548 = vrot.lane.b32.xlu0 %v1539, 64
    %v1549 = vpop.permute.xlu0 %1548
    %1550 = vrot.lane.b32.xlu0 %v1540, 64
    %v1551 = vpop.permute.xlu0 %1550
    %1552 = vrot.lane.b32.xlu0 %v1541, 64
    %v1553 = vpop.permute.xlu0 %1552
    %v1558 = vmul.f32 %v1483, %v1547
    %v1559 = vmul.f32 %v1485, %v1549
    %v1560 = vmul.f32 %v1487, %v1551
    %v1561 = vmul.f32 %v1489, %v1553
    %v1562 = vld [vmem:[#allocation2 + $0x7] sm:$0x1]
    %v1563 = vld [vmem:[#allocation2 + $0xf] sm:$0x1]
    %v1564 = vld [vmem:[#allocation2 + $0x17] sm:$0x1]
    %v1565 = vld [vmem:[#allocation2 + $0x1f] sm:$0x1]
    %v1570 = vrot.slane %v1559, 7
    %v1571 = vsel %vm392, %v1570, %v1558
    %v1572 = vrot.slane %v1560, 6
    %v1573 = vsel %vm395, %v1572, %v1571
    %v1574 = vrot.slane %v1561, 5
    %v1575 = vsel %vm398, %v1574, %v1573
    %1576 = vrot.lane.b32.xlu0 %v1575, 32
    %v1577 = vpop.permute.xlu0 %1576
    %v1578 = vsel %vm201, %v1577, 0
    %1580 = vmatprep.subr.mxu0 0.0
    %1581 = vmatpush1.msra.mxu0 %v74
    %1582 = vmatprep.subr.mxu0 0.0
    %1583 = vmatpush1.msra.mxu0 %v75
    %1584 = vmatprep.subr.mxu0 0.0
    %1585 = vmatpush1.msra.mxu0 %v76
    %1586 = vmatprep.subr.mxu0 0.0
    %1587 = vmatpush1.msra.mxu0 %v77
    %1588 = vmatprep.subr.mxu0 0.0
    %1589 = vmatpush1.msra.mxu0 0.0
    %1590 = vmatprep.subr.mxu0 0.0
    %1591 = vmatpush1.msra.mxu0 0.0
    %1592 = vmatprep.subr.mxu0 0.0
    %1593 = vmatpush1.msra.mxu0 0.0
    %1594 = vmatprep.subr.mxu0 0.0
    %1595 = vmatpush1.msra.mxu0 0.0
    %1596 = vmatprep.subr.mxu0 0.0
    %1597 = vmatpush1.msra.mxu0 0.0
    %1598 = vmatprep.subr.mxu0 0.0
    %1599 = vmatpush1.msra.mxu0 0.0
    %1600 = vmatprep.subr.mxu0 0.0
    %1601 = vmatpush1.msra.mxu0 0.0
    %1602 = vmatprep.subr.mxu0 0.0
    %1603 = vmatpush1.msra.mxu0 0.0
    %1604 = vmatprep.subr.mxu0 0.0
    %1605 = vmatpush1.msra.mxu0 0.0
    %1606 = vmatprep.subr.mxu0 0.0
    %1607 = vmatpush1.msra.mxu0 0.0
    %1608 = vmatprep.subr.mxu0 0.0
    %1609 = vmatpush1.msra.mxu0 0.0
    %1610 = vmatprep.subr.mxu0 0.0
    %1611 = vmatpush1.msra.mxu0 0.0
    %1612 = vmatprep.subr.mxu0 0.0
    %1613 = vmatpush1.msra.mxu0 0.0
    %1614 = vmatprep.subr.mxu0 0.0
    %1615 = vmatpush1.msra.mxu0 0.0
    %1616 = vmatprep.subr.mxu0 0.0
    %1617 = vmatpush1.msra.mxu0 0.0
    %1618 = vmatprep.subr.mxu0 0.0
    %1619 = vmatpush1.msra.mxu0 0.0
    %1620 = vmatprep.subr.mxu0 0.0
    %1621 = vmatpush1.msra.mxu0 0.0
    %1622 = vmatprep.subr.mxu0 0.0
    %1623 = vmatpush1.msra.mxu0 0.0
    %1624 = vmatprep.subr.mxu0 0.0
    %1625 = vmatpush1.msra.mxu0 0.0
    %1626 = vmatprep.subr.mxu0 0.0
    %1627 = vmatpush1.msra.mxu0 0.0
    %1628 = vmatprep.subr.mxu0 0.0
    %1629 = vmatpush1.msra.mxu0 0.0
    %1630 = vmatprep.subr.mxu0 0.0
    %1631 = vmatpush1.msra.mxu0 0.0
    %1632 = vmatprep.subr.mxu0 0.0
    %1633 = vmatpush1.msra.mxu0 0.0
    %1634 = vmatprep.subr.mxu0 0.0
    %1635 = vmatpush1.msra.mxu0 0.0
    %1636 = vmatprep.subr.mxu0 0.0
    %1637 = vmatpush1.msra.mxu0 0.0
    %1638 = vmatprep.subr.mxu0 0.0
    %1639 = vmatpush1.msra.mxu0 0.0
    %1640 = vmatprep.subr.mxu0 0.0
    %1641 = vmatpush1.msra.mxu0 0.0
    %1642 = vmatprep.subr.mxu0 0.0
    %1643 = vmatpush1.msra.mxu0 0.0
    %1644 = vmatprep.mubr.f32.mxu0 0.0
    %1645 = vmatmul.mubr.f32.gmra.mrb[0].mxu0 %v1578
    %v1646 = vpop.f32.mrb[0].mxu0
    %v1647 = vadd.f32 0.0, %v1646
    %v1648 = vpop.f32.mrb[0].mxu0
    %1649 = vdwg.mxu0
    %v1651 = vrot.slane %v1647, 1
    %v1652 = vrot.slane %v1647, 2
    %v1653 = vrot.slane %v1647, 3
    %v1658 = vadd.f32 %v1562, %v1647
    %v1659 = vadd.f32 %v1563, %v1651
    %v1660 = vadd.f32 %v1564, %v1652
    %v1661 = vadd.f32 %v1565, %v1653
    %v1662 = vxor.u32 %v1658, 2147483648
    %v1663 = vxor.u32 %v1659, 2147483648
    %v1664 = vxor.u32 %v1660, 2147483648
    %v1665 = vxor.u32 %v1661, 2147483648
    %v1666 = vmul.f32 %v1662, 1.442695
    %v1667 = vpow.pop %v1666
    %v1668 = vmul.f32 %v1663, 1.442695
    %v1669 = vpow.pop %v1668
    %v1670 = vmul.f32 %v1664, 1.442695
    %v1671 = vpow.pop %v1670
    %v1672 = vmul.f32 %v1665, 1.442695
    %v1673 = vpow.pop %v1672
    %v1674 = vadd.f32 %v1667, 1.0
    %v1675 = vadd.f32 %v1669, 1.0
    %v1676 = vadd.f32 %v1671, 1.0
    %v1677 = vadd.f32 %v1673, 1.0
    %v1678 = vrcp.pop %v1674
    %v1679 = vmul.f32 1.0, %v1678
    %v1680 = vrcp.pop %v1675
    %v1681 = vmul.f32 1.0, %v1680
    %v1682 = vrcp.pop %v1676
    %v1683 = vmul.f32 1.0, %v1682
    %v1684 = vrcp.pop %v1677
    %v1685 = vmul.f32 1.0, %v1684
    %v1686 = vtanh.pop %v1658
    %v1687 = vtanh.pop %v1659
    %v1688 = vtanh.pop %v1660
    %v1689 = vtanh.pop %v1661
    %v1690 = vmul.f32 %v1679, %v1534
    %v1691 = vmul.f32 %v1681, %v1535
    %v1692 = vmul.f32 %v1683, %v1536
    %v1693 = vmul.f32 %v1685, %v1537
    %1698 = vrot.lane.b32.xlu0 %v1686, 64
    %v1699 = vpop.permute.xlu0 %1698
    %1700 = vrot.lane.b32.xlu0 %v1687, 64
    %v1701 = vpop.permute.xlu0 %1700
    %1702 = vrot.lane.b32.xlu0 %v1688, 64
    %v1703 = vpop.permute.xlu0 %1702
    %1704 = vrot.lane.b32.xlu0 %v1689, 64
    %v1705 = vpop.permute.xlu0 %1704
    %v1710 = vmul.f32 %v1679, %v1699
    %v1711 = vmul.f32 %v1681, %v1701
    %v1712 = vmul.f32 %v1683, %v1703
    %v1713 = vmul.f32 %v1685, %v1705
    %1718 = vrot.lane.b32.xlu0 %v1710, 32
    %v1719 = vpop.permute.xlu0 %1718
    %1720 = vrot.lane.b32.xlu0 %v1711, 32
    %v1721 = vpop.permute.xlu0 %1720
    %1722 = vrot.lane.b32.xlu0 %v1712, 32
    %v1723 = vpop.permute.xlu0 %1722
    %1724 = vrot.lane.b32.xlu0 %v1713, 32
    %v1725 = vpop.permute.xlu0 %1724
    %v1730 = vadd.f32 %v1690, %v1719
    %v1731 = vadd.f32 %v1691, %v1721
    %v1732 = vadd.f32 %v1692, %v1723
    %v1733 = vadd.f32 %v1693, %v1725
    %v1734 = vtanh.pop %v1730
    %v1735 = vtanh.pop %v1731
    %v1736 = vtanh.pop %v1732
    %v1737 = vtanh.pop %v1733
    %1742 = vrot.lane.b32.xlu0 %v1734, 64
    %v1743 = vpop.permute.xlu0 %1742
    %1744 = vrot.lane.b32.xlu0 %v1735, 64
    %v1745 = vpop.permute.xlu0 %1744
    %1746 = vrot.lane.b32.xlu0 %v1736, 64
    %v1747 = vpop.permute.xlu0 %1746
    %1748 = vrot.lane.b32.xlu0 %v1737, 64
    %v1749 = vpop.permute.xlu0 %1748
    %v1754 = vmul.f32 %v1679, %v1743
    %v1755 = vmul.f32 %v1681, %v1745
    %v1756 = vmul.f32 %v1683, %v1747
    %v1757 = vmul.f32 %v1685, %v1749
    %v1758 = vld [vmem:[#allocation9] sm:$0xff]
    %v1759 = vld [vmem:[#allocation9 + $0x8] sm:$0xff]
    %v1760 = vld [vmem:[#allocation9 + $0x10] sm:$0xff]
    %v1761 = vld [vmem:[#allocation9 + $0x18] sm:$0xff]
    %v1762 = vld [vmem:[%s6] sm:$0x1]
    %v1764 = vlaneseq
    %v1765 = vshrl.u32 %v1764, 7
    %v1766 = vsub.s32 0, %v1765
    %v1767 = vrot.slane %v1762, %v1766
    %v1773 = vrot.slane %v1755, 7
    %v1774 = vsel %vm392, %v1773, %v1754
    %v1775 = vrot.slane %v1756, 6
    %v1776 = vsel %vm395, %v1775, %v1774
    %v1777 = vrot.slane %v1757, 5
    %v1778 = vsel %vm398, %v1777, %v1776
    %1779 = vrot.lane.b32.xlu0 %v1778, 32
    %v1780 = vpop.permute.xlu0 %1779
    %v1781 = vsel %vm201, %v1780, 0
    %1783 = vmatprep.subr.mxu0 0.0
    %1784 = vmatpush1.msra.mxu0 %v1758
    %1785 = vmatprep.subr.mxu0 0.0
    %1786 = vmatpush1.msra.mxu0 %v1759
    %1787 = vmatprep.subr.mxu0 0.0
    %1788 = vmatpush1.msra.mxu0 %v1760
    %1789 = vmatprep.subr.mxu0 0.0
    %1790 = vmatpush1.msra.mxu0 %v1761
    %1791 = vmatprep.subr.mxu0 0.0
    %1792 = vmatpush1.msra.mxu0 0.0
    %1793 = vmatprep.subr.mxu0 0.0
    %1794 = vmatpush1.msra.mxu0 0.0
    %1795 = vmatprep.subr.mxu0 0.0
    %1796 = vmatpush1.msra.mxu0 0.0
    %1797 = vmatprep.subr.mxu0 0.0
    %1798 = vmatpush1.msra.mxu0 0.0
    %1799 = vmatprep.subr.mxu0 0.0
    %1800 = vmatpush1.msra.mxu0 0.0
    %1801 = vmatprep.subr.mxu0 0.0
    %1802 = vmatpush1.msra.mxu0 0.0
    %1803 = vmatprep.subr.mxu0 0.0
    %1804 = vmatpush1.msra.mxu0 0.0
    %1805 = vmatprep.subr.mxu0 0.0
    %1806 = vmatpush1.msra.mxu0 0.0
    %1807 = vmatprep.subr.mxu0 0.0
    %1808 = vmatpush1.msra.mxu0 0.0
    %1809 = vmatprep.subr.mxu0 0.0
    %1810 = vmatpush1.msra.mxu0 0.0
    %1811 = vmatprep.subr.mxu0 0.0
    %1812 = vmatpush1.msra.mxu0 0.0
    %1813 = vmatprep.subr.mxu0 0.0
    %1814 = vmatpush1.msra.mxu0 0.0
    %1815 = vmatprep.subr.mxu0 0.0
    %1816 = vmatpush1.msra.mxu0 0.0
    %1817 = vmatprep.subr.mxu0 0.0
    %1818 = vmatpush1.msra.mxu0 0.0
    %1819 = vmatprep.subr.mxu0 0.0
    %1820 = vmatpush1.msra.mxu0 0.0
    %1821 = vmatprep.subr.mxu0 0.0
    %1822 = vmatpush1.msra.mxu0 0.0
    %1823 = vmatprep.subr.mxu0 0.0
    %1824 = vmatpush1.msra.mxu0 0.0
    %1825 = vmatprep.subr.mxu0 0.0
    %1826 = vmatpush1.msra.mxu0 0.0
    %1827 = vmatprep.subr.mxu0 0.0
    %1828 = vmatpush1.msra.mxu0 0.0
    %1829 = vmatprep.subr.mxu0 0.0
    %1830 = vmatpush1.msra.mxu0 0.0
    %1831 = vmatprep.subr.mxu0 0.0
    %1832 = vmatpush1.msra.mxu0 0.0
    %1833 = vmatprep.subr.mxu0 0.0
    %1834 = vmatpush1.msra.mxu0 0.0
    %1835 = vmatprep.subr.mxu0 0.0
    %1836 = vmatpush1.msra.mxu0 0.0
    %1837 = vmatprep.subr.mxu0 0.0
    %1838 = vmatpush1.msra.mxu0 0.0
    %1839 = vmatprep.subr.mxu0 0.0
    %1840 = vmatpush1.msra.mxu0 0.0
    %1841 = vmatprep.subr.mxu0 0.0
    %1842 = vmatpush1.msra.mxu0 0.0
    %1843 = vmatprep.subr.mxu0 0.0
    %1844 = vmatpush1.msra.mxu0 0.0
    %1845 = vmatprep.subr.mxu0 0.0
    %1846 = vmatpush1.msra.mxu0 0.0
    %1847 = vmatprep.mubr.f32.mxu0 0.0
    %1848 = vmatmul.mubr.f32.gmra.mrb[0].mxu0 %v1781
    %v1849 = vpop.f32.mrb[0].mxu0
    %v1850 = vadd.f32 %v1767, %v1849
    %v1851 = vpop.f32.mrb[0].mxu0
    %1852 = vdwg.mxu0
    %1853 = vmatprep.subr.mxu0 0.0
    %1854 = vmatpush1.msra.mxu0 %v78
    %1855 = vmatprep.subr.mxu0 0.0
    %1856 = vmatpush1.msra.mxu0 %v79
    %1857 = vmatprep.subr.mxu0 0.0
    %1858 = vmatpush1.msra.mxu0 %v80
    %1859 = vmatprep.subr.mxu0 0.0
    %1860 = vmatpush1.msra.mxu0 %v81
    %1861 = vmatprep.subr.mxu0 0.0
    %1862 = vmatpush1.msra.mxu0 0.0
    %1863 = vmatprep.subr.mxu0 0.0
    %1864 = vmatpush1.msra.mxu0 0.0
    %1865 = vmatprep.subr.mxu0 0.0
    %1866 = vmatpush1.msra.mxu0 0.0
    %1867 = vmatprep.subr.mxu0 0.0
    %1868 = vmatpush1.msra.mxu0 0.0
    %1869 = vmatprep.subr.mxu0 0.0
    %1870 = vmatpush1.msra.mxu0 0.0
    %1871 = vmatprep.subr.mxu0 0.0
    %1872 = vmatpush1.msra.mxu0 0.0
    %1873 = vmatprep.subr.mxu0 0.0
    %1874 = vmatpush1.msra.mxu0 0.0
    %1875 = vmatprep.subr.mxu0 0.0
    %1876 = vmatpush1.msra.mxu0 0.0
    %1877 = vmatprep.subr.mxu0 0.0
    %1878 = vmatpush1.msra.mxu0 0.0
    %1879 = vmatprep.subr.mxu0 0.0
    %1880 = vmatpush1.msra.mxu0 0.0
    %1881 = vmatprep.subr.mxu0 0.0
    %1882 = vmatpush1.msra.mxu0 0.0
    %1883 = vmatprep.subr.mxu0 0.0
    %1884 = vmatpush1.msra.mxu0 0.0
    %1885 = vmatprep.subr.mxu0 0.0
    %1886 = vmatpush1.msra.mxu0 0.0
    %1887 = vmatprep.subr.mxu0 0.0
    %1888 = vmatpush1.msra.mxu0 0.0
    %1889 = vmatprep.subr.mxu0 0.0
    %1890 = vmatpush1.msra.mxu0 0.0
    %1891 = vmatprep.subr.mxu0 0.0
    %1892 = vmatpush1.msra.mxu0 0.0
    %1893 = vmatprep.subr.mxu0 0.0
    %1894 = vmatpush1.msra.mxu0 0.0
    %1895 = vmatprep.subr.mxu0 0.0
    %1896 = vmatpush1.msra.mxu0 0.0
    %1897 = vmatprep.subr.mxu0 0.0
    %1898 = vmatpush1.msra.mxu0 0.0
    %1899 = vmatprep.subr.mxu0 0.0
    %1900 = vmatpush1.msra.mxu0 0.0
    %1901 = vmatprep.subr.mxu0 0.0
    %1902 = vmatpush1.msra.mxu0 0.0
    %1903 = vmatprep.subr.mxu0 0.0
    %1904 = vmatpush1.msra.mxu0 0.0
    %1905 = vmatprep.subr.mxu0 0.0
    %1906 = vmatpush1.msra.mxu0 0.0
    %1907 = vmatprep.subr.mxu0 0.0
    %1908 = vmatpush1.msra.mxu0 0.0
    %1909 = vmatprep.subr.mxu0 0.0
    %1910 = vmatpush1.msra.mxu0 0.0
    %1911 = vmatprep.subr.mxu0 0.0
    %1912 = vmatpush1.msra.mxu0 0.0
    %1913 = vmatprep.subr.mxu0 0.0
    %1914 = vmatpush1.msra.mxu0 0.0
    %1915 = vmatprep.subr.mxu0 0.0
    %1916 = vmatpush1.msra.mxu0 0.0
    %1917 = vmatprep.mubr.f32.mxu0 0.0
    %1918 = vmatmul.mubr.f32.gmra.mrb[0].mxu0 %v203
    %v1919 = vpop.f32.mrb[0].mxu0
    %v1920 = vadd.f32 0.0, %v1919
    %v1921 = vpop.f32.mrb[0].mxu0
    %1922 = vdwg.mxu0
    %v1923 = vadd.f32 %v1850, %v1920
    %v1924 = vxor.u32 %v1923, 2147483648
    %v1925 = vmul.f32 %v1924, 1.442695
    %v1926 = vpow.pop %v1925
    %v1927 = vadd.f32 %v1926, 1.0
    %v1928 = vrcp.pop %v1927
    %v1929 = vmul.f32 1.0, %v1928
    %v1930 = vtanh.pop %v1923
    %v1931 = vmul.f32 %v1929, 0.0
    %1933 = vrot.lane.b32.xlu0 %v1930, 64
    %v1934 = vpop.permute.xlu0 %1933
    %v1936 = vmul.f32 %v1929, %v1934
    %1938 = vrot.lane.b32.xlu0 %v1936, 32
    %v1939 = vpop.permute.xlu0 %1938
    %v1941 = vadd.f32 %v1931, %v1939
    %v1942 = vtanh.pop %v1941
    %1944 = vrot.lane.b32.xlu0 %v1942, 64
    %v1945 = vpop.permute.xlu0 %1944
    %v1947 = vmul.f32 %v1929, %v1945
    %v1950 = vunpack.c.l.s4 1966171168
    %v1951 = vunpack.c.0.s8 %v1950
    %v1952 = vlaneseq
    %v1953 = vshrl.u32 %v1952, 7
    %v1954 = vsub.s32 %v1951, %v1953
    %v1955 = vrot.slane %v1947, %v1954
    %v1956 = vcombine.high %v1955, %v1955
    %v1958 = vunpack.c.l.s4 1966171168
    %v1959 = vunpack.c.0.s8 %v1958
    %v1960 = vlaneseq
    %v1961 = vshrl.u32 %v1960, 7
    %v1962 = vsub.s32 %v1959, %v1961
    %v1963 = vrot.slane %v1955, %v1962
    %v1965 = vunpack.c.l.s4 1966171168
    %v1966 = vunpack.c.0.s8 %v1965
    %v1967 = vlaneseq
    %v1968 = vshrl.u32 %v1967, 7
    %v1969 = vsub.s32 %v1966, %v1968
    %v1970 = vrot.slane %v1956, %v1969
    %v1971 = vcombine.high %v1963, %v1963
    %v1972 = vcombine.high %v1970, %v1970
    %v1973 = vlaneseq
    %v1974 = vshrl.u32 %v1973, 7
    %v1975 = vsub.s32 0, %v1974
    %v1976 = vrot.slane %v1963, %v1975
    %v1977 = vlaneseq
    %v1978 = vshrl.u32 %v1977, 7
    %v1979 = vsub.s32 0, %v1978
    %v1980 = vrot.slane %v1970, %v1979
    %v1981 = vlaneseq
    %v1982 = vshrl.u32 %v1981, 7
    %v1983 = vsub.s32 0, %v1982
    %v1984 = vrot.slane %v1971, %v1983
    %v1985 = vlaneseq
    %v1986 = vshrl.u32 %v1985, 7
    %v1987 = vsub.s32 0, %v1986
    %v1988 = vrot.slane %v1972, %v1987
    %1989 = vrot.lane.b32.xlu0 %v1976, 32
    %v1990 = vpop.permute.xlu0 %1989
    %1991 = vrot.lane.b32.xlu0 %v1980, 32
    %v1992 = vpop.permute.xlu0 %1991
    %1993 = vrot.lane.b32.xlu0 %v1984, 32
    %v1994 = vpop.permute.xlu0 %1993
    %1995 = vrot.lane.b32.xlu0 %v1988, 32
    %v1996 = vpop.permute.xlu0 %1995
    %vm2001 = vcmask 253952
    %2002 = vst.msk [vmem:[#allocation3] sm:$0x1] %vm2001, %v1990
    %2003 = vst.msk [vmem:[#allocation3 + $0x8] sm:$0x1] %vm2001, %v1992
    %2004 = vst.msk [vmem:[#allocation3 + $0x10] sm:$0x1] %vm2001, %v1994
    %2005 = vst.msk [vmem:[#allocation3 + $0x18] sm:$0x1] %vm2001, %v1996
    %2006 = vrot.lane.b32.xlu0 %v1947, 32
    %v2007 = vpop.permute.xlu0 %2006
    %v2008 = vsel %vm201, %v2007, 0
    %2010 = vmatprep.subr.mxu0 0.0
    %2011 = vmatpush1.msra.mxu0 %v78
    %2012 = vmatprep.subr.mxu0 0.0
    %2013 = vmatpush1.msra.mxu0 %v79
    %2014 = vmatprep.subr.mxu0 0.0
    %2015 = vmatpush1.msra.mxu0 %v80
    %2016 = vmatprep.subr.mxu0 0.0
    %2017 = vmatpush1.msra.mxu0 %v81
    %2018 = vmatprep.subr.mxu0 0.0
    %2019 = vmatpush1.msra.mxu0 0.0
    %2020 = vmatprep.subr.mxu0 0.0
    %2021 = vmatpush1.msra.mxu0 0.0
    %2022 = vmatprep.subr.mxu0 0.0
    %2023 = vmatpush1.msra.mxu0 0.0
    %2024 = vmatprep.subr.mxu0 0.0
    %2025 = vmatpush1.msra.mxu0 0.0
    %2026 = vmatprep.subr.mxu0 0.0
    %2027 = vmatpush1.msra.mxu0 0.0
    %2028 = vmatprep.subr.mxu0 0.0
    %2029 = vmatpush1.msra.mxu0 0.0
    %2030 = vmatprep.subr.mxu0 0.0
    %2031 = vmatpush1.msra.mxu0 0.0
    %2032 = vmatprep.subr.mxu0 0.0
    %2033 = vmatpush1.msra.mxu0 0.0
    %2034 = vmatprep.subr.mxu0 0.0
    %2035 = vmatpush1.msra.mxu0 0.0
    %2036 = vmatprep.subr.mxu0 0.0
    %2037 = vmatpush1.msra.mxu0 0.0
    %2038 = vmatprep.subr.mxu0 0.0
    %2039 = vmatpush1.msra.mxu0 0.0
    %2040 = vmatprep.subr.mxu0 0.0
    %2041 = vmatpush1.msra.mxu0 0.0
    %2042 = vmatprep.subr.mxu0 0.0
    %2043 = vmatpush1.msra.mxu0 0.0
    %2044 = vmatprep.subr.mxu0 0.0
    %2045 = vmatpush1.msra.mxu0 0.0
    %2046 = vmatprep.subr.mxu0 0.0
    %2047 = vmatpush1.msra.mxu0 0.0
    %2048 = vmatprep.subr.mxu0 0.0
    %2049 = vmatpush1.msra.mxu0 0.0
    %2050 = vmatprep.subr.mxu0 0.0
    %2051 = vmatpush1.msra.mxu0 0.0
    %2052 = vmatprep.subr.mxu0 0.0
    %2053 = vmatpush1.msra.mxu0 0.0
    %2054 = vmatprep.subr.mxu0 0.0
    %2055 = vmatpush1.msra.mxu0 0.0
    %2056 = vmatprep.subr.mxu0 0.0
    %2057 = vmatpush1.msra.mxu0 0.0
    %2058 = vmatprep.subr.mxu0 0.0
    %2059 = vmatpush1.msra.mxu0 0.0
    %2060 = vmatprep.subr.mxu0 0.0
    %2061 = vmatpush1.msra.mxu0 0.0
    %2062 = vmatprep.subr.mxu0 0.0
    %2063 = vmatpush1.msra.mxu0 0.0
    %2064 = vmatprep.subr.mxu0 0.0
    %2065 = vmatpush1.msra.mxu0 0.0
    %2066 = vmatprep.subr.mxu0 0.0
    %2067 = vmatpush1.msra.mxu0 0.0
    %2068 = vmatprep.subr.mxu0 0.0
    %2069 = vmatpush1.msra.mxu0 0.0
    %2070 = vmatprep.subr.mxu0 0.0
    %2071 = vmatpush1.msra.mxu0 0.0
    %2072 = vmatprep.subr.mxu0 0.0
    %2073 = vmatpush1.msra.mxu0 0.0
    %2074 = vmatprep.mubr.f32.mxu0 0.0
    %2075 = vmatmul.mubr.f32.gmra.mrb[0].mxu0 %v2008
    %v2076 = vpop.f32.mrb[0].mxu0
    %v2077 = vadd.f32 0.0, %v2076
    %v2078 = vpop.f32.mrb[0].mxu0
    %2079 = vdwg.mxu0
    %v2080 = vadd.f32 %v1850, %v2077
    %v2081 = vxor.u32 %v2080, 2147483648
    %v2082 = vmul.f32 %v2081, 1.442695
    %v2083 = vpow.pop %v2082
    %v2084 = vadd.f32 %v2083, 1.0
    %v2085 = vrcp.pop %v2084
    %v2086 = vmul.f32 1.0, %v2085
    %v2087 = vtanh.pop %v2080
    %v2088 = vmul.f32 %v2086, %v1941
    %2090 = vrot.lane.b32.xlu0 %v2087, 64
    %v2091 = vpop.permute.xlu0 %2090
    %v2093 = vmul.f32 %v2086, %v2091
    %2095 = vrot.lane.b32.xlu0 %v2093, 32
    %v2096 = vpop.permute.xlu0 %2095
    %v2098 = vadd.f32 %v2088, %v2096
    %v2099 = vtanh.pop %v2098
    %2101 = vrot.lane.b32.xlu0 %v2099, 64
    %v2102 = vpop.permute.xlu0 %2101
    %v2104 = vmul.f32 %v2086, %v2102
    %v2107 = vunpack.c.l.s4 1966171168
    %v2108 = vunpack.c.0.s8 %v2107
    %v2109 = vlaneseq
    %v2110 = vshrl.u32 %v2109, 7
    %v2111 = vsub.s32 %v2108, %v2110
    %v2112 = vrot.slane %v2104, %v2111
    %v2113 = vcombine.high %v2112, %v2112
    %v2115 = vunpack.c.l.s4 1966171168
    %v2116 = vunpack.c.0.s8 %v2115
    %v2117 = vlaneseq
    %v2118 = vshrl.u32 %v2117, 7
    %v2119 = vsub.s32 %v2116, %v2118
    %v2120 = vrot.slane %v2112, %v2119
    %v2122 = vunpack.c.l.s4 1966171168
    %v2123 = vunpack.c.0.s8 %v2122
    %v2124 = vlaneseq
    %v2125 = vshrl.u32 %v2124, 7
    %v2126 = vsub.s32 %v2123, %v2125
    %v2127 = vrot.slane %v2113, %v2126
    %v2128 = vcombine.high %v2120, %v2120
    %v2129 = vcombine.high %v2127, %v2127
    %v2130 = vlaneseq
    %v2131 = vshrl.u32 %v2130, 7
    %v2132 = vsub.s32 0, %v2131
    %v2133 = vrot.slane %v2120, %v2132
    %v2134 = vlaneseq
    %v2135 = vshrl.u32 %v2134, 7
    %v2136 = vsub.s32 0, %v2135
    %v2137 = vrot.slane %v2127, %v2136
    %v2138 = vlaneseq
    %v2139 = vshrl.u32 %v2138, 7
    %v2140 = vsub.s32 0, %v2139
    %v2141 = vrot.slane %v2128, %v2140
    %v2142 = vlaneseq
    %v2143 = vshrl.u32 %v2142, 7
    %v2144 = vsub.s32 0, %v2143
    %v2145 = vrot.slane %v2129, %v2144
    %2146 = vrot.lane.b32.xlu0 %v2133, 32
    %v2147 = vpop.permute.xlu0 %2146
    %2148 = vrot.lane.b32.xlu0 %v2137, 32
    %v2149 = vpop.permute.xlu0 %2148
    %2150 = vrot.lane.b32.xlu0 %v2141, 32
    %v2151 = vpop.permute.xlu0 %2150
    %2152 = vrot.lane.b32.xlu0 %v2145, 32
    %v2153 = vpop.permute.xlu0 %2152
    %2158 = vst.msk [vmem:[#allocation3 + $0x1] sm:$0x1] %vm2001, %v2147
    %2159 = vst.msk [vmem:[#allocation3 + $0x9] sm:$0x1] %vm2001, %v2149
    %2160 = vst.msk [vmem:[#allocation3 + $0x11] sm:$0x1] %vm2001, %v2151
    %2161 = vst.msk [vmem:[#allocation3 + $0x19] sm:$0x1] %vm2001, %v2153
    %2162 = vrot.lane.b32.xlu0 %v2104, 32
    %v2163 = vpop.permute.xlu0 %2162
    %v2164 = vsel %vm201, %v2163, 0
    %2166 = vmatprep.subr.mxu0 0.0
    %2167 = vmatpush1.msra.mxu0 %v78
    %2168 = vmatprep.subr.mxu0 0.0
    %2169 = vmatpush1.msra.mxu0 %v79
    %2170 = vmatprep.subr.mxu0 0.0
    %2171 = vmatpush1.msra.mxu0 %v80
    %2172 = vmatprep.subr.mxu0 0.0
    %2173 = vmatpush1.msra.mxu0 %v81
    %2174 = vmatprep.subr.mxu0 0.0
    %2175 = vmatpush1.msra.mxu0 0.0
    %2176 = vmatprep.subr.mxu0 0.0
    %2177 = vmatpush1.msra.mxu0 0.0
    %2178 = vmatprep.subr.mxu0 0.0
    %2179 = vmatpush1.msra.mxu0 0.0
    %2180 = vmatprep.subr.mxu0 0.0
    %2181 = vmatpush1.msra.mxu0 0.0
    %2182 = vmatprep.subr.mxu0 0.0
    %2183 = vmatpush1.msra.mxu0 0.0
    %2184 = vmatprep.subr.mxu0 0.0
    %2185 = vmatpush1.msra.mxu0 0.0
    %2186 = vmatprep.subr.mxu0 0.0
    %2187 = vmatpush1.msra.mxu0 0.0
    %2188 = vmatprep.subr.mxu0 0.0
    %2189 = vmatpush1.msra.mxu0 0.0
    %2190 = vmatprep.subr.mxu0 0.0
    %2191 = vmatpush1.msra.mxu0 0.0
    %2192 = vmatprep.subr.mxu0 0.0
    %2193 = vmatpush1.msra.mxu0 0.0
    %2194 = vmatprep.subr.mxu0 0.0
    %2195 = vmatpush1.msra.mxu0 0.0
    %2196 = vmatprep.subr.mxu0 0.0
    %2197 = vmatpush1.msra.mxu0 0.0
    %2198 = vmatprep.subr.mxu0 0.0
    %2199 = vmatpush1.msra.mxu0 0.0
    %2200 = vmatprep.subr.mxu0 0.0
    %2201 = vmatpush1.msra.mxu0 0.0
    %2202 = vmatprep.subr.mxu0 0.0
    %2203 = vmatpush1.msra.mxu0 0.0
    %2204 = vmatprep.subr.mxu0 0.0
    %2205 = vmatpush1.msra.mxu0 0.0
    %2206 = vmatprep.subr.mxu0 0.0
    %2207 = vmatpush1.msra.mxu0 0.0
    %2208 = vmatprep.subr.mxu0 0.0
    %2209 = vmatpush1.msra.mxu0 0.0
    %2210 = vmatprep.subr.mxu0 0.0
    %2211 = vmatpush1.msra.mxu0 0.0
    %2212 = vmatprep.subr.mxu0 0.0
    %2213 = vmatpush1.msra.mxu0 0.0
    %2214 = vmatprep.subr.mxu0 0.0
    %2215 = vmatpush1.msra.mxu0 0.0
    %2216 = vmatprep.subr.mxu0 0.0
    %2217 = vmatpush1.msra.mxu0 0.0
    %2218 = vmatprep.subr.mxu0 0.0
    %2219 = vmatpush1.msra.mxu0 0.0
    %2220 = vmatprep.subr.mxu0 0.0
    %2221 = vmatpush1.msra.mxu0 0.0
    %2222 = vmatprep.subr.mxu0 0.0
    %2223 = vmatpush1.msra.mxu0 0.0
    %2224 = vmatprep.subr.mxu0 0.0
    %2225 = vmatpush1.msra.mxu0 0.0
    %2226 = vmatprep.subr.mxu0 0.0
    %2227 = vmatpush1.msra.mxu0 0.0
    %2228 = vmatprep.subr.mxu0 0.0
    %2229 = vmatpush1.msra.mxu0 0.0
    %2230 = vmatprep.mubr.f32.mxu0 0.0
    %2231 = vmatmul.mubr.f32.gmra.mrb[0].mxu0 %v2164
    %v2232 = vpop.f32.mrb[0].mxu0
    %v2233 = vadd.f32 0.0, %v2232
    %v2234 = vpop.f32.mrb[0].mxu0
    %2235 = vdwg.mxu0
    %v2236 = vadd.f32 %v1850, %v2233
    %v2237 = vxor.u32 %v2236, 2147483648
    %v2238 = vmul.f32 %v2237, 1.442695
    %v2239 = vpow.pop %v2238
    %v2240 = vadd.f32 %v2239, 1.0
    %v2241 = vrcp.pop %v2240
    %v2242 = vmul.f32 1.0, %v2241
    %v2243 = vtanh.pop %v2236
    %v2244 = vmul.f32 %v2242, %v2098
    %2246 = vrot.lane.b32.xlu0 %v2243, 64
    %v2247 = vpop.permute.xlu0 %2246
    %v2249 = vmul.f32 %v2242, %v2247
    %2251 = vrot.lane.b32.xlu0 %v2249, 32
    %v2252 = vpop.permute.xlu0 %2251
    %v2254 = vadd.f32 %v2244, %v2252
    %v2255 = vtanh.pop %v2254
    %2257 = vrot.lane.b32.xlu0 %v2255, 64
    %v2258 = vpop.permute.xlu0 %2257
    %v2260 = vmul.f32 %v2242, %v2258
    %v2263 = vunpack.c.l.s4 1966171168
    %v2264 = vunpack.c.0.s8 %v2263
    %v2265 = vlaneseq
    %v2266 = vshrl.u32 %v2265, 7
    %v2267 = vsub.s32 %v2264, %v2266
    %v2268 = vrot.slane %v2260, %v2267
    %v2269 = vcombine.high %v2268, %v2268
    %v2271 = vunpack.c.l.s4 1966171168
    %v2272 = vunpack.c.0.s8 %v2271
    %v2273 = vlaneseq
    %v2274 = vshrl.u32 %v2273, 7
    %v2275 = vsub.s32 %v2272, %v2274
    %v2276 = vrot.slane %v2268, %v2275
    %v2278 = vunpack.c.l.s4 1966171168
    %v2279 = vunpack.c.0.s8 %v2278
    %v2280 = vlaneseq
    %v2281 = vshrl.u32 %v2280, 7
    %v2282 = vsub.s32 %v2279, %v2281
    %v2283 = vrot.slane %v2269, %v2282
    %v2284 = vcombine.high %v2276, %v2276
    %v2285 = vcombine.high %v2283, %v2283
    %v2286 = vlaneseq
    %v2287 = vshrl.u32 %v2286, 7
    %v2288 = vsub.s32 0, %v2287
    %v2289 = vrot.slane %v2276, %v2288
    %v2290 = vlaneseq
    %v2291 = vshrl.u32 %v2290, 7
    %v2292 = vsub.s32 0, %v2291
    %v2293 = vrot.slane %v2283, %v2292
    %v2294 = vlaneseq
    %v2295 = vshrl.u32 %v2294, 7
    %v2296 = vsub.s32 0, %v2295
    %v2297 = vrot.slane %v2284, %v2296
    %v2298 = vlaneseq
    %v2299 = vshrl.u32 %v2298, 7
    %v2300 = vsub.s32 0, %v2299
    %v2301 = vrot.slane %v2285, %v2300
    %2302 = vrot.lane.b32.xlu0 %v2289, 32
    %v2303 = vpop.permute.xlu0 %2302
    %2304 = vrot.lane.b32.xlu0 %v2293, 32
    %v2305 = vpop.permute.xlu0 %2304
    %2306 = vrot.lane.b32.xlu0 %v2297, 32
    %v2307 = vpop.permute.xlu0 %2306
    %2308 = vrot.lane.b32.xlu0 %v2301, 32
    %v2309 = vpop.permute.xlu0 %2308
    %2314 = vst.msk [vmem:[#allocation3 + $0x2] sm:$0x1] %vm2001, %v2303
    %2315 = vst.msk [vmem:[#allocation3 + $0xa] sm:$0x1] %vm2001, %v2305
    %2316 = vst.msk [vmem:[#allocation3 + $0x12] sm:$0x1] %vm2001, %v2307
    %2317 = vst.msk [vmem:[#allocation3 + $0x1a] sm:$0x1] %vm2001, %v2309
    %2318 = vrot.lane.b32.xlu0 %v2260, 32
    %v2319 = vpop.permute.xlu0 %2318
    %v2320 = vsel %vm201, %v2319, 0
    %2322 = vmatprep.subr.mxu0 0.0
    %2323 = vmatpush1.msra.mxu0 %v78
    %2324 = vmatprep.subr.mxu0 0.0
    %2325 = vmatpush1.msra.mxu0 %v79
    %2326 = vmatprep.subr.mxu0 0.0
    %2327 = vmatpush1.msra.mxu0 %v80
    %2328 = vmatprep.subr.mxu0 0.0
    %2329 = vmatpush1.msra.mxu0 %v81
    %2330 = vmatprep.subr.mxu0 0.0
    %2331 = vmatpush1.msra.mxu0 0.0
    %2332 = vmatprep.subr.mxu0 0.0
    %2333 = vmatpush1.msra.mxu0 0.0
    %2334 = vmatprep.subr.mxu0 0.0
    %2335 = vmatpush1.msra.mxu0 0.0
    %2336 = vmatprep.subr.mxu0 0.0
    %2337 = vmatpush1.msra.mxu0 0.0
    %2338 = vmatprep.subr.mxu0 0.0
    %2339 = vmatpush1.msra.mxu0 0.0
    %2340 = vmatprep.subr.mxu0 0.0
    %2341 = vmatpush1.msra.mxu0 0.0
    %2342 = vmatprep.subr.mxu0 0.0
    %2343 = vmatpush1.msra.mxu0 0.0
    %2344 = vmatprep.subr.mxu0 0.0
    %2345 = vmatpush1.msra.mxu0 0.0
    %2346 = vmatprep.subr.mxu0 0.0
    %2347 = vmatpush1.msra.mxu0 0.0
    %2348 = vmatprep.subr.mxu0 0.0
    %2349 = vmatpush1.msra.mxu0 0.0
    %2350 = vmatprep.subr.mxu0 0.0
    %2351 = vmatpush1.msra.mxu0 0.0
    %2352 = vmatprep.subr.mxu0 0.0
    %2353 = vmatpush1.msra.mxu0 0.0
    %2354 = vmatprep.subr.mxu0 0.0
    %2355 = vmatpush1.msra.mxu0 0.0
    %2356 = vmatprep.subr.mxu0 0.0
    %2357 = vmatpush1.msra.mxu0 0.0
    %2358 = vmatprep.subr.mxu0 0.0
    %2359 = vmatpush1.msra.mxu0 0.0
    %2360 = vmatprep.subr.mxu0 0.0
    %2361 = vmatpush1.msra.mxu0 0.0
    %2362 = vmatprep.subr.mxu0 0.0
    %2363 = vmatpush1.msra.mxu0 0.0
    %2364 = vmatprep.subr.mxu0 0.0
    %2365 = vmatpush1.msra.mxu0 0.0
    %2366 = vmatprep.subr.mxu0 0.0
    %2367 = vmatpush1.msra.mxu0 0.0
    %2368 = vmatprep.subr.mxu0 0.0
    %2369 = vmatpush1.msra.mxu0 0.0
    %2370 = vmatprep.subr.mxu0 0.0
    %2371 = vmatpush1.msra.mxu0 0.0
    %2372 = vmatprep.subr.mxu0 0.0
    %2373 = vmatpush1.msra.mxu0 0.0
    %2374 = vmatprep.subr.mxu0 0.0
    %2375 = vmatpush1.msra.mxu0 0.0
    %2376 = vmatprep.subr.mxu0 0.0
    %2377 = vmatpush1.msra.mxu0 0.0
    %2378 = vmatprep.subr.mxu0 0.0
    %2379 = vmatpush1.msra.mxu0 0.0
    %2380 = vmatprep.subr.mxu0 0.0
    %2381 = vmatpush1.msra.mxu0 0.0
    %2382 = vmatprep.subr.mxu0 0.0
    %2383 = vmatpush1.msra.mxu0 0.0
    %2384 = vmatprep.subr.mxu0 0.0
    %2385 = vmatpush1.msra.mxu0 0.0
    %2386 = vmatprep.mubr.f32.mxu0 0.0
    %2387 = vmatmul.mubr.f32.gmra.mrb[0].mxu0 %v2320
    %v2388 = vpop.f32.mrb[0].mxu0
    %v2389 = vadd.f32 0.0, %v2388
    %v2390 = vpop.f32.mrb[0].mxu0
    %2391 = vdwg.mxu0
    %v2392 = vadd.f32 %v1850, %v2389
    %v2393 = vxor.u32 %v2392, 2147483648
    %v2394 = vmul.f32 %v2393, 1.442695
    %v2395 = vpow.pop %v2394
    %v2396 = vadd.f32 %v2395, 1.0
    %v2397 = vrcp.pop %v2396
    %v2398 = vmul.f32 1.0, %v2397
    %v2399 = vtanh.pop %v2392
    %v2400 = vmul.f32 %v2398, %v2254
    %2402 = vrot.lane.b32.xlu0 %v2399, 64
    %v2403 = vpop.permute.xlu0 %2402
    %v2405 = vmul.f32 %v2398, %v2403
    %2407 = vrot.lane.b32.xlu0 %v2405, 32
    %v2408 = vpop.permute.xlu0 %2407
    %v2410 = vadd.f32 %v2400, %v2408
    %v2411 = vtanh.pop %v2410
    %2413 = vrot.lane.b32.xlu0 %v2411, 64
    %v2414 = vpop.permute.xlu0 %2413
    %v2416 = vmul.f32 %v2398, %v2414
    %v2419 = vunpack.c.l.s4 1966171168
    %v2420 = vunpack.c.0.s8 %v2419
    %v2421 = vlaneseq
    %v2422 = vshrl.u32 %v2421, 7
    %v2423 = vsub.s32 %v2420, %v2422
    %v2424 = vrot.slane %v2416, %v2423
    %v2425 = vcombine.high %v2424, %v2424
    %v2427 = vunpack.c.l.s4 1966171168
    %v2428 = vunpack.c.0.s8 %v2427
    %v2429 = vlaneseq
    %v2430 = vshrl.u32 %v2429, 7
    %v2431 = vsub.s32 %v2428, %v2430
    %v2432 = vrot.slane %v2424, %v2431
    %v2434 = vunpack.c.l.s4 1966171168
    %v2435 = vunpack.c.0.s8 %v2434
    %v2436 = vlaneseq
    %v2437 = vshrl.u32 %v2436, 7
    %v2438 = vsub.s32 %v2435, %v2437
    %v2439 = vrot.slane %v2425, %v2438
    %v2440 = vcombine.high %v2432, %v2432
    %v2441 = vcombine.high %v2439, %v2439
    %v2442 = vlaneseq
    %v2443 = vshrl.u32 %v2442, 7
    %v2444 = vsub.s32 0, %v2443
    %v2445 = vrot.slane %v2432, %v2444
    %v2446 = vlaneseq
    %v2447 = vshrl.u32 %v2446, 7
    %v2448 = vsub.s32 0, %v2447
    %v2449 = vrot.slane %v2439, %v2448
    %v2450 = vlaneseq
    %v2451 = vshrl.u32 %v2450, 7
    %v2452 = vsub.s32 0, %v2451
    %v2453 = vrot.slane %v2440, %v2452
    %v2454 = vlaneseq
    %v2455 = vshrl.u32 %v2454, 7
    %v2456 = vsub.s32 0, %v2455
    %v2457 = vrot.slane %v2441, %v2456
    %2458 = vrot.lane.b32.xlu0 %v2445, 32
    %v2459 = vpop.permute.xlu0 %2458
    %2460 = vrot.lane.b32.xlu0 %v2449, 32
    %v2461 = vpop.permute.xlu0 %2460
    %2462 = vrot.lane.b32.xlu0 %v2453, 32
    %v2463 = vpop.permute.xlu0 %2462
    %2464 = vrot.lane.b32.xlu0 %v2457, 32
    %v2465 = vpop.permute.xlu0 %2464
    %2470 = vst.msk [vmem:[#allocation3 + $0x3] sm:$0x1] %vm2001, %v2459
    %2471 = vst.msk [vmem:[#allocation3 + $0xb] sm:$0x1] %vm2001, %v2461
    %2472 = vst.msk [vmem:[#allocation3 + $0x13] sm:$0x1] %vm2001, %v2463
    %2473 = vst.msk [vmem:[#allocation3 + $0x1b] sm:$0x1] %vm2001, %v2465
    %2474 = vrot.lane.b32.xlu0 %v2416, 32
    %v2475 = vpop.permute.xlu0 %2474
    %v2476 = vsel %vm201, %v2475, 0
    %2478 = vmatprep.subr.mxu0 0.0
    %2479 = vmatpush1.msra.mxu0 %v78
    %2480 = vmatprep.subr.mxu0 0.0
    %2481 = vmatpush1.msra.mxu0 %v79
    %2482 = vmatprep.subr.mxu0 0.0
    %2483 = vmatpush1.msra.mxu0 %v80
    %2484 = vmatprep.subr.mxu0 0.0
    %2485 = vmatpush1.msra.mxu0 %v81
    %2486 = vmatprep.subr.mxu0 0.0
    %2487 = vmatpush1.msra.mxu0 0.0
    %2488 = vmatprep.subr.mxu0 0.0
    %2489 = vmatpush1.msra.mxu0 0.0
    %2490 = vmatprep.subr.mxu0 0.0
    %2491 = vmatpush1.msra.mxu0 0.0
    %2492 = vmatprep.subr.mxu0 0.0
    %2493 = vmatpush1.msra.mxu0 0.0
    %2494 = vmatprep.subr.mxu0 0.0
    %2495 = vmatpush1.msra.mxu0 0.0
    %2496 = vmatprep.subr.mxu0 0.0
    %2497 = vmatpush1.msra.mxu0 0.0
    %2498 = vmatprep.subr.mxu0 0.0
    %2499 = vmatpush1.msra.mxu0 0.0
    %2500 = vmatprep.subr.mxu0 0.0
    %2501 = vmatpush1.msra.mxu0 0.0
    %2502 = vmatprep.subr.mxu0 0.0
    %2503 = vmatpush1.msra.mxu0 0.0
    %2504 = vmatprep.subr.mxu0 0.0
    %2505 = vmatpush1.msra.mxu0 0.0
    %2506 = vmatprep.subr.mxu0 0.0
    %2507 = vmatpush1.msra.mxu0 0.0
    %2508 = vmatprep.subr.mxu0 0.0
    %2509 = vmatpush1.msra.mxu0 0.0
    %2510 = vmatprep.subr.mxu0 0.0
    %2511 = vmatpush1.msra.mxu0 0.0
    %2512 = vmatprep.subr.mxu0 0.0
    %2513 = vmatpush1.msra.mxu0 0.0
    %2514 = vmatprep.subr.mxu0 0.0
    %2515 = vmatpush1.msra.mxu0 0.0
    %2516 = vmatprep.subr.mxu0 0.0
    %2517 = vmatpush1.msra.mxu0 0.0
    %2518 = vmatprep.subr.mxu0 0.0
    %2519 = vmatpush1.msra.mxu0 0.0
    %2520 = vmatprep.subr.mxu0 0.0
    %2521 = vmatpush1.msra.mxu0 0.0
    %2522 = vmatprep.subr.mxu0 0.0
    %2523 = vmatpush1.msra.mxu0 0.0
    %2524 = vmatprep.subr.mxu0 0.0
    %2525 = vmatpush1.msra.mxu0 0.0
    %2526 = vmatprep.subr.mxu0 0.0
    %2527 = vmatpush1.msra.mxu0 0.0
    %2528 = vmatprep.subr.mxu0 0.0
    %2529 = vmatpush1.msra.mxu0 0.0
    %2530 = vmatprep.subr.mxu0 0.0
    %2531 = vmatpush1.msra.mxu0 0.0
    %2532 = vmatprep.subr.mxu0 0.0
    %2533 = vmatpush1.msra.mxu0 0.0
    %2534 = vmatprep.subr.mxu0 0.0
    %2535 = vmatpush1.msra.mxu0 0.0
    %2536 = vmatprep.subr.mxu0 0.0
    %2537 = vmatpush1.msra.mxu0 0.0
    %2538 = vmatprep.subr.mxu0 0.0
    %2539 = vmatpush1.msra.mxu0 0.0
    %2540 = vmatprep.subr.mxu0 0.0
    %2541 = vmatpush1.msra.mxu0 0.0
    %2542 = vmatprep.mubr.f32.mxu0 0.0
    %2543 = vmatmul.mubr.f32.gmra.mrb[0].mxu0 %v2476
    %v2544 = vpop.f32.mrb[0].mxu0
    %v2545 = vadd.f32 0.0, %v2544
    %v2546 = vpop.f32.mrb[0].mxu0
    %2547 = vdwg.mxu0
    %v2548 = vadd.f32 %v1850, %v2545
    %v2549 = vxor.u32 %v2548, 2147483648
    %v2550 = vmul.f32 %v2549, 1.442695
    %v2551 = vpow.pop %v2550
    %v2552 = vadd.f32 %v2551, 1.0
    %v2553 = vrcp.pop %v2552
    %v2554 = vmul.f32 1.0, %v2553
    %v2555 = vtanh.pop %v2548
    %v2556 = vmul.f32 %v2554, %v2410
    %2558 = vrot.lane.b32.xlu0 %v2555, 64
    %v2559 = vpop.permute.xlu0 %2558
    %v2561 = vmul.f32 %v2554, %v2559
    %2563 = vrot.lane.b32.xlu0 %v2561, 32
    %v2564 = vpop.permute.xlu0 %2563
    %v2566 = vadd.f32 %v2556, %v2564
    %v2567 = vtanh.pop %v2566
    %2569 = vrot.lane.b32.xlu0 %v2567, 64
    %v2570 = vpop.permute.xlu0 %2569
    %v2572 = vmul.f32 %v2554, %v2570
    %v2575 = vunpack.c.l.s4 1966171168
    %v2576 = vunpack.c.0.s8 %v2575
    %v2577 = vlaneseq
    %v2578 = vshrl.u32 %v2577, 7
    %v2579 = vsub.s32 %v2576, %v2578
    %v2580 = vrot.slane %v2572, %v2579
    %v2581 = vcombine.high %v2580, %v2580
    %v2583 = vunpack.c.l.s4 1966171168
    %v2584 = vunpack.c.0.s8 %v2583
    %v2585 = vlaneseq
    %v2586 = vshrl.u32 %v2585, 7
    %v2587 = vsub.s32 %v2584, %v2586
    %v2588 = vrot.slane %v2580, %v2587
    %v2590 = vunpack.c.l.s4 1966171168
    %v2591 = vunpack.c.0.s8 %v2590
    %v2592 = vlaneseq
    %v2593 = vshrl.u32 %v2592, 7
    %v2594 = vsub.s32 %v2591, %v2593
    %v2595 = vrot.slane %v2581, %v2594
    %v2596 = vcombine.high %v2588, %v2588
    %v2597 = vcombine.high %v2595, %v2595
    %v2598 = vlaneseq
    %v2599 = vshrl.u32 %v2598, 7
    %v2600 = vsub.s32 0, %v2599
    %v2601 = vrot.slane %v2588, %v2600
    %v2602 = vlaneseq
    %v2603 = vshrl.u32 %v2602, 7
    %v2604 = vsub.s32 0, %v2603
    %v2605 = vrot.slane %v2595, %v2604
    %v2606 = vlaneseq
    %v2607 = vshrl.u32 %v2606, 7
    %v2608 = vsub.s32 0, %v2607
    %v2609 = vrot.slane %v2596, %v2608
    %v2610 = vlaneseq
    %v2611 = vshrl.u32 %v2610, 7
    %v2612 = vsub.s32 0, %v2611
    %v2613 = vrot.slane %v2597, %v2612
    %2614 = vrot.lane.b32.xlu0 %v2601, 32
    %v2615 = vpop.permute.xlu0 %2614
    %2616 = vrot.lane.b32.xlu0 %v2605, 32
    %v2617 = vpop.permute.xlu0 %2616
    %2618 = vrot.lane.b32.xlu0 %v2609, 32
    %v2619 = vpop.permute.xlu0 %2618
    %2620 = vrot.lane.b32.xlu0 %v2613, 32
    %v2621 = vpop.permute.xlu0 %2620
    %2626 = vst.msk [vmem:[#allocation3 + $0x4] sm:$0x1] %vm2001, %v2615
    %2627 = vst.msk [vmem:[#allocation3 + $0xc] sm:$0x1] %vm2001, %v2617
    %2628 = vst.msk [vmem:[#allocation3 + $0x14] sm:$0x1] %vm2001, %v2619
    %2629 = vst.msk [vmem:[#allocation3 + $0x1c] sm:$0x1] %vm2001, %v2621
    %2630 = vrot.lane.b32.xlu0 %v2572, 32
    %v2631 = vpop.permute.xlu0 %2630
    %v2632 = vsel %vm201, %v2631, 0
    %2634 = vmatprep.subr.mxu0 0.0
    %2635 = vmatpush1.msra.mxu0 %v78
    %2636 = vmatprep.subr.mxu0 0.0
    %2637 = vmatpush1.msra.mxu0 %v79
    %2638 = vmatprep.subr.mxu0 0.0
    %2639 = vmatpush1.msra.mxu0 %v80
    %2640 = vmatprep.subr.mxu0 0.0
    %2641 = vmatpush1.msra.mxu0 %v81
    %2642 = vmatprep.subr.mxu0 0.0
    %2643 = vmatpush1.msra.mxu0 0.0
    %2644 = vmatprep.subr.mxu0 0.0
    %2645 = vmatpush1.msra.mxu0 0.0
    %2646 = vmatprep.subr.mxu0 0.0
    %2647 = vmatpush1.msra.mxu0 0.0
    %2648 = vmatprep.subr.mxu0 0.0
    %2649 = vmatpush1.msra.mxu0 0.0
    %2650 = vmatprep.subr.mxu0 0.0
    %2651 = vmatpush1.msra.mxu0 0.0
    %2652 = vmatprep.subr.mxu0 0.0
    %2653 = vmatpush1.msra.mxu0 0.0
    %2654 = vmatprep.subr.mxu0 0.0
    %2655 = vmatpush1.msra.mxu0 0.0
    %2656 = vmatprep.subr.mxu0 0.0
    %2657 = vmatpush1.msra.mxu0 0.0
    %2658 = vmatprep.subr.mxu0 0.0
    %2659 = vmatpush1.msra.mxu0 0.0
    %2660 = vmatprep.subr.mxu0 0.0
    %2661 = vmatpush1.msra.mxu0 0.0
    %2662 = vmatprep.subr.mxu0 0.0
    %2663 = vmatpush1.msra.mxu0 0.0
    %2664 = vmatprep.subr.mxu0 0.0
    %2665 = vmatpush1.msra.mxu0 0.0
    %2666 = vmatprep.subr.mxu0 0.0
    %2667 = vmatpush1.msra.mxu0 0.0
    %2668 = vmatprep.subr.mxu0 0.0
    %2669 = vmatpush1.msra.mxu0 0.0
    %2670 = vmatprep.subr.mxu0 0.0
    %2671 = vmatpush1.msra.mxu0 0.0
    %2672 = vmatprep.subr.mxu0 0.0
    %2673 = vmatpush1.msra.mxu0 0.0
    %2674 = vmatprep.subr.mxu0 0.0
    %2675 = vmatpush1.msra.mxu0 0.0
    %2676 = vmatprep.subr.mxu0 0.0
    %2677 = vmatpush1.msra.mxu0 0.0
    %2678 = vmatprep.subr.mxu0 0.0
    %2679 = vmatpush1.msra.mxu0 0.0
    %2680 = vmatprep.subr.mxu0 0.0
    %2681 = vmatpush1.msra.mxu0 0.0
    %2682 = vmatprep.subr.mxu0 0.0
    %2683 = vmatpush1.msra.mxu0 0.0
    %2684 = vmatprep.subr.mxu0 0.0
    %2685 = vmatpush1.msra.mxu0 0.0
    %2686 = vmatprep.subr.mxu0 0.0
    %2687 = vmatpush1.msra.mxu0 0.0
    %2688 = vmatprep.subr.mxu0 0.0
    %2689 = vmatpush1.msra.mxu0 0.0
    %2690 = vmatprep.subr.mxu0 0.0
    %2691 = vmatpush1.msra.mxu0 0.0
    %2692 = vmatprep.subr.mxu0 0.0
    %2693 = vmatpush1.msra.mxu0 0.0
    %2694 = vmatprep.subr.mxu0 0.0
    %2695 = vmatpush1.msra.mxu0 0.0
    %2696 = vmatprep.subr.mxu0 0.0
    %2697 = vmatpush1.msra.mxu0 0.0
    %2698 = vmatprep.mubr.f32.mxu0 0.0
    %2699 = vmatmul.mubr.f32.gmra.mrb[0].mxu0 %v2632
    %v2700 = vpop.f32.mrb[0].mxu0
    %v2701 = vadd.f32 0.0, %v2700
    %v2702 = vpop.f32.mrb[0].mxu0
    %2703 = vdwg.mxu0
    %v2704 = vadd.f32 %v1850, %v2701
    %v2705 = vxor.u32 %v2704, 2147483648
    %v2706 = vmul.f32 %v2705, 1.442695
    %v2707 = vpow.pop %v2706
    %v2708 = vadd.f32 %v2707, 1.0
    %v2709 = vrcp.pop %v2708
    %v2710 = vmul.f32 1.0, %v2709
    %v2711 = vtanh.pop %v2704
    %v2712 = vmul.f32 %v2710, %v2566
    %2714 = vrot.lane.b32.xlu0 %v2711, 64
    %v2715 = vpop.permute.xlu0 %2714
    %v2717 = vmul.f32 %v2710, %v2715
    %2719 = vrot.lane.b32.xlu0 %v2717, 32
    %v2720 = vpop.permute.xlu0 %2719
    %v2722 = vadd.f32 %v2712, %v2720
    %v2723 = vtanh.pop %v2722
    %2725 = vrot.lane.b32.xlu0 %v2723, 64
    %v2726 = vpop.permute.xlu0 %2725
    %v2728 = vmul.f32 %v2710, %v2726
    %v2731 = vunpack.c.l.s4 1966171168
    %v2732 = vunpack.c.0.s8 %v2731
    %v2733 = vlaneseq
    %v2734 = vshrl.u32 %v2733, 7
    %v2735 = vsub.s32 %v2732, %v2734
    %v2736 = vrot.slane %v2728, %v2735
    %v2737 = vcombine.high %v2736, %v2736
    %v2739 = vunpack.c.l.s4 1966171168
    %v2740 = vunpack.c.0.s8 %v2739
    %v2741 = vlaneseq
    %v2742 = vshrl.u32 %v2741, 7
    %v2743 = vsub.s32 %v2740, %v2742
    %v2744 = vrot.slane %v2736, %v2743
    %v2746 = vunpack.c.l.s4 1966171168
    %v2747 = vunpack.c.0.s8 %v2746
    %v2748 = vlaneseq
    %v2749 = vshrl.u32 %v2748, 7
    %v2750 = vsub.s32 %v2747, %v2749
    %v2751 = vrot.slane %v2737, %v2750
    %v2752 = vcombine.high %v2744, %v2744
    %v2753 = vcombine.high %v2751, %v2751
    %v2754 = vlaneseq
    %v2755 = vshrl.u32 %v2754, 7
    %v2756 = vsub.s32 0, %v2755
    %v2757 = vrot.slane %v2744, %v2756
    %v2758 = vlaneseq
    %v2759 = vshrl.u32 %v2758, 7
    %v2760 = vsub.s32 0, %v2759
    %v2761 = vrot.slane %v2751, %v2760
    %v2762 = vlaneseq
    %v2763 = vshrl.u32 %v2762, 7
    %v2764 = vsub.s32 0, %v2763
    %v2765 = vrot.slane %v2752, %v2764
    %v2766 = vlaneseq
    %v2767 = vshrl.u32 %v2766, 7
    %v2768 = vsub.s32 0, %v2767
    %v2769 = vrot.slane %v2753, %v2768
    %2770 = vrot.lane.b32.xlu0 %v2757, 32
    %v2771 = vpop.permute.xlu0 %2770
    %2772 = vrot.lane.b32.xlu0 %v2761, 32
    %v2773 = vpop.permute.xlu0 %2772
    %2774 = vrot.lane.b32.xlu0 %v2765, 32
    %v2775 = vpop.permute.xlu0 %2774
    %2776 = vrot.lane.b32.xlu0 %v2769, 32
    %v2777 = vpop.permute.xlu0 %2776
    %2782 = vst.msk [vmem:[#allocation3 + $0x5] sm:$0x1] %vm2001, %v2771
    %2783 = vst.msk [vmem:[#allocation3 + $0xd] sm:$0x1] %vm2001, %v2773
    %2784 = vst.msk [vmem:[#allocation3 + $0x15] sm:$0x1] %vm2001, %v2775
    %2785 = vst.msk [vmem:[#allocation3 + $0x1d] sm:$0x1] %vm2001, %v2777
    %2786 = vrot.lane.b32.xlu0 %v2728, 32
    %v2787 = vpop.permute.xlu0 %2786
    %v2788 = vsel %vm201, %v2787, 0
    %2790 = vmatprep.subr.mxu0 0.0
    %2791 = vmatpush1.msra.mxu0 %v78
    %2792 = vmatprep.subr.mxu0 0.0
    %2793 = vmatpush1.msra.mxu0 %v79
    %2794 = vmatprep.subr.mxu0 0.0
    %2795 = vmatpush1.msra.mxu0 %v80
    %2796 = vmatprep.subr.mxu0 0.0
    %2797 = vmatpush1.msra.mxu0 %v81
    %2798 = vmatprep.subr.mxu0 0.0
    %2799 = vmatpush1.msra.mxu0 0.0
    %2800 = vmatprep.subr.mxu0 0.0
    %2801 = vmatpush1.msra.mxu0 0.0
    %2802 = vmatprep.subr.mxu0 0.0
    %2803 = vmatpush1.msra.mxu0 0.0
    %2804 = vmatprep.subr.mxu0 0.0
    %2805 = vmatpush1.msra.mxu0 0.0
    %2806 = vmatprep.subr.mxu0 0.0
    %2807 = vmatpush1.msra.mxu0 0.0
    %2808 = vmatprep.subr.mxu0 0.0
    %2809 = vmatpush1.msra.mxu0 0.0
    %2810 = vmatprep.subr.mxu0 0.0
    %2811 = vmatpush1.msra.mxu0 0.0
    %2812 = vmatprep.subr.mxu0 0.0
    %2813 = vmatpush1.msra.mxu0 0.0
    %2814 = vmatprep.subr.mxu0 0.0
    %2815 = vmatpush1.msra.mxu0 0.0
    %2816 = vmatprep.subr.mxu0 0.0
    %2817 = vmatpush1.msra.mxu0 0.0
    %2818 = vmatprep.subr.mxu0 0.0
    %2819 = vmatpush1.msra.mxu0 0.0
    %2820 = vmatprep.subr.mxu0 0.0
    %2821 = vmatpush1.msra.mxu0 0.0
    %2822 = vmatprep.subr.mxu0 0.0
    %2823 = vmatpush1.msra.mxu0 0.0
    %2824 = vmatprep.subr.mxu0 0.0
    %2825 = vmatpush1.msra.mxu0 0.0
    %2826 = vmatprep.subr.mxu0 0.0
    %2827 = vmatpush1.msra.mxu0 0.0
    %2828 = vmatprep.subr.mxu0 0.0
    %2829 = vmatpush1.msra.mxu0 0.0
    %2830 = vmatprep.subr.mxu0 0.0
    %2831 = vmatpush1.msra.mxu0 0.0
    %2832 = vmatprep.subr.mxu0 0.0
    %2833 = vmatpush1.msra.mxu0 0.0
    %2834 = vmatprep.subr.mxu0 0.0
    %2835 = vmatpush1.msra.mxu0 0.0
    %2836 = vmatprep.subr.mxu0 0.0
    %2837 = vmatpush1.msra.mxu0 0.0
    %2838 = vmatprep.subr.mxu0 0.0
    %2839 = vmatpush1.msra.mxu0 0.0
    %2840 = vmatprep.subr.mxu0 0.0
    %2841 = vmatpush1.msra.mxu0 0.0
    %2842 = vmatprep.subr.mxu0 0.0
    %2843 = vmatpush1.msra.mxu0 0.0
    %2844 = vmatprep.subr.mxu0 0.0
    %2845 = vmatpush1.msra.mxu0 0.0
    %2846 = vmatprep.subr.mxu0 0.0
    %2847 = vmatpush1.msra.mxu0 0.0
    %2848 = vmatprep.subr.mxu0 0.0
    %2849 = vmatpush1.msra.mxu0 0.0
    %2850 = vmatprep.subr.mxu0 0.0
    %2851 = vmatpush1.msra.mxu0 0.0
    %2852 = vmatprep.subr.mxu0 0.0
    %2853 = vmatpush1.msra.mxu0 0.0
    %2854 = vmatprep.mubr.f32.mxu0 0.0
    %2855 = vmatmul.mubr.f32.gmra.mrb[0].mxu0 %v2788
    %v2856 = vpop.f32.mrb[0].mxu0
    %v2857 = vadd.f32 0.0, %v2856
    %v2858 = vpop.f32.mrb[0].mxu0
    %2859 = vdwg.mxu0
    %v2860 = vadd.f32 %v1850, %v2857
    %v2861 = vxor.u32 %v2860, 2147483648
    %v2862 = vmul.f32 %v2861, 1.442695
    %v2863 = vpow.pop %v2862
    %v2864 = vadd.f32 %v2863, 1.0
    %v2865 = vrcp.pop %v2864
    %v2866 = vmul.f32 1.0, %v2865
    %v2867 = vtanh.pop %v2860
    %v2868 = vmul.f32 %v2866, %v2722
    %2870 = vrot.lane.b32.xlu0 %v2867, 64
    %v2871 = vpop.permute.xlu0 %2870
    %v2873 = vmul.f32 %v2866, %v2871
    %2875 = vrot.lane.b32.xlu0 %v2873, 32
    %v2876 = vpop.permute.xlu0 %2875
    %v2878 = vadd.f32 %v2868, %v2876
    %v2879 = vtanh.pop %v2878
    %2881 = vrot.lane.b32.xlu0 %v2879, 64
    %v2882 = vpop.permute.xlu0 %2881
    %v2884 = vmul.f32 %v2866, %v2882
    %v2887 = vunpack.c.l.s4 1966171168
    %v2888 = vunpack.c.0.s8 %v2887
    %v2889 = vlaneseq
    %v2890 = vshrl.u32 %v2889, 7
    %v2891 = vsub.s32 %v2888, %v2890
    %v2892 = vrot.slane %v2884, %v2891
    %v2893 = vcombine.high %v2892, %v2892
    %v2895 = vunpack.c.l.s4 1966171168
    %v2896 = vunpack.c.0.s8 %v2895
    %v2897 = vlaneseq
    %v2898 = vshrl.u32 %v2897, 7
    %v2899 = vsub.s32 %v2896, %v2898
    %v2900 = vrot.slane %v2892, %v2899
    %v2902 = vunpack.c.l.s4 1966171168
    %v2903 = vunpack.c.0.s8 %v2902
    %v2904 = vlaneseq
    %v2905 = vshrl.u32 %v2904, 7
    %v2906 = vsub.s32 %v2903, %v2905
    %v2907 = vrot.slane %v2893, %v2906
    %v2908 = vcombine.high %v2900, %v2900
    %v2909 = vcombine.high %v2907, %v2907
    %v2910 = vlaneseq
    %v2911 = vshrl.u32 %v2910, 7
    %v2912 = vsub.s32 0, %v2911
    %v2913 = vrot.slane %v2900, %v2912
    %v2914 = vlaneseq
    %v2915 = vshrl.u32 %v2914, 7
    %v2916 = vsub.s32 0, %v2915
    %v2917 = vrot.slane %v2907, %v2916
    %v2918 = vlaneseq
    %v2919 = vshrl.u32 %v2918, 7
    %v2920 = vsub.s32 0, %v2919
    %v2921 = vrot.slane %v2908, %v2920
    %v2922 = vlaneseq
    %v2923 = vshrl.u32 %v2922, 7
    %v2924 = vsub.s32 0, %v2923
    %v2925 = vrot.slane %v2909, %v2924
    %2926 = vrot.lane.b32.xlu0 %v2913, 32
    %v2927 = vpop.permute.xlu0 %2926
    %2928 = vrot.lane.b32.xlu0 %v2917, 32
    %v2929 = vpop.permute.xlu0 %2928
    %2930 = vrot.lane.b32.xlu0 %v2921, 32
    %v2931 = vpop.permute.xlu0 %2930
    %2932 = vrot.lane.b32.xlu0 %v2925, 32
    %v2933 = vpop.permute.xlu0 %2932
    %2938 = vst.msk [vmem:[#allocation3 + $0x6] sm:$0x1] %vm2001, %v2927
    %2939 = vst.msk [vmem:[#allocation3 + $0xe] sm:$0x1] %vm2001, %v2929
    %2940 = vst.msk [vmem:[#allocation3 + $0x16] sm:$0x1] %vm2001, %v2931
    %2941 = vst.msk [vmem:[#allocation3 + $0x1e] sm:$0x1] %vm2001, %v2933
    %2942 = vrot.lane.b32.xlu0 %v2884, 32
    %v2943 = vpop.permute.xlu0 %2942
    %v2944 = vsel %vm201, %v2943, 0
    %2946 = vmatprep.subr.mxu0 0.0
    %2947 = vmatpush1.msra.mxu0 %v78
    %2948 = vmatprep.subr.mxu0 0.0
    %2949 = vmatpush1.msra.mxu0 %v79
    %2950 = vmatprep.subr.mxu0 0.0
    %2951 = vmatpush1.msra.mxu0 %v80
    %2952 = vmatprep.subr.mxu0 0.0
    %2953 = vmatpush1.msra.mxu0 %v81
    %2954 = vmatprep.subr.mxu0 0.0
    %2955 = vmatpush1.msra.mxu0 0.0
    %2956 = vmatprep.subr.mxu0 0.0
    %2957 = vmatpush1.msra.mxu0 0.0
    %2958 = vmatprep.subr.mxu0 0.0
    %2959 = vmatpush1.msra.mxu0 0.0
    %2960 = vmatprep.subr.mxu0 0.0
    %2961 = vmatpush1.msra.mxu0 0.0
    %2962 = vmatprep.subr.mxu0 0.0
    %2963 = vmatpush1.msra.mxu0 0.0
    %2964 = vmatprep.subr.mxu0 0.0
    %2965 = vmatpush1.msra.mxu0 0.0
    %2966 = vmatprep.subr.mxu0 0.0
    %2967 = vmatpush1.msra.mxu0 0.0
    %2968 = vmatprep.subr.mxu0 0.0
    %2969 = vmatpush1.msra.mxu0 0.0
    %2970 = vmatprep.subr.mxu0 0.0
    %2971 = vmatpush1.msra.mxu0 0.0
    %2972 = vmatprep.subr.mxu0 0.0
    %2973 = vmatpush1.msra.mxu0 0.0
    %2974 = vmatprep.subr.mxu0 0.0
    %2975 = vmatpush1.msra.mxu0 0.0
    %2976 = vmatprep.subr.mxu0 0.0
    %2977 = vmatpush1.msra.mxu0 0.0
    %2978 = vmatprep.subr.mxu0 0.0
    %2979 = vmatpush1.msra.mxu0 0.0
    %2980 = vmatprep.subr.mxu0 0.0
    %2981 = vmatpush1.msra.mxu0 0.0
    %2982 = vmatprep.subr.mxu0 0.0
    %2983 = vmatpush1.msra.mxu0 0.0
    %2984 = vmatprep.subr.mxu0 0.0
    %2985 = vmatpush1.msra.mxu0 0.0
    %2986 = vmatprep.subr.mxu0 0.0
    %2987 = vmatpush1.msra.mxu0 0.0
    %2988 = vmatprep.subr.mxu0 0.0
    %2989 = vmatpush1.msra.mxu0 0.0
    %2990 = vmatprep.subr.mxu0 0.0
    %2991 = vmatpush1.msra.mxu0 0.0
    %2992 = vmatprep.subr.mxu0 0.0
    %2993 = vmatpush1.msra.mxu0 0.0
    %2994 = vmatprep.subr.mxu0 0.0
    %2995 = vmatpush1.msra.mxu0 0.0
    %2996 = vmatprep.subr.mxu0 0.0
    %2997 = vmatpush1.msra.mxu0 0.0
    %2998 = vmatprep.subr.mxu0 0.0
    %2999 = vmatpush1.msra.mxu0 0.0
    %3000 = vmatprep.subr.mxu0 0.0
    %3001 = vmatpush1.msra.mxu0 0.0
    %3002 = vmatprep.subr.mxu0 0.0
    %3003 = vmatpush1.msra.mxu0 0.0
    %3004 = vmatprep.subr.mxu0 0.0
    %3005 = vmatpush1.msra.mxu0 0.0
    %3006 = vmatprep.subr.mxu0 0.0
    %3007 = vmatpush1.msra.mxu0 0.0
    %3008 = vmatprep.subr.mxu0 0.0
    %3009 = vmatpush1.msra.mxu0 0.0
    %3010 = vmatprep.mubr.f32.mxu0 0.0
    %3011 = vmatmul.mubr.f32.gmra.mrb[0].mxu0 %v2944
    %v3012 = vpop.f32.mrb[0].mxu0
    %v3013 = vadd.f32 0.0, %v3012
    %v3014 = vpop.f32.mrb[0].mxu0
    %3015 = vdwg.mxu0
    %v3016 = vadd.f32 %v1850, %v3013
    %v3017 = vxor.u32 %v3016, 2147483648
    %v3018 = vmul.f32 %v3017, 1.442695
    %v3019 = vpow.pop %v3018
    %v3020 = vadd.f32 %v3019, 1.0
    %v3021 = vrcp.pop %v3020
    %v3022 = vmul.f32 1.0, %v3021
    %v3023 = vtanh.pop %v3016
    %v3024 = vmul.f32 %v3022, %v2878
    %3026 = vrot.lane.b32.xlu0 %v3023, 64
    %v3027 = vpop.permute.xlu0 %3026
    %v3029 = vmul.f32 %v3022, %v3027
    %3031 = vrot.lane.b32.xlu0 %v3029, 32
    %v3032 = vpop.permute.xlu0 %3031
    %v3034 = vadd.f32 %v3024, %v3032
    %v3035 = vtanh.pop %v3034
    %3037 = vrot.lane.b32.xlu0 %v3035, 64
    %v3038 = vpop.permute.xlu0 %3037
    %v3040 = vmul.f32 %v3022, %v3038
    %v3043 = vunpack.c.l.s4 1966171168
    %v3044 = vunpack.c.0.s8 %v3043
    %v3045 = vlaneseq
    %v3046 = vshrl.u32 %v3045, 7
    %v3047 = vsub.s32 %v3044, %v3046
    %v3048 = vrot.slane %v3040, %v3047
    %v3049 = vcombine.high %v3048, %v3048
    %v3051 = vunpack.c.l.s4 1966171168
    %v3052 = vunpack.c.0.s8 %v3051
    %v3053 = vlaneseq
    %v3054 = vshrl.u32 %v3053, 7
    %v3055 = vsub.s32 %v3052, %v3054
    %v3056 = vrot.slane %v3048, %v3055
    %v3058 = vunpack.c.l.s4 1966171168
    %v3059 = vunpack.c.0.s8 %v3058
    %v3060 = vlaneseq
    %v3061 = vshrl.u32 %v3060, 7
    %v3062 = vsub.s32 %v3059, %v3061
    %v3063 = vrot.slane %v3049, %v3062
    %v3064 = vcombine.high %v3056, %v3056
    %v3065 = vcombine.high %v3063, %v3063
    %v3066 = vlaneseq
    %v3067 = vshrl.u32 %v3066, 7
    %v3068 = vsub.s32 0, %v3067
    %v3069 = vrot.slane %v3056, %v3068
    %v3070 = vlaneseq
    %v3071 = vshrl.u32 %v3070, 7
    %v3072 = vsub.s32 0, %v3071
    %v3073 = vrot.slane %v3063, %v3072
    %v3074 = vlaneseq
    %v3075 = vshrl.u32 %v3074, 7
    %v3076 = vsub.s32 0, %v3075
    %v3077 = vrot.slane %v3064, %v3076
    %v3078 = vlaneseq
    %v3079 = vshrl.u32 %v3078, 7
    %v3080 = vsub.s32 0, %v3079
    %v3081 = vrot.slane %v3065, %v3080
    %3082 = vrot.lane.b32.xlu0 %v3069, 32
    %v3083 = vpop.permute.xlu0 %3082
    %3084 = vrot.lane.b32.xlu0 %v3073, 32
    %v3085 = vpop.permute.xlu0 %3084
    %3086 = vrot.lane.b32.xlu0 %v3077, 32
    %v3087 = vpop.permute.xlu0 %3086
    %3088 = vrot.lane.b32.xlu0 %v3081, 32
    %v3089 = vpop.permute.xlu0 %3088
    %3094 = vst.msk [vmem:[#allocation3 + $0x7] sm:$0x1] %vm2001, %v3083
    %3095 = vst.msk [vmem:[#allocation3 + $0xf] sm:$0x1] %vm2001, %v3085
    %3096 = vst.msk [vmem:[#allocation3 + $0x17] sm:$0x1] %vm2001, %v3087
    %3097 = vst.msk [vmem:[#allocation3 + $0x1f] sm:$0x1] %vm2001, %v3089
    %v3098 = vld [vmem:[#allocation3] sm:$0xff]
    %v3099 = vld [vmem:[#allocation3 + $0x8] sm:$0xff]
    %v3100 = vld [vmem:[#allocation3 + $0x10] sm:$0xff]
    %v3101 = vld [vmem:[#allocation3 + $0x18] sm:$0xff]
    %v3102 = vld [vmem:[%s7] sm:$0xff]
    %v3103 = vld [vmem:[%s7 + $0x8] sm:$0xff]
    %v3104 = vld [vmem:[%s7 + $0x10] sm:$0xff]
    %v3105 = vld [vmem:[%s7 + $0x18] sm:$0xff]
    %v3106 = vld [vmem:[%s8] sm:$0x1]
    %v3108 = vlaneseq
    %v3109 = vshrl.u32 %v3108, 7
    %v3110 = vsub.s32 0, %v3109
    %v3111 = vrot.slane %v3106, %v3110
    %v3114 = vsel %vm201, %v3098, 0
    %v3117 = vsel %vm201, %v3099, 0
    %v3120 = vsel %vm201, %v3100, 0
    %v3123 = vsel %vm201, %v3101, 0
    %3125 = vmatprep.subr.mxu0 0.0
    %3126 = vmatpush1.msra.mxu0 %v3102
    %3127 = vmatprep.subr.mxu0 0.0
    %3128 = vmatpush1.msra.mxu0 %v3103
    %3129 = vmatprep.subr.mxu0 0.0
    %3130 = vmatpush1.msra.mxu0 %v3104
    %3131 = vmatprep.subr.mxu0 0.0
    %3132 = vmatpush1.msra.mxu0 %v3105
    %3133 = vmatprep.subr.mxu0 0.0
    %3134 = vmatpush1.msra.mxu0 0.0
    %3135 = vmatprep.subr.mxu0 0.0
    %3136 = vmatpush1.msra.mxu0 0.0
    %3137 = vmatprep.subr.mxu0 0.0
    %3138 = vmatpush1.msra.mxu0 0.0
    %3139 = vmatprep.subr.mxu0 0.0
    %3140 = vmatpush1.msra.mxu0 0.0
    %3141 = vmatprep.subr.mxu0 0.0
    %3142 = vmatpush1.msra.mxu0 0.0
    %3143 = vmatprep.subr.mxu0 0.0
    %3144 = vmatpush1.msra.mxu0 0.0
    %3145 = vmatprep.subr.mxu0 0.0
    %3146 = vmatpush1.msra.mxu0 0.0
    %3147 = vmatprep.subr.mxu0 0.0
    %3148 = vmatpush1.msra.mxu0 0.0
    %3149 = vmatprep.subr.mxu0 0.0
    %3150 = vmatpush1.msra.mxu0 0.0
    %3151 = vmatprep.subr.mxu0 0.0
    %3152 = vmatpush1.msra.mxu0 0.0
    %3153 = vmatprep.subr.mxu0 0.0
    %3154 = vmatpush1.msra.mxu0 0.0
    %3155 = vmatprep.subr.mxu0 0.0
    %3156 = vmatpush1.msra.mxu0 0.0
    %3157 = vmatprep.subr.mxu0 0.0
    %3158 = vmatpush1.msra.mxu0 0.0
    %3159 = vmatprep.subr.mxu0 0.0
    %3160 = vmatpush1.msra.mxu0 0.0
    %3161 = vmatprep.subr.mxu0 0.0
    %3162 = vmatpush1.msra.mxu0 0.0
    %3163 = vmatprep.subr.mxu0 0.0
    %3164 = vmatpush1.msra.mxu0 0.0
    %3165 = vmatprep.subr.mxu0 0.0
    %3166 = vmatpush1.msra.mxu0 0.0
    %3167 = vmatprep.subr.mxu0 0.0
    %3168 = vmatpush1.msra.mxu0 0.0
    %3169 = vmatprep.subr.mxu0 0.0
    %3170 = vmatpush1.msra.mxu0 0.0
    %3171 = vmatprep.subr.mxu0 0.0
    %3172 = vmatpush1.msra.mxu0 0.0
    %3173 = vmatprep.subr.mxu0 0.0
    %3174 = vmatpush1.msra.mxu0 0.0
    %3175 = vmatprep.subr.mxu0 0.0
    %3176 = vmatpush1.msra.mxu0 0.0
    %3177 = vmatprep.subr.mxu0 0.0
    %3178 = vmatpush1.msra.mxu0 0.0
    %3179 = vmatprep.subr.mxu0 0.0
    %3180 = vmatpush1.msra.mxu0 0.0
    %3181 = vmatprep.subr.mxu0 0.0
    %3182 = vmatpush1.msra.mxu0 0.0
    %3183 = vmatprep.subr.mxu0 0.0
    %3184 = vmatpush1.msra.mxu0 0.0
    %3185 = vmatprep.subr.mxu0 0.0
    %3186 = vmatpush1.msra.mxu0 0.0
    %3187 = vmatprep.subr.mxu0 0.0
    %3188 = vmatpush1.msra.mxu0 0.0
    %3189 = vmatprep.mubr.f32.mxu0 0.0
    %3190 = vmatmul.mubr.f32.gmra.mrb[0].mxu0 %v3114
    %v3191 = vpop.f32.mrb[0].mxu0
    %v3192 = vadd.f32 %v3111, %v3191
    %v3193 = vpop.f32.mrb[0].mxu0
    %3194 = vmatprep.mubr.f32.mxu0 0.0
    %3195 = vmatmul.mubr.f32.gmra.mrb[0].mxu0 %v3117
    %v3196 = vpop.f32.mrb[0].mxu0
    %v3197 = vadd.f32 %v3111, %v3196
    %v3198 = vpop.f32.mrb[0].mxu0
    %3199 = vmatprep.mubr.f32.mxu0 0.0
    %3200 = vmatmul.mubr.f32.gmra.mrb[0].mxu0 %v3120
    %v3201 = vpop.f32.mrb[0].mxu0
    %v3202 = vadd.f32 %v3111, %v3201
    %v3203 = vpop.f32.mrb[0].mxu0
    %3204 = vmatprep.mubr.f32.mxu0 0.0
    %3205 = vmatmul.mubr.f32.gmra.mrb[0].mxu0 %v3123
    %v3206 = vpop.f32.mrb[0].mxu0
    %v3207 = vadd.f32 %v3111, %v3206
    %v3208 = vpop.f32.mrb[0].mxu0
    %3209 = vdwg.mxu0
    %3210 = vst.msk [vmem:[#allocation10] sm:$0xff] %vm95, %v3192
    %3211 = vst.msk [vmem:[#allocation10 + $0x8] sm:$0xff] %vm95, %v3197
    %3212 = vst.msk [vmem:[#allocation10 + $0x10] sm:$0xff] %vm95, %v3202
    %3213 = vst.msk [vmem:[#allocation10 + $0x18] sm:$0xff] %vm95, %v3207
    // Predicated region
    $region50: #{tpu_custom_call.1} parent=1 // pred_check
      _
    $region51: #{tpu_custom_call.1} parent=1 // pred_check_branch
      %3215 = sbr.rel (0) target = $region53
    $region52: #{tpu_custom_call.1} parent=1 // pred_region
      %s3217 = ssub.s32 512, 512
      %3218 = vsyncadd [#allocation6], %s3217
      %s3219 = sshll.u32 [#allocation10], 4
      %s3220 = int_to_ptr.vmem [resolvable:$true] %s3219
      %3225 = dma.vmem_to_hbm [thread:$0]  %s3220, 512, %s9, [#allocation6], 128, 128, 8
    $region53: #{tpu_custom_call.1} parent=1 // pred_fallthru
      _
    // Predicated region
    $region54: #{tpu_custom_call.1} parent=1 // pred_check
      _
    $region55: #{tpu_custom_call.1} parent=1 // pred_check_branch
      %3227 = sbr.rel (0) target = $region57
    $region56: #{tpu_custom_call.1} parent=1 // pred_region
      %3228 = dma.done [#allocation6], 512
    $region57: #{tpu_custom_call.1} parent=1 // pred_fallthru
      _
    %3229 = vsyncpa [#allocation5], 1
    %3230 = vsyncpa [#allocation8], 1
    %3231 = vsyncpa [#allocation6], 1

</llo_original>
